<compile_context>
chip_gen: v7x
topology: tpu7x:2x2x1
jax: 0.10.0
libtpu: 0.0.40
codegen_flags: <defaults>
</compile_context>

<pallas_src>
import functools

import jax
import jax.numpy as jnp
from jax.experimental import pallas as pl
from jax.experimental.pallas import tpu as pltpu

NEG_SLOPE = 0.01  # nn.LeakyReLU default negative slope
_PAD = 128        # left/right zero pad (lanes) of the flat conv scratch


def _lrelu(x):
    return jnp.where(x >= 0, x, NEG_SLOPE * x)


def _conv3x3_acc(x, w_ref, xpad_ref, mask_l, mask_r, W):
    """3x3 'same' conv (padding=1) on a lane-flattened image (no bias/act).

    x        : (Cin, H*W) value; channels on sublanes, y*W+x on lanes.
    w_ref    : (9, Cout, Cin) ref; w_ref[ky*3+kx, co, ci] == torch_w[co, ci, ky, kx].
    xpad_ref : (Cin, H*W + 2*_PAD) VMEM scratch whose border regions are zero;
               x is stored (lane-aligned) at [:, _PAD:_PAD+H*W]. Out-of-range
               rows fall into the zero borders; row-crossing in x is masked.
    mask_l/r : (1, H*W) f32; 1.0 where x-coord >= 1 / <= W-2.
    returns  : (Cout, H*W) f32 accumulator.
    """
    HW = x.shape[1]
    Cout = w_ref.shape[1]
    xpad_ref[:, _PAD:_PAD + HW] = x
    acc = jnp.zeros((Cout, HW), jnp.float32)
    for ky in range(3):
        for kx in range(3):
            off = (ky - 1) * W + (kx - 1)
            # contiguous lane slice == spatial shift by (ky-1, kx-1)
            win = xpad_ref[:, _PAD + off:_PAD + off + HW]
            if kx == 0:
                win = win * mask_l
            elif kx == 2:
                win = win * mask_r
            acc = acc + jnp.dot(w_ref[ky * 3 + kx], win,
                                preferred_element_type=jnp.float32)
    return acc


def _sffi_kernel(local_ref, glob_ref, fr_ref, fi_ref, mask_ref, maskf_ref,
                 w_g2l_ref, b_g2l_ref, w_l2l_ref, b_l2l_ref,
                 w_sr_ref, w_si_ref, b_s_ref,
                 w_lg_ref, b_lg_ref, w_att_ref, b_att_ref,
                 w_gt1_ref, b_gt1_ref, w_gt2_ref, b_gt2_ref,
                 out_local_ref, out_lg_ref, out_spec_ref,
                 pad_a_ref, pad_s_ref, *, W, Wf):
    # Zero the padded scratches once per invocation; only the middle region is
    # ever overwritten afterwards, so the borders stay zero.
    pad_a_ref[...] = jnp.zeros(pad_a_ref.shape, jnp.float32)
    pad_s_ref[...] = jnp.zeros(pad_s_ref.shape, jnp.float32)

    local = local_ref[0]            # (half, H*W)
    glob = glob_ref[0]              # (half, H*W)

    m_l, m_r = mask_ref[0:1, :], mask_ref[1:2, :]
    mf_l, mf_r = maskf_ref[0:1, :], maskf_ref[1:2, :]

    # ---- out_local = lrelu(g_to_l(glob)) + lrelu(l_to_l(local)) --------------
    y_g2l = _lrelu(_conv3x3_acc(glob, w_g2l_ref, pad_a_ref, m_l, m_r, W)
                   + b_g2l_ref[...])
    y_l2l = _lrelu(_conv3x3_acc(local, w_l2l_ref, pad_a_ref, m_l, m_r, W)
                   + b_l2l_ref[...])
    out_local_ref[0] = y_g2l + y_l2l

    # ---- l_to_g: 1x1 conv -> NonLocalAttentionBlock --------------------------
    t = jnp.dot(w_lg_ref[...], local,
                preferred_element_type=jnp.float32) + b_lg_ref[...]     # (half, HW)
    logits = jnp.dot(w_att_ref[...], t,
                     preferred_element_type=jnp.float32) + b_att_ref[...]  # (1, HW)
    m = jnp.max(logits, axis=1, keepdims=True)
    p = jnp.exp(logits - m)                                             # (1, HW)
    denom = jnp.sum(p, axis=1, keepdims=True)                           # (1, 1)
    pooled = jnp.sum(t * p, axis=1, keepdims=True)                      # (half, 1)
    pooled = pooled * pl.reciprocal(denom, approx=True)                 # softmax norm on EUP
    h = _lrelu(jnp.dot(w_gt1_ref[...], pooled,
                       preferred_element_type=jnp.float32) + b_gt1_ref[...])
    h = _lrelu(jnp.dot(w_gt2_ref[...], h,
                       preferred_element_type=jnp.float32) + b_gt2_ref[...])
    out_lg_ref[0] = t + h                                               # broadcast residual

    # ---- spectral-domain conv3x3 + lrelu on [Re(F); Im(F)] --------------------
    fr = fr_ref[0]                  # (half, H*Wf)
    fi = fi_ref[0]                  # (half, H*Wf)
    acc = (_conv3x3_acc(fr, w_sr_ref, pad_s_ref, mf_l, mf_r, Wf)
           + _conv3x3_acc(fi, w_si_ref, pad_s_ref, mf_l, mf_r, Wf))
    out_spec_ref[0] = _lrelu(acc + b_s_ref[...])


def fourier_convolution_block(feat, params):
    """feat: (B, C, H, W) float32 NCHW. Returns (B, C, H, W) float32."""
    B, C, H, W = feat.shape
    half = C // 2
    Wf = W // 2 + 1
    HW, HWf = H * W, H * Wf
    assert W + 1 <= _PAD and Wf + 1 <= _PAD

    local_flat = feat[:, :half].reshape(B, half, HW)
    glob_img = feat[:, half:]
    glob_flat = glob_img.reshape(B, half, HW)

    # rfft2 of the global half (no Pallas FFT primitive).
    F = jnp.fft.rfft2(glob_img, axes=(-2, -1))                   # (B, half, H, Wf)
    fr = jnp.real(F).astype(jnp.float32).reshape(B, half, HWf)
    fi = jnp.imag(F).astype(jnp.float32).reshape(B, half, HWf)

    def edge_masks(w, hw):
        xc = jnp.tile(jnp.arange(w, dtype=jnp.int32), hw // w)
        return jnp.stack([xc >= 1, xc <= w - 2]).astype(jnp.float32)  # (2, hw)

    mask_a = edge_masks(W, HW)
    mask_s = edge_masks(Wf, HWf)

    kernel = functools.partial(_sffi_kernel, W=W, Wf=Wf)

    full2 = lambda s: pl.BlockSpec(s, lambda i: (0, 0))
    full3 = lambda s: pl.BlockSpec(s, lambda i: (0, 0, 0))
    per_b = lambda s: pl.BlockSpec(s, lambda i: (i, 0, 0))

    out_local, out_lg, out_spec = pl.pallas_call(
        kernel,
        out_shape=(
            jax.ShapeDtypeStruct((B, half, HW), jnp.float32),      # out_local
            jax.ShapeDtypeStruct((B, half, HW), jnp.float32),      # l_to_g
            jax.ShapeDtypeStruct((B, 2 * half, HWf), jnp.float32),  # spectral conv
        ),
        grid=(B,),
        in_specs=[
            per_b((1, half, HW)),                                  # local
            per_b((1, half, HW)),                                  # global
            per_b((1, half, HWf)),                                 # Re(F)
            per_b((1, half, HWf)),                                 # Im(F)
            full2((2, HW)),                                        # edge masks (image)
            full2((2, HWf)),                                       # edge masks (freq)
            full3((9, half, half)), full2((half, 1)),              # g_to_l conv3x3
            full3((9, half, half)), full2((half, 1)),              # l_to_l conv3x3
            full3((9, 2 * half, half)),                            # spectral conv (real in)
            full3((9, 2 * half, half)),                            # spectral conv (imag in)
            full2((2 * half, 1)),                                  # spectral bias
            full2((half, half)), full2((half, 1)),                 # l_to_g 1x1 conv
            full2((1, half)), full2((1, 1)),                       # attention 1x1 conv
            full2((half, half)), full2((half, 1)),                 # global_transform conv1
            full2((half, half)), full2((half, 1)),                 # global_transform conv2
        ],
        out_specs=(
            per_b((1, half, HW)),
            per_b((1, half, HW)),
            per_b((1, 2 * half, HWf)),
        ),
        scratch_shapes=[
            pltpu.VMEM((half, HW + 2 * _PAD), jnp.float32),        # padded image scratch
            pltpu.VMEM((half, HWf + 2 * _PAD), jnp.float32),       # padded freq scratch
        ],
        compiler_params=pltpu.CompilerParams(dimension_semantics=("parallel",)),
    )(local_flat, glob_flat, fr, fi, mask_a, mask_s,
      params["g2l_w"], params["g2l_b"], params["l2l_w"], params["l2l_b"],
      params["spec_wr"], params["spec_wi"], params["spec_b"],
      params["lg_w"], params["lg_b"], params["att_w"], params["att_b"],
      params["gt1_w"], params["gt1_b"], params["gt2_w"], params["gt2_b"])

    # Finish SpectralTransformer: back to complex and inverse FFT.
    y = out_spec.reshape(B, 2 * half, H, Wf)
    g2g = jnp.fft.irfft2(jax.lax.complex(y[:, :half], y[:, half:]),
                         s=(H, W), axes=(-2, -1)).astype(jnp.float32)

    out_global = out_lg.reshape(B, half, H, W) + g2g
    out_local = out_local.reshape(B, half, H, W)
    return jnp.concatenate([out_global, out_local], axis=1)


# -----------------------------------------------------------------------------
# Deterministic synthetic parameters.
# Layout vs PyTorch:
#   conv3x3 weight (Cout, Cin, 3, 3)  ->  stored as (9, Cout, Cin), k = ky*3+kx
#   spectral conv (2h, 2h, 3, 3)      ->  split along Cin: real half / imag half
#   conv1x1 weight (Cout, Cin, 1, 1)  ->  stored as (Cout, Cin); bias (Cout, 1)
# -----------------------------------------------------------------------------
def make_params(key, in_channels):
    half = in_channels // 2
    ks = jax.random.split(key, 15)
    n = lambda k, shape: (0.1 * jax.random.normal(k, shape)).astype(jnp.float32)
    return {
        "g2l_w": n(ks[0], (9, half, half)),   "g2l_b": n(ks[1], (half, 1)),
        "l2l_w": n(ks[2], (9, half, half)),   "l2l_b": n(ks[3], (half, 1)),
        "spec_wr": n(ks[4], (9, 2 * half, half)),
        "spec_wi": n(ks[5], (9, 2 * half, half)),
        "spec_b": n(ks[6], (2 * half, 1)),
        "lg_w": n(ks[7], (half, half)),       "lg_b": n(ks[8], (half, 1)),
        "att_w": n(ks[9], (1, half)),         "att_b": n(ks[10], (1, 1)),
        "gt1_w": n(ks[11], (half, half)),     "gt1_b": n(ks[12], (half, 1)),
        "gt2_w": n(ks[13], (half, half)),     "gt2_b": n(ks[14], (half, 1)),
    }


if __name__ == "__main__":
    B, C, H, W = 2, 8, 16, 16
    key = jax.random.PRNGKey(0)
    k_x, k_p = jax.random.split(key)
    x = jax.random.normal(k_x, (B, C, H, W), dtype=jnp.float32)
    params = make_params(k_p, C)

    out = jax.jit(fourier_convolution_block)(x, params)
    out = jax.block_until_ready(out)

    assert out.shape == (B, C, H, W), out.shape
    assert bool(jnp.all(jnp.isfinite(out)))
    print("KERNEL_OK")
</pallas_src>

<mosaic_0001>
module attributes {stable_mosaic.version = 11 : i64} {
  func.func @_sffi_kernel(%arg0: i32, %arg1: memref<1x4x256xf32, #tpu.memory_space<vmem>>, %arg2: memref<1x4x256xf32, #tpu.memory_space<vmem>>, %arg3: memref<1x4x144xf32, #tpu.memory_space<vmem>>, %arg4: memref<1x4x144xf32, #tpu.memory_space<vmem>>, %arg5: memref<2x256xf32, #tpu.memory_space<vmem>>, %arg6: memref<2x144xf32, #tpu.memory_space<vmem>>, %arg7: memref<9x4x4xf32, #tpu.memory_space<vmem>>, %arg8: memref<4x1xf32, #tpu.memory_space<vmem>>, %arg9: memref<9x4x4xf32, #tpu.memory_space<vmem>>, %arg10: memref<4x1xf32, #tpu.memory_space<vmem>>, %arg11: memref<9x8x4xf32, #tpu.memory_space<vmem>>, %arg12: memref<9x8x4xf32, #tpu.memory_space<vmem>>, %arg13: memref<8x1xf32, #tpu.memory_space<vmem>>, %arg14: memref<4x4xf32, #tpu.memory_space<vmem>>, %arg15: memref<4x1xf32, #tpu.memory_space<vmem>>, %arg16: memref<1x4xf32, #tpu.memory_space<vmem>>, %arg17: memref<1x1xf32, #tpu.memory_space<vmem>>, %arg18: memref<4x4xf32, #tpu.memory_space<vmem>>, %arg19: memref<4x1xf32, #tpu.memory_space<vmem>>, %arg20: memref<4x4xf32, #tpu.memory_space<vmem>>, %arg21: memref<4x1xf32, #tpu.memory_space<vmem>>, %arg22: memref<1x4x256xf32, #tpu.memory_space<vmem>>, %arg23: memref<1x4x256xf32, #tpu.memory_space<vmem>>, %arg24: memref<1x8x144xf32, #tpu.memory_space<vmem>>, %arg25: memref<4x512xf32, #tpu.memory_space<vmem>>, %arg26: memref<4x400xf32, #tpu.memory_space<vmem>>) attributes {dimension_semantics = [#tpu.dimension_semantics<parallel>], iteration_bounds = array<i64: 2>, scalar_prefetch = 0 : i64, scratch_operands = 2 : i64, tpu.core_type = #tpu.core_type<tc>, window_params = [{transform_indices = @transform_0, window_bounds = array<i64: 1, 4, 256>}, {transform_indices = @transform_1, window_bounds = array<i64: 1, 4, 256>}, {transform_indices = @transform_2, window_bounds = array<i64: 1, 4, 144>}, {transform_indices = @transform_3, window_bounds = array<i64: 1, 4, 144>}, {pipeline_mode = #tpu.pipeline_mode<synchronous>, transform_indices = @transform_4, window_bounds = array<i64: 2, 256>}, {pipeline_mode = #tpu.pipeline_mode<synchronous>, transform_indices = @transform_5, window_bounds = array<i64: 2, 144>}, {pipeline_mode = #tpu.pipeline_mode<synchronous>, transform_indices = @transform_6, window_bounds = array<i64: 9, 4, 4>}, {pipeline_mode = #tpu.pipeline_mode<synchronous>, transform_indices = @transform_7, window_bounds = array<i64: 4, 1>}, {pipeline_mode = #tpu.pipeline_mode<synchronous>, transform_indices = @transform_8, window_bounds = array<i64: 9, 4, 4>}, {pipeline_mode = #tpu.pipeline_mode<synchronous>, transform_indices = @transform_9, window_bounds = array<i64: 4, 1>}, {pipeline_mode = #tpu.pipeline_mode<synchronous>, transform_indices = @transform_10, window_bounds = array<i64: 9, 8, 4>}, {pipeline_mode = #tpu.pipeline_mode<synchronous>, transform_indices = @transform_11, window_bounds = array<i64: 9, 8, 4>}, {pipeline_mode = #tpu.pipeline_mode<synchronous>, transform_indices = @transform_12, window_bounds = array<i64: 8, 1>}, {pipeline_mode = #tpu.pipeline_mode<synchronous>, transform_indices = @transform_13, window_bounds = array<i64: 4, 4>}, {pipeline_mode = #tpu.pipeline_mode<synchronous>, transform_indices = @transform_14, window_bounds = array<i64: 4, 1>}, {pipeline_mode = #tpu.pipeline_mode<synchronous>, transform_indices = @transform_15, window_bounds = array<i64: 1, 4>}, {pipeline_mode = #tpu.pipeline_mode<synchronous>, transform_indices = @transform_16, window_bounds = array<i64: 1, 1>}, {pipeline_mode = #tpu.pipeline_mode<synchronous>, transform_indices = @transform_17, window_bounds = array<i64: 4, 4>}, {pipeline_mode = #tpu.pipeline_mode<synchronous>, transform_indices = @transform_18, window_bounds = array<i64: 4, 1>}, {pipeline_mode = #tpu.pipeline_mode<synchronous>, transform_indices = @transform_19, window_bounds = array<i64: 4, 4>}, {pipeline_mode = #tpu.pipeline_mode<synchronous>, transform_indices = @transform_20, window_bounds = array<i64: 4, 1>}, {transform_indices = @transform_21, window_bounds = array<i64: 1, 4, 256>}, {transform_indices = @transform_22, window_bounds = array<i64: 1, 4, 256>}, {transform_indices = @transform_23, window_bounds = array<i64: 1, 8, 144>}]} {
    %cst = arith.constant 0.000000e+00 : f32
    %0 = vector.broadcast %cst : f32 to vector<4x512xf32>
    %c0 = arith.constant 0 : index
    %c0_0 = arith.constant 0 : index
    %1 = vector.load %arg25[%c0, %c0_0] : memref<4x512xf32, #tpu.memory_space<vmem>>, vector<4x512xf32>
    tpu.vector_store %arg25[%c0, %c0_0], %0 {strides = array<i32>} : memref<4x512xf32, #tpu.memory_space<vmem>>, vector<4x512xf32>,
    %cst_1 = arith.constant 0.000000e+00 : f32
    %2 = vector.broadcast %cst_1 : f32 to vector<4x400xf32>
    %c0_2 = arith.constant 0 : index
    %c0_3 = arith.constant 0 : index
    %3 = vector.load %arg26[%c0_2, %c0_3] : memref<4x400xf32, #tpu.memory_space<vmem>>, vector<4x400xf32>
    tpu.vector_store %arg26[%c0_2, %c0_3], %2 {strides = array<i32>} : memref<4x400xf32, #tpu.memory_space<vmem>>, vector<4x400xf32>,
    %c0_4 = arith.constant 0 : index
    %c0_5 = arith.constant 0 : index
    %c0_6 = arith.constant 0 : index
    %4 = vector.load %arg1[%c0_4, %c0_5, %c0_6] : memref<1x4x256xf32, #tpu.memory_space<vmem>>, vector<1x4x256xf32>
    %5 = vector.shape_cast %4 : vector<1x4x256xf32> to vector<4x256xf32>
    %c0_7 = arith.constant 0 : index
    %c0_8 = arith.constant 0 : index
    %c0_9 = arith.constant 0 : index
    %6 = vector.load %arg2[%c0_7, %c0_8, %c0_9] : memref<1x4x256xf32, #tpu.memory_space<vmem>>, vector<1x4x256xf32>
    %7 = vector.shape_cast %6 : vector<1x4x256xf32> to vector<4x256xf32>
    %c0_10 = arith.constant 0 : index
    %c0_11 = arith.constant 0 : index
    %8 = vector.load %arg5[%c0_10, %c0_11] : memref<2x256xf32, #tpu.memory_space<vmem>>, vector<1x256xf32>
    %c1 = arith.constant 1 : index
    %c0_12 = arith.constant 0 : index
    %9 = vector.load %arg5[%c1, %c0_12] : memref<2x256xf32, #tpu.memory_space<vmem>>, vector<1x256xf32>
    %c0_13 = arith.constant 0 : index
    %c0_14 = arith.constant 0 : index
    %10 = vector.load %arg6[%c0_13, %c0_14] : memref<2x144xf32, #tpu.memory_space<vmem>>, vector<1x144xf32>
    %c1_15 = arith.constant 1 : index
    %c0_16 = arith.constant 0 : index
    %11 = vector.load %arg6[%c1_15, %c0_16] : memref<2x144xf32, #tpu.memory_space<vmem>>, vector<1x144xf32>
    %c0_17 = arith.constant 0 : index
    %c128 = arith.constant 128 : index
    %12 = vector.load %arg25[%c0_17, %c128] : memref<4x512xf32, #tpu.memory_space<vmem>>, vector<4x256xf32>
    tpu.vector_store %arg25[%c0_17, %c128], %7 {strides = array<i32>} : memref<4x512xf32, #tpu.memory_space<vmem>>, vector<4x256xf32>,
    %cst_18 = arith.constant 0.000000e+00 : f32
    %13 = vector.broadcast %cst_18 : f32 to vector<4x256xf32>
    %c0_19 = arith.constant 0 : index
    %c111 = arith.constant 111 : index
    %14 = vector.load %arg25[%c0_19, %c111] : memref<4x512xf32, #tpu.memory_space<vmem>>, vector<4x256xf32>
    %15 = vector.broadcast %8 : vector<1x256xf32> to vector<4x256xf32>
    %16 = arith.mulf %14, %15 : vector<4x256xf32>
    %c0_20 = arith.constant 0 : index
    %c0_21 = arith.constant 0 : index
    %c0_22 = arith.constant 0 : index
    %17 = vector.load %arg7[%c0_20, %c0_21, %c0_22] : memref<9x4x4xf32, #tpu.memory_space<vmem>>, vector<1x4x4xf32>
    %18 = vector.shape_cast %17 : vector<1x4x4xf32> to vector<4x4xf32>
    %cst_23 = arith.constant dense<0.000000e+00> : vector<4x256xf32>
    %19 = tpu.matmul %18, %16, %cst_23 {dimension_numbers = #tpu.dot_dimension_numbers<[1], [0], [0], [1], [0, 0, 1, 1], [], []>} : vector<4x4xf32>, vector<4x256xf32>, vector<4x256xf32> -> vector<4x256xf32>
    %20 = arith.addf %13, %19 : vector<4x256xf32>
    %c0_24 = arith.constant 0 : index
    %c112 = arith.constant 112 : index
    %21 = vector.load %arg25[%c0_24, %c112] : memref<4x512xf32, #tpu.memory_space<vmem>>, vector<4x256xf32>
    %c1_25 = arith.constant 1 : index
    %c0_26 = arith.constant 0 : index
    %c0_27 = arith.constant 0 : index
    %22 = vector.load %arg7[%c1_25, %c0_26, %c0_27] : memref<9x4x4xf32, #tpu.memory_space<vmem>>, vector<1x4x4xf32>
    %23 = vector.shape_cast %22 : vector<1x4x4xf32> to vector<4x4xf32>
    %cst_28 = arith.constant dense<0.000000e+00> : vector<4x256xf32>
    %24 = tpu.matmul %23, %21, %cst_28 {dimension_numbers = #tpu.dot_dimension_numbers<[1], [0], [0], [1], [0, 0, 1, 1], [], []>} : vector<4x4xf32>, vector<4x256xf32>, vector<4x256xf32> -> vector<4x256xf32>
    %25 = arith.addf %20, %24 : vector<4x256xf32>
    %c0_29 = arith.constant 0 : index
    %c113 = arith.constant 113 : index
    %26 = vector.load %arg25[%c0_29, %c113] : memref<4x512xf32, #tpu.memory_space<vmem>>, vector<4x256xf32>
    %27 = vector.broadcast %9 : vector<1x256xf32> to vector<4x256xf32>
    %28 = arith.mulf %26, %27 : vector<4x256xf32>
    %c2 = arith.constant 2 : index
    %c0_30 = arith.constant 0 : index
    %c0_31 = arith.constant 0 : index
    %29 = vector.load %arg7[%c2, %c0_30, %c0_31] : memref<9x4x4xf32, #tpu.memory_space<vmem>>, vector<1x4x4xf32>
    %30 = vector.shape_cast %29 : vector<1x4x4xf32> to vector<4x4xf32>
    %cst_32 = arith.constant dense<0.000000e+00> : vector<4x256xf32>
    %31 = tpu.matmul %30, %28, %cst_32 {dimension_numbers = #tpu.dot_dimension_numbers<[1], [0], [0], [1], [0, 0, 1, 1], [], []>} : vector<4x4xf32>, vector<4x256xf32>, vector<4x256xf32> -> vector<4x256xf32>
    %32 = arith.addf %25, %31 : vector<4x256xf32>
    %c0_33 = arith.constant 0 : index
    %c127 = arith.constant 127 : index
    %33 = vector.load %arg25[%c0_33, %c127] : memref<4x512xf32, #tpu.memory_space<vmem>>, vector<4x256xf32>
    %34 = vector.broadcast %8 : vector<1x256xf32> to vector<4x256xf32>
    %35 = arith.mulf %33, %34 : vector<4x256xf32>
    %c3 = arith.constant 3 : index
    %c0_34 = arith.constant 0 : index
    %c0_35 = arith.constant 0 : index
    %36 = vector.load %arg7[%c3, %c0_34, %c0_35] : memref<9x4x4xf32, #tpu.memory_space<vmem>>, vector<1x4x4xf32>
    %37 = vector.shape_cast %36 : vector<1x4x4xf32> to vector<4x4xf32>
    %cst_36 = arith.constant dense<0.000000e+00> : vector<4x256xf32>
    %38 = tpu.matmul %37, %35, %cst_36 {dimension_numbers = #tpu.dot_dimension_numbers<[1], [0], [0], [1], [0, 0, 1, 1], [], []>} : vector<4x4xf32>, vector<4x256xf32>, vector<4x256xf32> -> vector<4x256xf32>
    %39 = arith.addf %32, %38 : vector<4x256xf32>
    %c0_37 = arith.constant 0 : index
    %c128_38 = arith.constant 128 : index
    %40 = vector.load %arg25[%c0_37, %c128_38] : memref<4x512xf32, #tpu.memory_space<vmem>>, vector<4x256xf32>
    %c4 = arith.constant 4 : index
    %c0_39 = arith.constant 0 : index
    %c0_40 = arith.constant 0 : index
    %41 = vector.load %arg7[%c4, %c0_39, %c0_40] : memref<9x4x4xf32, #tpu.memory_space<vmem>>, vector<1x4x4xf32>
    %42 = vector.shape_cast %41 : vector<1x4x4xf32> to vector<4x4xf32>
    %cst_41 = arith.constant dense<0.000000e+00> : vector<4x256xf32>
    %43 = tpu.matmul %42, %40, %cst_41 {dimension_numbers = #tpu.dot_dimension_numbers<[1], [0], [0], [1], [0, 0, 1, 1], [], []>} : vector<4x4xf32>, vector<4x256xf32>, vector<4x256xf32> -> vector<4x256xf32>
    %44 = arith.addf %39, %43 : vector<4x256xf32>
    %c0_42 = arith.constant 0 : index
    %c129 = arith.constant 129 : index
    %45 = vector.load %arg25[%c0_42, %c129] : memref<4x512xf32, #tpu.memory_space<vmem>>, vector<4x256xf32>
    %46 = vector.broadcast %9 : vector<1x256xf32> to vector<4x256xf32>
    %47 = arith.mulf %45, %46 : vector<4x256xf32>
    %c5 = arith.constant 5 : index
    %c0_43 = arith.constant 0 : index
    %c0_44 = arith.constant 0 : index
    %48 = vector.load %arg7[%c5, %c0_43, %c0_44] : memref<9x4x4xf32, #tpu.memory_space<vmem>>, vector<1x4x4xf32>
    %49 = vector.shape_cast %48 : vector<1x4x4xf32> to vector<4x4xf32>
    %cst_45 = arith.constant dense<0.000000e+00> : vector<4x256xf32>
    %50 = tpu.matmul %49, %47, %cst_45 {dimension_numbers = #tpu.dot_dimension_numbers<[1], [0], [0], [1], [0, 0, 1, 1], [], []>} : vector<4x4xf32>, vector<4x256xf32>, vector<4x256xf32> -> vector<4x256xf32>
    %51 = arith.addf %44, %50 : vector<4x256xf32>
    %c0_46 = arith.constant 0 : index
    %c143 = arith.constant 143 : index
    %52 = vector.load %arg25[%c0_46, %c143] : memref<4x512xf32, #tpu.memory_space<vmem>>, vector<4x256xf32>
    %53 = vector.broadcast %8 : vector<1x256xf32> to vector<4x256xf32>
    %54 = arith.mulf %52, %53 : vector<4x256xf32>
    %c6 = arith.constant 6 : index
    %c0_47 = arith.constant 0 : index
    %c0_48 = arith.constant 0 : index
    %55 = vector.load %arg7[%c6, %c0_47, %c0_48] : memref<9x4x4xf32, #tpu.memory_space<vmem>>, vector<1x4x4xf32>
    %56 = vector.shape_cast %55 : vector<1x4x4xf32> to vector<4x4xf32>
    %cst_49 = arith.constant dense<0.000000e+00> : vector<4x256xf32>
    %57 = tpu.matmul %56, %54, %cst_49 {dimension_numbers = #tpu.dot_dimension_numbers<[1], [0], [0], [1], [0, 0, 1, 1], [], []>} : vector<4x4xf32>, vector<4x256xf32>, vector<4x256xf32> -> vector<4x256xf32>
    %58 = arith.addf %51, %57 : vector<4x256xf32>
    %c0_50 = arith.constant 0 : index
    %c144 = arith.constant 144 : index
    %59 = vector.load %arg25[%c0_50, %c144] : memref<4x512xf32, #tpu.memory_space<vmem>>, vector<4x256xf32>
    %c7 = arith.constant 7 : index
    %c0_51 = arith.constant 0 : index
    %c0_52 = arith.constant 0 : index
    %60 = vector.load %arg7[%c7, %c0_51, %c0_52] : memref<9x4x4xf32, #tpu.memory_space<vmem>>, vector<1x4x4xf32>
    %61 = vector.shape_cast %60 : vector<1x4x4xf32> to vector<4x4xf32>
    %cst_53 = arith.constant dense<0.000000e+00> : vector<4x256xf32>
    %62 = tpu.matmul %61, %59, %cst_53 {dimension_numbers = #tpu.dot_dimension_numbers<[1], [0], [0], [1], [0, 0, 1, 1], [], []>} : vector<4x4xf32>, vector<4x256xf32>, vector<4x256xf32> -> vector<4x256xf32>
    %63 = arith.addf %58, %62 : vector<4x256xf32>
    %c0_54 = arith.constant 0 : index
    %c145 = arith.constant 145 : index
    %64 = vector.load %arg25[%c0_54, %c145] : memref<4x512xf32, #tpu.memory_space<vmem>>, vector<4x256xf32>
    %65 = vector.broadcast %9 : vector<1x256xf32> to vector<4x256xf32>
    %66 = arith.mulf %64, %65 : vector<4x256xf32>
    %c8 = arith.constant 8 : index
    %c0_55 = arith.constant 0 : index
    %c0_56 = arith.constant 0 : index
    %67 = vector.load %arg7[%c8, %c0_55, %c0_56] : memref<9x4x4xf32, #tpu.memory_space<vmem>>, vector<1x4x4xf32>
    %68 = vector.shape_cast %67 : vector<1x4x4xf32> to vector<4x4xf32>
    %cst_57 = arith.constant dense<0.000000e+00> : vector<4x256xf32>
    %69 = tpu.matmul %68, %66, %cst_57 {dimension_numbers = #tpu.dot_dimension_numbers<[1], [0], [0], [1], [0, 0, 1, 1], [], []>} : vector<4x4xf32>, vector<4x256xf32>, vector<4x256xf32> -> vector<4x256xf32>
    %70 = arith.addf %63, %69 : vector<4x256xf32>
    %c0_58 = arith.constant 0 : index
    %c0_59 = arith.constant 0 : index
    %71 = vector.load %arg8[%c0_58, %c0_59] : memref<4x1xf32, #tpu.memory_space<vmem>>, vector<4x1xf32>
    %72 = vector.broadcast %71 : vector<4x1xf32> to vector<4x256xf32>
    %73 = arith.addf %70, %72 : vector<4x256xf32>
    %cst_60 = arith.constant 0.000000e+00 : f32
    %74 = vector.broadcast %cst_60 : f32 to vector<4x256xf32>
    %75 = arith.cmpf oge, %73, %74 : vector<4x256xf32>
    %cst_61 = arith.constant 0.00999999977 : f32
    %76 = vector.broadcast %cst_61 : f32 to vector<4x256xf32>
    %77 = arith.mulf %76, %73 : vector<4x256xf32>
    %78 = arith.select %75, %73, %77 : vector<4x256xi1>, vector<4x256xf32>
    %c0_62 = arith.constant 0 : index
    %c128_63 = arith.constant 128 : index
    %79 = vector.load %arg25[%c0_62, %c128_63] : memref<4x512xf32, #tpu.memory_space<vmem>>, vector<4x256xf32>
    tpu.vector_store %arg25[%c0_62, %c128_63], %5 {strides = array<i32>} : memref<4x512xf32, #tpu.memory_space<vmem>>, vector<4x256xf32>,
    %cst_64 = arith.constant 0.000000e+00 : f32
    %80 = vector.broadcast %cst_64 : f32 to vector<4x256xf32>
    %c0_65 = arith.constant 0 : index
    %c111_66 = arith.constant 111 : index
    %81 = vector.load %arg25[%c0_65, %c111_66] : memref<4x512xf32, #tpu.memory_space<vmem>>, vector<4x256xf32>
    %82 = vector.broadcast %8 : vector<1x256xf32> to vector<4x256xf32>
    %83 = arith.mulf %81, %82 : vector<4x256xf32>
    %c0_67 = arith.constant 0 : index
    %c0_68 = arith.constant 0 : index
    %c0_69 = arith.constant 0 : index
    %84 = vector.load %arg9[%c0_67, %c0_68, %c0_69] : memref<9x4x4xf32, #tpu.memory_space<vmem>>, vector<1x4x4xf32>
    %85 = vector.shape_cast %84 : vector<1x4x4xf32> to vector<4x4xf32>
    %cst_70 = arith.constant dense<0.000000e+00> : vector<4x256xf32>
    %86 = tpu.matmul %85, %83, %cst_70 {dimension_numbers = #tpu.dot_dimension_numbers<[1], [0], [0], [1], [0, 0, 1, 1], [], []>} : vector<4x4xf32>, vector<4x256xf32>, vector<4x256xf32> -> vector<4x256xf32>
    %87 = arith.addf %80, %86 : vector<4x256xf32>
    %c0_71 = arith.constant 0 : index
    %c112_72 = arith.constant 112 : index
    %88 = vector.load %arg25[%c0_71, %c112_72] : memref<4x512xf32, #tpu.memory_space<vmem>>, vector<4x256xf32>
    %c1_73 = arith.constant 1 : index
    %c0_74 = arith.constant 0 : index
    %c0_75 = arith.constant 0 : index
    %89 = vector.load %arg9[%c1_73, %c0_74, %c0_75] : memref<9x4x4xf32, #tpu.memory_space<vmem>>, vector<1x4x4xf32>
    %90 = vector.shape_cast %89 : vector<1x4x4xf32> to vector<4x4xf32>
    %cst_76 = arith.constant dense<0.000000e+00> : vector<4x256xf32>
    %91 = tpu.matmul %90, %88, %cst_76 {dimension_numbers = #tpu.dot_dimension_numbers<[1], [0], [0], [1], [0, 0, 1, 1], [], []>} : vector<4x4xf32>, vector<4x256xf32>, vector<4x256xf32> -> vector<4x256xf32>
    %92 = arith.addf %87, %91 : vector<4x256xf32>
    %c0_77 = arith.constant 0 : index
    %c113_78 = arith.constant 113 : index
    %93 = vector.load %arg25[%c0_77, %c113_78] : memref<4x512xf32, #tpu.memory_space<vmem>>, vector<4x256xf32>
    %94 = vector.broadcast %9 : vector<1x256xf32> to vector<4x256xf32>
    %95 = arith.mulf %93, %94 : vector<4x256xf32>
    %c2_79 = arith.constant 2 : index
    %c0_80 = arith.constant 0 : index
    %c0_81 = arith.constant 0 : index
    %96 = vector.load %arg9[%c2_79, %c0_80, %c0_81] : memref<9x4x4xf32, #tpu.memory_space<vmem>>, vector<1x4x4xf32>
    %97 = vector.shape_cast %96 : vector<1x4x4xf32> to vector<4x4xf32>
    %cst_82 = arith.constant dense<0.000000e+00> : vector<4x256xf32>
    %98 = tpu.matmul %97, %95, %cst_82 {dimension_numbers = #tpu.dot_dimension_numbers<[1], [0], [0], [1], [0, 0, 1, 1], [], []>} : vector<4x4xf32>, vector<4x256xf32>, vector<4x256xf32> -> vector<4x256xf32>
    %99 = arith.addf %92, %98 : vector<4x256xf32>
    %c0_83 = arith.constant 0 : index
    %c127_84 = arith.constant 127 : index
    %100 = vector.load %arg25[%c0_83, %c127_84] : memref<4x512xf32, #tpu.memory_space<vmem>>, vector<4x256xf32>
    %101 = vector.broadcast %8 : vector<1x256xf32> to vector<4x256xf32>
    %102 = arith.mulf %100, %101 : vector<4x256xf32>
    %c3_85 = arith.constant 3 : index
    %c0_86 = arith.constant 0 : index
    %c0_87 = arith.constant 0 : index
    %103 = vector.load %arg9[%c3_85, %c0_86, %c0_87] : memref<9x4x4xf32, #tpu.memory_space<vmem>>, vector<1x4x4xf32>
    %104 = vector.shape_cast %103 : vector<1x4x4xf32> to vector<4x4xf32>
    %cst_88 = arith.constant dense<0.000000e+00> : vector<4x256xf32>
    %105 = tpu.matmul %104, %102, %cst_88 {dimension_numbers = #tpu.dot_dimension_numbers<[1], [0], [0], [1], [0, 0, 1, 1], [], []>} : vector<4x4xf32>, vector<4x256xf32>, vector<4x256xf32> -> vector<4x256xf32>
    %106 = arith.addf %99, %105 : vector<4x256xf32>
    %c0_89 = arith.constant 0 : index
    %c128_90 = arith.constant 128 : index
    %107 = vector.load %arg25[%c0_89, %c128_90] : memref<4x512xf32, #tpu.memory_space<vmem>>, vector<4x256xf32>
    %c4_91 = arith.constant 4 : index
    %c0_92 = arith.constant 0 : index
    %c0_93 = arith.constant 0 : index
    %108 = vector.load %arg9[%c4_91, %c0_92, %c0_93] : memref<9x4x4xf32, #tpu.memory_space<vmem>>, vector<1x4x4xf32>
    %109 = vector.shape_cast %108 : vector<1x4x4xf32> to vector<4x4xf32>
    %cst_94 = arith.constant dense<0.000000e+00> : vector<4x256xf32>
    %110 = tpu.matmul %109, %107, %cst_94 {dimension_numbers = #tpu.dot_dimension_numbers<[1], [0], [0], [1], [0, 0, 1, 1], [], []>} : vector<4x4xf32>, vector<4x256xf32>, vector<4x256xf32> -> vector<4x256xf32>
    %111 = arith.addf %106, %110 : vector<4x256xf32>
    %c0_95 = arith.constant 0 : index
    %c129_96 = arith.constant 129 : index
    %112 = vector.load %arg25[%c0_95, %c129_96] : memref<4x512xf32, #tpu.memory_space<vmem>>, vector<4x256xf32>
    %113 = vector.broadcast %9 : vector<1x256xf32> to vector<4x256xf32>
    %114 = arith.mulf %112, %113 : vector<4x256xf32>
    %c5_97 = arith.constant 5 : index
    %c0_98 = arith.constant 0 : index
    %c0_99 = arith.constant 0 : index
    %115 = vector.load %arg9[%c5_97, %c0_98, %c0_99] : memref<9x4x4xf32, #tpu.memory_space<vmem>>, vector<1x4x4xf32>
    %116 = vector.shape_cast %115 : vector<1x4x4xf32> to vector<4x4xf32>
    %cst_100 = arith.constant dense<0.000000e+00> : vector<4x256xf32>
    %117 = tpu.matmul %116, %114, %cst_100 {dimension_numbers = #tpu.dot_dimension_numbers<[1], [0], [0], [1], [0, 0, 1, 1], [], []>} : vector<4x4xf32>, vector<4x256xf32>, vector<4x256xf32> -> vector<4x256xf32>
    %118 = arith.addf %111, %117 : vector<4x256xf32>
    %c0_101 = arith.constant 0 : index
    %c143_102 = arith.constant 143 : index
    %119 = vector.load %arg25[%c0_101, %c143_102] : memref<4x512xf32, #tpu.memory_space<vmem>>, vector<4x256xf32>
    %120 = vector.broadcast %8 : vector<1x256xf32> to vector<4x256xf32>
    %121 = arith.mulf %119, %120 : vector<4x256xf32>
    %c6_103 = arith.constant 6 : index
    %c0_104 = arith.constant 0 : index
    %c0_105 = arith.constant 0 : index
    %122 = vector.load %arg9[%c6_103, %c0_104, %c0_105] : memref<9x4x4xf32, #tpu.memory_space<vmem>>, vector<1x4x4xf32>
    %123 = vector.shape_cast %122 : vector<1x4x4xf32> to vector<4x4xf32>
    %cst_106 = arith.constant dense<0.000000e+00> : vector<4x256xf32>
    %124 = tpu.matmul %123, %121, %cst_106 {dimension_numbers = #tpu.dot_dimension_numbers<[1], [0], [0], [1], [0, 0, 1, 1], [], []>} : vector<4x4xf32>, vector<4x256xf32>, vector<4x256xf32> -> vector<4x256xf32>
    %125 = arith.addf %118, %124 : vector<4x256xf32>
    %c0_107 = arith.constant 0 : index
    %c144_108 = arith.constant 144 : index
    %126 = vector.load %arg25[%c0_107, %c144_108] : memref<4x512xf32, #tpu.memory_space<vmem>>, vector<4x256xf32>
    %c7_109 = arith.constant 7 : index
    %c0_110 = arith.constant 0 : index
    %c0_111 = arith.constant 0 : index
    %127 = vector.load %arg9[%c7_109, %c0_110, %c0_111] : memref<9x4x4xf32, #tpu.memory_space<vmem>>, vector<1x4x4xf32>
    %128 = vector.shape_cast %127 : vector<1x4x4xf32> to vector<4x4xf32>
    %cst_112 = arith.constant dense<0.000000e+00> : vector<4x256xf32>
    %129 = tpu.matmul %128, %126, %cst_112 {dimension_numbers = #tpu.dot_dimension_numbers<[1], [0], [0], [1], [0, 0, 1, 1], [], []>} : vector<4x4xf32>, vector<4x256xf32>, vector<4x256xf32> -> vector<4x256xf32>
    %130 = arith.addf %125, %129 : vector<4x256xf32>
    %c0_113 = arith.constant 0 : index
    %c145_114 = arith.constant 145 : index
    %131 = vector.load %arg25[%c0_113, %c145_114] : memref<4x512xf32, #tpu.memory_space<vmem>>, vector<4x256xf32>
    %132 = vector.broadcast %9 : vector<1x256xf32> to vector<4x256xf32>
    %133 = arith.mulf %131, %132 : vector<4x256xf32>
    %c8_115 = arith.constant 8 : index
    %c0_116 = arith.constant 0 : index
    %c0_117 = arith.constant 0 : index
    %134 = vector.load %arg9[%c8_115, %c0_116, %c0_117] : memref<9x4x4xf32, #tpu.memory_space<vmem>>, vector<1x4x4xf32>
    %135 = vector.shape_cast %134 : vector<1x4x4xf32> to vector<4x4xf32>
    %cst_118 = arith.constant dense<0.000000e+00> : vector<4x256xf32>
    %136 = tpu.matmul %135, %133, %cst_118 {dimension_numbers = #tpu.dot_dimension_numbers<[1], [0], [0], [1], [0, 0, 1, 1], [], []>} : vector<4x4xf32>, vector<4x256xf32>, vector<4x256xf32> -> vector<4x256xf32>
    %137 = arith.addf %130, %136 : vector<4x256xf32>
    %c0_119 = arith.constant 0 : index
    %c0_120 = arith.constant 0 : index
    %138 = vector.load %arg10[%c0_119, %c0_120] : memref<4x1xf32, #tpu.memory_space<vmem>>, vector<4x1xf32>
    %139 = vector.broadcast %138 : vector<4x1xf32> to vector<4x256xf32>
    %140 = arith.addf %137, %139 : vector<4x256xf32>
    %cst_121 = arith.constant 0.000000e+00 : f32
    %141 = vector.broadcast %cst_121 : f32 to vector<4x256xf32>
    %142 = arith.cmpf oge, %140, %141 : vector<4x256xf32>
    %cst_122 = arith.constant 0.00999999977 : f32
    %143 = vector.broadcast %cst_122 : f32 to vector<4x256xf32>
    %144 = arith.mulf %143, %140 : vector<4x256xf32>
    %145 = arith.select %142, %140, %144 : vector<4x256xi1>, vector<4x256xf32>
    %146 = arith.addf %78, %145 : vector<4x256xf32>
    %c0_123 = arith.constant 0 : index
    %c0_124 = arith.constant 0 : index
    %c0_125 = arith.constant 0 : index
    %147 = vector.load %arg22[%c0_123, %c0_124, %c0_125] : memref<1x4x256xf32, #tpu.memory_space<vmem>>, vector<1x4x256xf32>
    %148 = vector.shape_cast %147 : vector<1x4x256xf32> to vector<4x256xf32>
    %149 = vector.shape_cast %146 : vector<4x256xf32> to vector<1x4x256xf32>
    tpu.vector_store %arg22[%c0_123, %c0_124, %c0_125], %149 {strides = array<i32>} : memref<1x4x256xf32, #tpu.memory_space<vmem>>, vector<1x4x256xf32>,
    %c0_126 = arith.constant 0 : index
    %c0_127 = arith.constant 0 : index
    %150 = vector.load %arg14[%c0_126, %c0_127] : memref<4x4xf32, #tpu.memory_space<vmem>>, vector<4x4xf32>
    %cst_128 = arith.constant dense<0.000000e+00> : vector<4x256xf32>
    %151 = tpu.matmul %150, %5, %cst_128 {dimension_numbers = #tpu.dot_dimension_numbers<[1], [0], [0], [1], [0, 0, 1, 1], [], []>} : vector<4x4xf32>, vector<4x256xf32>, vector<4x256xf32> -> vector<4x256xf32>
    %c0_129 = arith.constant 0 : index
    %c0_130 = arith.constant 0 : index
    %152 = vector.load %arg15[%c0_129, %c0_130] : memref<4x1xf32, #tpu.memory_space<vmem>>, vector<4x1xf32>
    %153 = vector.broadcast %152 : vector<4x1xf32> to vector<4x256xf32>
    %154 = arith.addf %151, %153 : vector<4x256xf32>
    %c0_131 = arith.constant 0 : index
    %c0_132 = arith.constant 0 : index
    %155 = vector.load %arg16[%c0_131, %c0_132] : memref<1x4xf32, #tpu.memory_space<vmem>>, vector<1x4xf32>
    %cst_133 = arith.constant dense<0.000000e+00> : vector<1x256xf32>
    %156 = tpu.matmul %155, %154, %cst_133 {dimension_numbers = #tpu.dot_dimension_numbers<[1], [0], [0], [1], [0, 0, 1, 1], [], []>} : vector<1x4xf32>, vector<4x256xf32>, vector<1x256xf32> -> vector<1x256xf32>
    %c0_134 = arith.constant 0 : index
    %c0_135 = arith.constant 0 : index
    %157 = vector.load %arg17[%c0_134, %c0_135] : memref<1x1xf32, #tpu.memory_space<vmem>>, vector<1x1xf32>
    %158 = vector.broadcast %157 : vector<1x1xf32> to vector<1x256xf32>
    %159 = arith.addf %156, %158 : vector<1x256xf32>
    %cst_136 = arith.constant dense<0xFF800000> : vector<1xf32>
    %160 = vector.multi_reduction <maximumf>, %159, %cst_136 [1] : vector<1x256xf32> to vector<1xf32>
    %161 = vector.shape_cast %160 : vector<1xf32> to vector<1x1xf32>
    %162 = vector.broadcast %161 : vector<1x1xf32> to vector<1x256xf32>
    %163 = arith.subf %159, %162 : vector<1x256xf32>
    %164 = math.exp %163 : vector<1x256xf32>
    %cst_137 = arith.constant dense<0.000000e+00> : vector<1xf32>
    %165 = vector.multi_reduction <add>, %164, %cst_137 [1] : vector<1x256xf32> to vector<1xf32>
    %166 = vector.shape_cast %165 : vector<1xf32> to vector<1x1xf32>
    %167 = vector.broadcast %164 : vector<1x256xf32> to vector<4x256xf32>
    %168 = arith.mulf %154, %167 : vector<4x256xf32>
    %cst_138 = arith.constant dense<0.000000e+00> : vector<4xf32>
    %169 = vector.multi_reduction <add>, %168, %cst_138 [1] : vector<4x256xf32> to vector<4xf32>
    %170 = vector.shape_cast %169 : vector<4xf32> to vector<4x1xf32>
    %171 = tpu.reciprocal %166 {approx = true} : vector<1x1xf32> -> vector<1x1xf32>
    %172 = vector.broadcast %171 : vector<1x1xf32> to vector<4x1xf32>
    %173 = arith.mulf %170, %172 : vector<4x1xf32>
    %c0_139 = arith.constant 0 : index
    %c0_140 = arith.constant 0 : index
    %174 = vector.load %arg18[%c0_139, %c0_140] : memref<4x4xf32, #tpu.memory_space<vmem>>, vector<4x4xf32>
    %cst_141 = arith.constant dense<0.000000e+00> : vector<4x1xf32>
    %175 = tpu.matmul %174, %173, %cst_141 {dimension_numbers = #tpu.dot_dimension_numbers<[1], [0], [0], [1], [0, 0, 1, 1], [], []>} : vector<4x4xf32>, vector<4x1xf32>, vector<4x1xf32> -> vector<4x1xf32>
    %c0_142 = arith.constant 0 : index
    %c0_143 = arith.constant 0 : index
    %176 = vector.load %arg19[%c0_142, %c0_143] : memref<4x1xf32, #tpu.memory_space<vmem>>, vector<4x1xf32>
    %177 = arith.addf %175, %176 : vector<4x1xf32>
    %cst_144 = arith.constant 0.000000e+00 : f32
    %178 = vector.broadcast %cst_144 : f32 to vector<4x1xf32>
    %179 = arith.cmpf oge, %177, %178 : vector<4x1xf32>
    %cst_145 = arith.constant 0.00999999977 : f32
    %180 = vector.broadcast %cst_145 : f32 to vector<4x1xf32>
    %181 = arith.mulf %180, %177 : vector<4x1xf32>
    %182 = arith.select %179, %177, %181 : vector<4x1xi1>, vector<4x1xf32>
    %c0_146 = arith.constant 0 : index
    %c0_147 = arith.constant 0 : index
    %183 = vector.load %arg20[%c0_146, %c0_147] : memref<4x4xf32, #tpu.memory_space<vmem>>, vector<4x4xf32>
    %cst_148 = arith.constant dense<0.000000e+00> : vector<4x1xf32>
    %184 = tpu.matmul %183, %182, %cst_148 {dimension_numbers = #tpu.dot_dimension_numbers<[1], [0], [0], [1], [0, 0, 1, 1], [], []>} : vector<4x4xf32>, vector<4x1xf32>, vector<4x1xf32> -> vector<4x1xf32>
    %c0_149 = arith.constant 0 : index
    %c0_150 = arith.constant 0 : index
    %185 = vector.load %arg21[%c0_149, %c0_150] : memref<4x1xf32, #tpu.memory_space<vmem>>, vector<4x1xf32>
    %186 = arith.addf %184, %185 : vector<4x1xf32>
    %cst_151 = arith.constant 0.000000e+00 : f32
    %187 = vector.broadcast %cst_151 : f32 to vector<4x1xf32>
    %188 = arith.cmpf oge, %186, %187 : vector<4x1xf32>
    %cst_152 = arith.constant 0.00999999977 : f32
    %189 = vector.broadcast %cst_152 : f32 to vector<4x1xf32>
    %190 = arith.mulf %189, %186 : vector<4x1xf32>
    %191 = arith.select %188, %186, %190 : vector<4x1xi1>, vector<4x1xf32>
    %192 = vector.broadcast %191 : vector<4x1xf32> to vector<4x256xf32>
    %193 = arith.addf %154, %192 : vector<4x256xf32>
    %c0_153 = arith.constant 0 : index
    %c0_154 = arith.constant 0 : index
    %c0_155 = arith.constant 0 : index
    %194 = vector.load %arg23[%c0_153, %c0_154, %c0_155] : memref<1x4x256xf32, #tpu.memory_space<vmem>>, vector<1x4x256xf32>
    %195 = vector.shape_cast %194 : vector<1x4x256xf32> to vector<4x256xf32>
    %196 = vector.shape_cast %193 : vector<4x256xf32> to vector<1x4x256xf32>
    tpu.vector_store %arg23[%c0_153, %c0_154, %c0_155], %196 {strides = array<i32>} : memref<1x4x256xf32, #tpu.memory_space<vmem>>, vector<1x4x256xf32>,
    %c0_156 = arith.constant 0 : index
    %c0_157 = arith.constant 0 : index
    %c0_158 = arith.constant 0 : index
    %197 = vector.load %arg3[%c0_156, %c0_157, %c0_158] : memref<1x4x144xf32, #tpu.memory_space<vmem>>, vector<1x4x144xf32>
    %198 = vector.shape_cast %197 : vector<1x4x144xf32> to vector<4x144xf32>
    %c0_159 = arith.constant 0 : index
    %c0_160 = arith.constant 0 : index
    %c0_161 = arith.constant 0 : index
    %199 = vector.load %arg4[%c0_159, %c0_160, %c0_161] : memref<1x4x144xf32, #tpu.memory_space<vmem>>, vector<1x4x144xf32>
    %200 = vector.shape_cast %199 : vector<1x4x144xf32> to vector<4x144xf32>
    %c0_162 = arith.constant 0 : index
    %c128_163 = arith.constant 128 : index
    %201 = vector.load %arg26[%c0_162, %c128_163] : memref<4x400xf32, #tpu.memory_space<vmem>>, vector<4x144xf32>
    tpu.vector_store %arg26[%c0_162, %c128_163], %198 {strides = array<i32>} : memref<4x400xf32, #tpu.memory_space<vmem>>, vector<4x144xf32>,
    %cst_164 = arith.constant 0.000000e+00 : f32
    %202 = vector.broadcast %cst_164 : f32 to vector<8x144xf32>
    %c0_165 = arith.constant 0 : index
    %c118 = arith.constant 118 : index
    %203 = vector.load %arg26[%c0_165, %c118] : memref<4x400xf32, #tpu.memory_space<vmem>>, vector<4x144xf32>
    %204 = vector.broadcast %10 : vector<1x144xf32> to vector<4x144xf32>
    %205 = arith.mulf %203, %204 : vector<4x144xf32>
    %c0_166 = arith.constant 0 : index
    %c0_167 = arith.constant 0 : index
    %c0_168 = arith.constant 0 : index
    %206 = vector.load %arg11[%c0_166, %c0_167, %c0_168] : memref<9x8x4xf32, #tpu.memory_space<vmem>>, vector<1x8x4xf32>
    %207 = vector.shape_cast %206 : vector<1x8x4xf32> to vector<8x4xf32>
    %cst_169 = arith.constant dense<0.000000e+00> : vector<8x144xf32>
    %208 = tpu.matmul %207, %205, %cst_169 {dimension_numbers = #tpu.dot_dimension_numbers<[1], [0], [0], [1], [0, 0, 1, 1], [], []>} : vector<8x4xf32>, vector<4x144xf32>, vector<8x144xf32> -> vector<8x144xf32>
    %209 = arith.addf %202, %208 : vector<8x144xf32>
    %c0_170 = arith.constant 0 : index
    %c119 = arith.constant 119 : index
    %210 = vector.load %arg26[%c0_170, %c119] : memref<4x400xf32, #tpu.memory_space<vmem>>, vector<4x144xf32>
    %c1_171 = arith.constant 1 : index
    %c0_172 = arith.constant 0 : index
    %c0_173 = arith.constant 0 : index
    %211 = vector.load %arg11[%c1_171, %c0_172, %c0_173] : memref<9x8x4xf32, #tpu.memory_space<vmem>>, vector<1x8x4xf32>
    %212 = vector.shape_cast %211 : vector<1x8x4xf32> to vector<8x4xf32>
    %cst_174 = arith.constant dense<0.000000e+00> : vector<8x144xf32>
    %213 = tpu.matmul %212, %210, %cst_174 {dimension_numbers = #tpu.dot_dimension_numbers<[1], [0], [0], [1], [0, 0, 1, 1], [], []>} : vector<8x4xf32>, vector<4x144xf32>, vector<8x144xf32> -> vector<8x144xf32>
    %214 = arith.addf %209, %213 : vector<8x144xf32>
    %c0_175 = arith.constant 0 : index
    %c120 = arith.constant 120 : index
    %215 = vector.load %arg26[%c0_175, %c120] : memref<4x400xf32, #tpu.memory_space<vmem>>, vector<4x144xf32>
    %216 = vector.broadcast %11 : vector<1x144xf32> to vector<4x144xf32>
    %217 = arith.mulf %215, %216 : vector<4x144xf32>
    %c2_176 = arith.constant 2 : index
    %c0_177 = arith.constant 0 : index
    %c0_178 = arith.constant 0 : index
    %218 = vector.load %arg11[%c2_176, %c0_177, %c0_178] : memref<9x8x4xf32, #tpu.memory_space<vmem>>, vector<1x8x4xf32>
    %219 = vector.shape_cast %218 : vector<1x8x4xf32> to vector<8x4xf32>
    %cst_179 = arith.constant dense<0.000000e+00> : vector<8x144xf32>
    %220 = tpu.matmul %219, %217, %cst_179 {dimension_numbers = #tpu.dot_dimension_numbers<[1], [0], [0], [1], [0, 0, 1, 1], [], []>} : vector<8x4xf32>, vector<4x144xf32>, vector<8x144xf32> -> vector<8x144xf32>
    %221 = arith.addf %214, %220 : vector<8x144xf32>
    %c0_180 = arith.constant 0 : index
    %c127_181 = arith.constant 127 : index
    %222 = vector.load %arg26[%c0_180, %c127_181] : memref<4x400xf32, #tpu.memory_space<vmem>>, vector<4x144xf32>
    %223 = vector.broadcast %10 : vector<1x144xf32> to vector<4x144xf32>
    %224 = arith.mulf %222, %223 : vector<4x144xf32>
    %c3_182 = arith.constant 3 : index
    %c0_183 = arith.constant 0 : index
    %c0_184 = arith.constant 0 : index
    %225 = vector.load %arg11[%c3_182, %c0_183, %c0_184] : memref<9x8x4xf32, #tpu.memory_space<vmem>>, vector<1x8x4xf32>
    %226 = vector.shape_cast %225 : vector<1x8x4xf32> to vector<8x4xf32>
    %cst_185 = arith.constant dense<0.000000e+00> : vector<8x144xf32>
    %227 = tpu.matmul %226, %224, %cst_185 {dimension_numbers = #tpu.dot_dimension_numbers<[1], [0], [0], [1], [0, 0, 1, 1], [], []>} : vector<8x4xf32>, vector<4x144xf32>, vector<8x144xf32> -> vector<8x144xf32>
    %228 = arith.addf %221, %227 : vector<8x144xf32>
    %c0_186 = arith.constant 0 : index
    %c128_187 = arith.constant 128 : index
    %229 = vector.load %arg26[%c0_186, %c128_187] : memref<4x400xf32, #tpu.memory_space<vmem>>, vector<4x144xf32>
    %c4_188 = arith.constant 4 : index
    %c0_189 = arith.constant 0 : index
    %c0_190 = arith.constant 0 : index
    %230 = vector.load %arg11[%c4_188, %c0_189, %c0_190] : memref<9x8x4xf32, #tpu.memory_space<vmem>>, vector<1x8x4xf32>
    %231 = vector.shape_cast %230 : vector<1x8x4xf32> to vector<8x4xf32>
    %cst_191 = arith.constant dense<0.000000e+00> : vector<8x144xf32>
    %232 = tpu.matmul %231, %229, %cst_191 {dimension_numbers = #tpu.dot_dimension_numbers<[1], [0], [0], [1], [0, 0, 1, 1], [], []>} : vector<8x4xf32>, vector<4x144xf32>, vector<8x144xf32> -> vector<8x144xf32>
    %233 = arith.addf %228, %232 : vector<8x144xf32>
    %c0_192 = arith.constant 0 : index
    %c129_193 = arith.constant 129 : index
    %234 = vector.load %arg26[%c0_192, %c129_193] : memref<4x400xf32, #tpu.memory_space<vmem>>, vector<4x144xf32>
    %235 = vector.broadcast %11 : vector<1x144xf32> to vector<4x144xf32>
    %236 = arith.mulf %234, %235 : vector<4x144xf32>
    %c5_194 = arith.constant 5 : index
    %c0_195 = arith.constant 0 : index
    %c0_196 = arith.constant 0 : index
    %237 = vector.load %arg11[%c5_194, %c0_195, %c0_196] : memref<9x8x4xf32, #tpu.memory_space<vmem>>, vector<1x8x4xf32>
    %238 = vector.shape_cast %237 : vector<1x8x4xf32> to vector<8x4xf32>
    %cst_197 = arith.constant dense<0.000000e+00> : vector<8x144xf32>
    %239 = tpu.matmul %238, %236, %cst_197 {dimension_numbers = #tpu.dot_dimension_numbers<[1], [0], [0], [1], [0, 0, 1, 1], [], []>} : vector<8x4xf32>, vector<4x144xf32>, vector<8x144xf32> -> vector<8x144xf32>
    %240 = arith.addf %233, %239 : vector<8x144xf32>
    %c0_198 = arith.constant 0 : index
    %c136 = arith.constant 136 : index
    %241 = vector.load %arg26[%c0_198, %c136] : memref<4x400xf32, #tpu.memory_space<vmem>>, vector<4x144xf32>
    %242 = vector.broadcast %10 : vector<1x144xf32> to vector<4x144xf32>
    %243 = arith.mulf %241, %242 : vector<4x144xf32>
    %c6_199 = arith.constant 6 : index
    %c0_200 = arith.constant 0 : index
    %c0_201 = arith.constant 0 : index
    %244 = vector.load %arg11[%c6_199, %c0_200, %c0_201] : memref<9x8x4xf32, #tpu.memory_space<vmem>>, vector<1x8x4xf32>
    %245 = vector.shape_cast %244 : vector<1x8x4xf32> to vector<8x4xf32>
    %cst_202 = arith.constant dense<0.000000e+00> : vector<8x144xf32>
    %246 = tpu.matmul %245, %243, %cst_202 {dimension_numbers = #tpu.dot_dimension_numbers<[1], [0], [0], [1], [0, 0, 1, 1], [], []>} : vector<8x4xf32>, vector<4x144xf32>, vector<8x144xf32> -> vector<8x144xf32>
    %247 = arith.addf %240, %246 : vector<8x144xf32>
    %c0_203 = arith.constant 0 : index
    %c137 = arith.constant 137 : index
    %248 = vector.load %arg26[%c0_203, %c137] : memref<4x400xf32, #tpu.memory_space<vmem>>, vector<4x144xf32>
    %c7_204 = arith.constant 7 : index
    %c0_205 = arith.constant 0 : index
    %c0_206 = arith.constant 0 : index
    %249 = vector.load %arg11[%c7_204, %c0_205, %c0_206] : memref<9x8x4xf32, #tpu.memory_space<vmem>>, vector<1x8x4xf32>
    %250 = vector.shape_cast %249 : vector<1x8x4xf32> to vector<8x4xf32>
    %cst_207 = arith.constant dense<0.000000e+00> : vector<8x144xf32>
    %251 = tpu.matmul %250, %248, %cst_207 {dimension_numbers = #tpu.dot_dimension_numbers<[1], [0], [0], [1], [0, 0, 1, 1], [], []>} : vector<8x4xf32>, vector<4x144xf32>, vector<8x144xf32> -> vector<8x144xf32>
    %252 = arith.addf %247, %251 : vector<8x144xf32>
    %c0_208 = arith.constant 0 : index
    %c138 = arith.constant 138 : index
    %253 = vector.load %arg26[%c0_208, %c138] : memref<4x400xf32, #tpu.memory_space<vmem>>, vector<4x144xf32>
    %254 = vector.broadcast %11 : vector<1x144xf32> to vector<4x144xf32>
    %255 = arith.mulf %253, %254 : vector<4x144xf32>
    %c8_209 = arith.constant 8 : index
    %c0_210 = arith.constant 0 : index
    %c0_211 = arith.constant 0 : index
    %256 = vector.load %arg11[%c8_209, %c0_210, %c0_211] : memref<9x8x4xf32, #tpu.memory_space<vmem>>, vector<1x8x4xf32>
    %257 = vector.shape_cast %256 : vector<1x8x4xf32> to vector<8x4xf32>
    %cst_212 = arith.constant dense<0.000000e+00> : vector<8x144xf32>
    %258 = tpu.matmul %257, %255, %cst_212 {dimension_numbers = #tpu.dot_dimension_numbers<[1], [0], [0], [1], [0, 0, 1, 1], [], []>} : vector<8x4xf32>, vector<4x144xf32>, vector<8x144xf32> -> vector<8x144xf32>
    %259 = arith.addf %252, %258 : vector<8x144xf32>
    %c0_213 = arith.constant 0 : index
    %c128_214 = arith.constant 128 : index
    %260 = vector.load %arg26[%c0_213, %c128_214] : memref<4x400xf32, #tpu.memory_space<vmem>>, vector<4x144xf32>
    tpu.vector_store %arg26[%c0_213, %c128_214], %200 {strides = array<i32>} : memref<4x400xf32, #tpu.memory_space<vmem>>, vector<4x144xf32>,
    %cst_215 = arith.constant 0.000000e+00 : f32
    %261 = vector.broadcast %cst_215 : f32 to vector<8x144xf32>
    %c0_216 = arith.constant 0 : index
    %c118_217 = arith.constant 118 : index
    %262 = vector.load %arg26[%c0_216, %c118_217] : memref<4x400xf32, #tpu.memory_space<vmem>>, vector<4x144xf32>
    %263 = vector.broadcast %10 : vector<1x144xf32> to vector<4x144xf32>
    %264 = arith.mulf %262, %263 : vector<4x144xf32>
    %c0_218 = arith.constant 0 : index
    %c0_219 = arith.constant 0 : index
    %c0_220 = arith.constant 0 : index
    %265 = vector.load %arg12[%c0_218, %c0_219, %c0_220] : memref<9x8x4xf32, #tpu.memory_space<vmem>>, vector<1x8x4xf32>
    %266 = vector.shape_cast %265 : vector<1x8x4xf32> to vector<8x4xf32>
    %cst_221 = arith.constant dense<0.000000e+00> : vector<8x144xf32>
    %267 = tpu.matmul %266, %264, %cst_221 {dimension_numbers = #tpu.dot_dimension_numbers<[1], [0], [0], [1], [0, 0, 1, 1], [], []>} : vector<8x4xf32>, vector<4x144xf32>, vector<8x144xf32> -> vector<8x144xf32>
    %268 = arith.addf %261, %267 : vector<8x144xf32>
    %c0_222 = arith.constant 0 : index
    %c119_223 = arith.constant 119 : index
    %269 = vector.load %arg26[%c0_222, %c119_223] : memref<4x400xf32, #tpu.memory_space<vmem>>, vector<4x144xf32>
    %c1_224 = arith.constant 1 : index
    %c0_225 = arith.constant 0 : index
    %c0_226 = arith.constant 0 : index
    %270 = vector.load %arg12[%c1_224, %c0_225, %c0_226] : memref<9x8x4xf32, #tpu.memory_space<vmem>>, vector<1x8x4xf32>
    %271 = vector.shape_cast %270 : vector<1x8x4xf32> to vector<8x4xf32>
    %cst_227 = arith.constant dense<0.000000e+00> : vector<8x144xf32>
    %272 = tpu.matmul %271, %269, %cst_227 {dimension_numbers = #tpu.dot_dimension_numbers<[1], [0], [0], [1], [0, 0, 1, 1], [], []>} : vector<8x4xf32>, vector<4x144xf32>, vector<8x144xf32> -> vector<8x144xf32>
    %273 = arith.addf %268, %272 : vector<8x144xf32>
    %c0_228 = arith.constant 0 : index
    %c120_229 = arith.constant 120 : index
    %274 = vector.load %arg26[%c0_228, %c120_229] : memref<4x400xf32, #tpu.memory_space<vmem>>, vector<4x144xf32>
    %275 = vector.broadcast %11 : vector<1x144xf32> to vector<4x144xf32>
    %276 = arith.mulf %274, %275 : vector<4x144xf32>
    %c2_230 = arith.constant 2 : index
    %c0_231 = arith.constant 0 : index
    %c0_232 = arith.constant 0 : index
    %277 = vector.load %arg12[%c2_230, %c0_231, %c0_232] : memref<9x8x4xf32, #tpu.memory_space<vmem>>, vector<1x8x4xf32>
    %278 = vector.shape_cast %277 : vector<1x8x4xf32> to vector<8x4xf32>
    %cst_233 = arith.constant dense<0.000000e+00> : vector<8x144xf32>
    %279 = tpu.matmul %278, %276, %cst_233 {dimension_numbers = #tpu.dot_dimension_numbers<[1], [0], [0], [1], [0, 0, 1, 1], [], []>} : vector<8x4xf32>, vector<4x144xf32>, vector<8x144xf32> -> vector<8x144xf32>
    %280 = arith.addf %273, %279 : vector<8x144xf32>
    %c0_234 = arith.constant 0 : index
    %c127_235 = arith.constant 127 : index
    %281 = vector.load %arg26[%c0_234, %c127_235] : memref<4x400xf32, #tpu.memory_space<vmem>>, vector<4x144xf32>
    %282 = vector.broadcast %10 : vector<1x144xf32> to vector<4x144xf32>
    %283 = arith.mulf %281, %282 : vector<4x144xf32>
    %c3_236 = arith.constant 3 : index
    %c0_237 = arith.constant 0 : index
    %c0_238 = arith.constant 0 : index
    %284 = vector.load %arg12[%c3_236, %c0_237, %c0_238] : memref<9x8x4xf32, #tpu.memory_space<vmem>>, vector<1x8x4xf32>
    %285 = vector.shape_cast %284 : vector<1x8x4xf32> to vector<8x4xf32>
    %cst_239 = arith.constant dense<0.000000e+00> : vector<8x144xf32>
    %286 = tpu.matmul %285, %283, %cst_239 {dimension_numbers = #tpu.dot_dimension_numbers<[1], [0], [0], [1], [0, 0, 1, 1], [], []>} : vector<8x4xf32>, vector<4x144xf32>, vector<8x144xf32> -> vector<8x144xf32>
    %287 = arith.addf %280, %286 : vector<8x144xf32>
    %c0_240 = arith.constant 0 : index
    %c128_241 = arith.constant 128 : index
    %288 = vector.load %arg26[%c0_240, %c128_241] : memref<4x400xf32, #tpu.memory_space<vmem>>, vector<4x144xf32>
    %c4_242 = arith.constant 4 : index
    %c0_243 = arith.constant 0 : index
    %c0_244 = arith.constant 0 : index
    %289 = vector.load %arg12[%c4_242, %c0_243, %c0_244] : memref<9x8x4xf32, #tpu.memory_space<vmem>>, vector<1x8x4xf32>
    %290 = vector.shape_cast %289 : vector<1x8x4xf32> to vector<8x4xf32>
    %cst_245 = arith.constant dense<0.000000e+00> : vector<8x144xf32>
    %291 = tpu.matmul %290, %288, %cst_245 {dimension_numbers = #tpu.dot_dimension_numbers<[1], [0], [0], [1], [0, 0, 1, 1], [], []>} : vector<8x4xf32>, vector<4x144xf32>, vector<8x144xf32> -> vector<8x144xf32>
    %292 = arith.addf %287, %291 : vector<8x144xf32>
    %c0_246 = arith.constant 0 : index
    %c129_247 = arith.constant 129 : index
    %293 = vector.load %arg26[%c0_246, %c129_247] : memref<4x400xf32, #tpu.memory_space<vmem>>, vector<4x144xf32>
    %294 = vector.broadcast %11 : vector<1x144xf32> to vector<4x144xf32>
    %295 = arith.mulf %293, %294 : vector<4x144xf32>
    %c5_248 = arith.constant 5 : index
    %c0_249 = arith.constant 0 : index
    %c0_250 = arith.constant 0 : index
    %296 = vector.load %arg12[%c5_248, %c0_249, %c0_250] : memref<9x8x4xf32, #tpu.memory_space<vmem>>, vector<1x8x4xf32>
    %297 = vector.shape_cast %296 : vector<1x8x4xf32> to vector<8x4xf32>
    %cst_251 = arith.constant dense<0.000000e+00> : vector<8x144xf32>
    %298 = tpu.matmul %297, %295, %cst_251 {dimension_numbers = #tpu.dot_dimension_numbers<[1], [0], [0], [1], [0, 0, 1, 1], [], []>} : vector<8x4xf32>, vector<4x144xf32>, vector<8x144xf32> -> vector<8x144xf32>
    %299 = arith.addf %292, %298 : vector<8x144xf32>
    %c0_252 = arith.constant 0 : index
    %c136_253 = arith.constant 136 : index
    %300 = vector.load %arg26[%c0_252, %c136_253] : memref<4x400xf32, #tpu.memory_space<vmem>>, vector<4x144xf32>
    %301 = vector.broadcast %10 : vector<1x144xf32> to vector<4x144xf32>
    %302 = arith.mulf %300, %301 : vector<4x144xf32>
    %c6_254 = arith.constant 6 : index
    %c0_255 = arith.constant 0 : index
    %c0_256 = arith.constant 0 : index
    %303 = vector.load %arg12[%c6_254, %c0_255, %c0_256] : memref<9x8x4xf32, #tpu.memory_space<vmem>>, vector<1x8x4xf32>
    %304 = vector.shape_cast %303 : vector<1x8x4xf32> to vector<8x4xf32>
    %cst_257 = arith.constant dense<0.000000e+00> : vector<8x144xf32>
    %305 = tpu.matmul %304, %302, %cst_257 {dimension_numbers = #tpu.dot_dimension_numbers<[1], [0], [0], [1], [0, 0, 1, 1], [], []>} : vector<8x4xf32>, vector<4x144xf32>, vector<8x144xf32> -> vector<8x144xf32>
    %306 = arith.addf %299, %305 : vector<8x144xf32>
    %c0_258 = arith.constant 0 : index
    %c137_259 = arith.constant 137 : index
    %307 = vector.load %arg26[%c0_258, %c137_259] : memref<4x400xf32, #tpu.memory_space<vmem>>, vector<4x144xf32>
    %c7_260 = arith.constant 7 : index
    %c0_261 = arith.constant 0 : index
    %c0_262 = arith.constant 0 : index
    %308 = vector.load %arg12[%c7_260, %c0_261, %c0_262] : memref<9x8x4xf32, #tpu.memory_space<vmem>>, vector<1x8x4xf32>
    %309 = vector.shape_cast %308 : vector<1x8x4xf32> to vector<8x4xf32>
    %cst_263 = arith.constant dense<0.000000e+00> : vector<8x144xf32>
    %310 = tpu.matmul %309, %307, %cst_263 {dimension_numbers = #tpu.dot_dimension_numbers<[1], [0], [0], [1], [0, 0, 1, 1], [], []>} : vector<8x4xf32>, vector<4x144xf32>, vector<8x144xf32> -> vector<8x144xf32>
    %311 = arith.addf %306, %310 : vector<8x144xf32>
    %c0_264 = arith.constant 0 : index
    %c138_265 = arith.constant 138 : index
    %312 = vector.load %arg26[%c0_264, %c138_265] : memref<4x400xf32, #tpu.memory_space<vmem>>, vector<4x144xf32>
    %313 = vector.broadcast %11 : vector<1x144xf32> to vector<4x144xf32>
    %314 = arith.mulf %312, %313 : vector<4x144xf32>
    %c8_266 = arith.constant 8 : index
    %c0_267 = arith.constant 0 : index
    %c0_268 = arith.constant 0 : index
    %315 = vector.load %arg12[%c8_266, %c0_267, %c0_268] : memref<9x8x4xf32, #tpu.memory_space<vmem>>, vector<1x8x4xf32>
    %316 = vector.shape_cast %315 : vector<1x8x4xf32> to vector<8x4xf32>
    %cst_269 = arith.constant dense<0.000000e+00> : vector<8x144xf32>
    %317 = tpu.matmul %316, %314, %cst_269 {dimension_numbers = #tpu.dot_dimension_numbers<[1], [0], [0], [1], [0, 0, 1, 1], [], []>} : vector<8x4xf32>, vector<4x144xf32>, vector<8x144xf32> -> vector<8x144xf32>
    %318 = arith.addf %311, %317 : vector<8x144xf32>
    %319 = arith.addf %259, %318 : vector<8x144xf32>
    %c0_270 = arith.constant 0 : index
    %c0_271 = arith.constant 0 : index
    %320 = vector.load %arg13[%c0_270, %c0_271] : memref<8x1xf32, #tpu.memory_space<vmem>>, vector<8x1xf32>
    %321 = vector.broadcast %320 : vector<8x1xf32> to vector<8x144xf32>
    %322 = arith.addf %319, %321 : vector<8x144xf32>
    %cst_272 = arith.constant 0.000000e+00 : f32
    %323 = vector.broadcast %cst_272 : f32 to vector<8x144xf32>
    %324 = arith.cmpf oge, %322, %323 : vector<8x144xf32>
    %cst_273 = arith.constant 0.00999999977 : f32
    %325 = vector.broadcast %cst_273 : f32 to vector<8x144xf32>
    %326 = arith.mulf %325, %322 : vector<8x144xf32>
    %327 = arith.select %324, %322, %326 : vector<8x144xi1>, vector<8x144xf32>
    %c0_274 = arith.constant 0 : index
    %c0_275 = arith.constant 0 : index
    %c0_276 = arith.constant 0 : index
    %328 = vector.load %arg24[%c0_274, %c0_275, %c0_276] : memref<1x8x144xf32, #tpu.memory_space<vmem>>, vector<1x8x144xf32>
    %329 = vector.shape_cast %328 : vector<1x8x144xf32> to vector<8x144xf32>
    %330 = vector.shape_cast %327 : vector<8x144xf32> to vector<1x8x144xf32>
    tpu.vector_store %arg24[%c0_274, %c0_275, %c0_276], %330 {strides = array<i32>} : memref<1x8x144xf32, #tpu.memory_space<vmem>>, vector<1x8x144xf32>,
    return
  }
  func.func @transform_0(%arg0: i32) -> (i32, i32, i32) {
    %c0_i32 = arith.constant 0 : i32
    %c0_i32_0 = arith.constant 0 : i32
    %c0_i32_1 = arith.constant 0 : i32
    return %arg0, %c0_i32, %c0_i32_0 : i32, i32, i32
  }
  func.func @transform_1(%arg0: i32) -> (i32, i32, i32) {
    %c0_i32 = arith.constant 0 : i32
    %c0_i32_0 = arith.constant 0 : i32
    %c0_i32_1 = arith.constant 0 : i32
    return %arg0, %c0_i32, %c0_i32_0 : i32, i32, i32
  }
  func.func @transform_2(%arg0: i32) -> (i32, i32, i32) {
    %c0_i32 = arith.constant 0 : i32
    %c0_i32_0 = arith.constant 0 : i32
    %c0_i32_1 = arith.constant 0 : i32
    return %arg0, %c0_i32, %c0_i32_0 : i32, i32, i32
  }
  func.func @transform_3(%arg0: i32) -> (i32, i32, i32) {
    %c0_i32 = arith.constant 0 : i32
    %c0_i32_0 = arith.constant 0 : i32
    %c0_i32_1 = arith.constant 0 : i32
    return %arg0, %c0_i32, %c0_i32_0 : i32, i32, i32
  }
  func.func @transform_4(%arg0: i32) -> (i32, i32) {
    %c0_i32 = arith.constant 0 : i32
    %c0_i32_0 = arith.constant 0 : i32
    %c0_i32_1 = arith.constant 0 : i32
    return %c0_i32, %c0_i32_0 : i32, i32
  }
  func.func @transform_5(%arg0: i32) -> (i32, i32) {
    %c0_i32 = arith.constant 0 : i32
    %c0_i32_0 = arith.constant 0 : i32
    %c0_i32_1 = arith.constant 0 : i32
    return %c0_i32, %c0_i32_0 : i32, i32
  }
  func.func @transform_6(%arg0: i32) -> (i32, i32, i32) {
    %c0_i32 = arith.constant 0 : i32
    %c0_i32_0 = arith.constant 0 : i32
    %c0_i32_1 = arith.constant 0 : i32
    %c0_i32_2 = arith.constant 0 : i32
    return %c0_i32, %c0_i32_0, %c0_i32_1 : i32, i32, i32
  }
  func.func @transform_7(%arg0: i32) -> (i32, i32) {
    %c0_i32 = arith.constant 0 : i32
    %c0_i32_0 = arith.constant 0 : i32
    %c0_i32_1 = arith.constant 0 : i32
    return %c0_i32, %c0_i32_0 : i32, i32
  }
  func.func @transform_8(%arg0: i32) -> (i32, i32, i32) {
    %c0_i32 = arith.constant 0 : i32
    %c0_i32_0 = arith.constant 0 : i32
    %c0_i32_1 = arith.constant 0 : i32
    %c0_i32_2 = arith.constant 0 : i32
    return %c0_i32, %c0_i32_0, %c0_i32_1 : i32, i32, i32
  }
  func.func @transform_9(%arg0: i32) -> (i32, i32) {
    %c0_i32 = arith.constant 0 : i32
    %c0_i32_0 = arith.constant 0 : i32
    %c0_i32_1 = arith.constant 0 : i32
    return %c0_i32, %c0_i32_0 : i32, i32
  }
  func.func @transform_10(%arg0: i32) -> (i32, i32, i32) {
    %c0_i32 = arith.constant 0 : i32
    %c0_i32_0 = arith.constant 0 : i32
    %c0_i32_1 = arith.constant 0 : i32
    %c0_i32_2 = arith.constant 0 : i32
    return %c0_i32, %c0_i32_0, %c0_i32_1 : i32, i32, i32
  }
  func.func @transform_11(%arg0: i32) -> (i32, i32, i32) {
    %c0_i32 = arith.constant 0 : i32
    %c0_i32_0 = arith.constant 0 : i32
    %c0_i32_1 = arith.constant 0 : i32
    %c0_i32_2 = arith.constant 0 : i32
    return %c0_i32, %c0_i32_0, %c0_i32_1 : i32, i32, i32
  }
  func.func @transform_12(%arg0: i32) -> (i32, i32) {
    %c0_i32 = arith.constant 0 : i32
    %c0_i32_0 = arith.constant 0 : i32
    %c0_i32_1 = arith.constant 0 : i32
    return %c0_i32, %c0_i32_0 : i32, i32
  }
  func.func @transform_13(%arg0: i32) -> (i32, i32) {
    %c0_i32 = arith.constant 0 : i32
    %c0_i32_0 = arith.constant 0 : i32
    %c0_i32_1 = arith.constant 0 : i32
    return %c0_i32, %c0_i32_0 : i32, i32
  }
  func.func @transform_14(%arg0: i32) -> (i32, i32) {
    %c0_i32 = arith.constant 0 : i32
    %c0_i32_0 = arith.constant 0 : i32
    %c0_i32_1 = arith.constant 0 : i32
    return %c0_i32, %c0_i32_0 : i32, i32
  }
  func.func @transform_15(%arg0: i32) -> (i32, i32) {
    %c0_i32 = arith.constant 0 : i32
    %c0_i32_0 = arith.constant 0 : i32
    %c0_i32_1 = arith.constant 0 : i32
    return %c0_i32, %c0_i32_0 : i32, i32
  }
  func.func @transform_16(%arg0: i32) -> (i32, i32) {
    %c0_i32 = arith.constant 0 : i32
    %c0_i32_0 = arith.constant 0 : i32
    %c0_i32_1 = arith.constant 0 : i32
    return %c0_i32, %c0_i32_0 : i32, i32
  }
  func.func @transform_17(%arg0: i32) -> (i32, i32) {
    %c0_i32 = arith.constant 0 : i32
    %c0_i32_0 = arith.constant 0 : i32
    %c0_i32_1 = arith.constant 0 : i32
    return %c0_i32, %c0_i32_0 : i32, i32
  }
  func.func @transform_18(%arg0: i32) -> (i32, i32) {
    %c0_i32 = arith.constant 0 : i32
    %c0_i32_0 = arith.constant 0 : i32
    %c0_i32_1 = arith.constant 0 : i32
    return %c0_i32, %c0_i32_0 : i32, i32
  }
  func.func @transform_19(%arg0: i32) -> (i32, i32) {
    %c0_i32 = arith.constant 0 : i32
    %c0_i32_0 = arith.constant 0 : i32
    %c0_i32_1 = arith.constant 0 : i32
    return %c0_i32, %c0_i32_0 : i32, i32
  }
  func.func @transform_20(%arg0: i32) -> (i32, i32) {
    %c0_i32 = arith.constant 0 : i32
    %c0_i32_0 = arith.constant 0 : i32
    %c0_i32_1 = arith.constant 0 : i32
    return %c0_i32, %c0_i32_0 : i32, i32
  }
  func.func @transform_21(%arg0: i32) -> (i32, i32, i32) {
    %c0_i32 = arith.constant 0 : i32
    %c0_i32_0 = arith.constant 0 : i32
    %c0_i32_1 = arith.constant 0 : i32
    return %arg0, %c0_i32, %c0_i32_0 : i32, i32, i32
  }
  func.func @transform_22(%arg0: i32) -> (i32, i32, i32) {
    %c0_i32 = arith.constant 0 : i32
    %c0_i32_0 = arith.constant 0 : i32
    %c0_i32_1 = arith.constant 0 : i32
    return %arg0, %c0_i32, %c0_i32_0 : i32, i32, i32
  }
  func.func @transform_23(%arg0: i32) -> (i32, i32, i32) {
    %c0_i32 = arith.constant 0 : i32
    %c0_i32_0 = arith.constant 0 : i32
    %c0_i32_1 = arith.constant 0 : i32
    return %arg0, %c0_i32, %c0_i32_0 : i32, i32, i32
  }
}

</mosaic_0001>

<llo_original>
// kernel: reverse.0
$region0: #{reverse.0}
  %s0 = inlined_call_operand.vmem [shape: f32[2,4,16,7], index: 0, kind: input, shape index: {}]
  %s1 = inlined_call_operand.vmem [shape: f32[2,4,16,7], index: 1, kind: output, shape index: {}]
  $region1: #{reverse.0} parent=0
    #allocation0 [shape = 'u8[65536]{0}', space=vmem, size = 0x10000, scoped, tag = 'operand span for operand 0']
    #allocation1 [shape = 'u8[32768]{0}', space=vmem, size = 0x8000, scoped, tag = 'operand span for operand 1']
    %s2 = scalar_lea.vmem [#allocation0], 8
    // Predicated region
    $region2: #{reverse.0} parent=1 // pred_check
      _
    $region3: #{reverse.0} parent=1 // pred_check_branch
      %4 = sbr.rel (0) target = $region5
    $region4: #{reverse.0} parent=1 // pred_region
      // Predicated region
      $region6: #{reverse.0} parent=4 // pred_check
        _
      $region7: #{reverse.0} parent=4 // pred_check_branch
        %6 = sbr.rel (0) target = $region9
      $region8: #{reverse.0} parent=4 // pred_region
        // Predicated region
        $region21: #{reverse.0} parent=8 // pred_check
          _
        $region22: #{reverse.0} parent=8 // pred_check_branch
          %35 = sbr.rel (0) target = $region24
        $region23: #{reverse.0} parent=8 // pred_region
          loop: start=0, step=1, limit=1
          $region25: #{reverse.0} parent=23 // loop_pre_header
            _
          $region26: #{reverse.0} parent=23 // loop_header
            %s37 = sphi 0, %s41
            %p38 = scmp.ge.s32.totalorder %s37, 1
            %s42 = sphi %s0, %s0
            %s43 = sphi %s2, %s2
          $region27: #{reverse.0} parent=23 // loop_header_branch
            %40 = sbr.rel (%p38) target = $region31
          $region28: #{reverse.0} parent=23 // loop_body
            %v44 = vld [vmem:[%s42] sm:$0xff]
            %45 = vst [vmem:[%s43] sm:$0xff] %v44
            %v46 = vld [vmem:[%s42 + $0x8] sm:$0xff]
            %47 = vst [vmem:[%s43 + $0x10] sm:$0xff] %v46
            %v48 = vld [vmem:[%s42 + $0x10] sm:$0xff]
            %49 = vst [vmem:[%s43 + $0x20] sm:$0xff] %v48
            %v50 = vld [vmem:[%s42 + $0x18] sm:$0xff]
            %51 = vst [vmem:[%s43 + $0x30] sm:$0xff] %v50
            %v52 = vld [vmem:[%s42 + $0x20] sm:$0xff]
            %53 = vst [vmem:[%s43 + $0x40] sm:$0xff] %v52
            %v54 = vld [vmem:[%s42 + $0x28] sm:$0xff]
            %55 = vst [vmem:[%s43 + $0x50] sm:$0xff] %v54
            %v56 = vld [vmem:[%s42 + $0x30] sm:$0xff]
            %57 = vst [vmem:[%s43 + $0x60] sm:$0xff] %v56
            %v58 = vld [vmem:[%s42 + $0x38] sm:$0xff]
            %59 = vst [vmem:[%s43 + $0x70] sm:$0xff] %v58
          $region29: #{reverse.0} parent=23 // loop_footer
            %s41 = sadd.s32 1, %s37
          $region30: #{reverse.0} parent=23 // loop_footer_branch
            %36 = sbr.rel target = $region26
          $region31: #{reverse.0} parent=23 // loop_exit
            _
        $region24: #{reverse.0} parent=8 // pred_fallthru
          _
        // Predicated region
        $region32: #{reverse.0} parent=8 // pred_check
          _
        $region33: #{reverse.0} parent=8 // pred_check_branch
          %61 = sbr.rel target = $region35
        $region34: #{reverse.0} parent=8 // pred_region
          _
        $region35: #{reverse.0} parent=8 // pred_fallthru
          _
      $region9: #{reverse.0} parent=4 // pred_fallthru
        _
      // Predicated region
      $region10: #{reverse.0} parent=4 // pred_check
        _
      $region11: #{reverse.0} parent=4 // pred_check_branch
        %8 = sbr.rel target = $region13
      $region12: #{reverse.0} parent=4 // pred_region
        loop: start=0, step=1, limit=1
        $region14: #{reverse.0} parent=12 // loop_pre_header
          _
        $region15: #{reverse.0} parent=12 // loop_header
          %s11 = sphi 0, %s15
          %p12 = scmp.ge.s32.totalorder %s11, 1
          %s16 = sphi %s0, %s0
          %s17 = sphi %s2, %s2
        $region16: #{reverse.0} parent=12 // loop_header_branch
          %14 = sbr.rel (%p12) target = $region20
        $region17: #{reverse.0} parent=12 // loop_body
          %v18 = vld [vmem:[%s16] sm:$0xff]
          %19 = vst [vmem:[%s17] sm:$0xff] %v18
          %v20 = vld [vmem:[%s16 + $0x8] sm:$0xff]
          %21 = vst [vmem:[%s17 + $0x10] sm:$0xff] %v20
          %v22 = vld [vmem:[%s16 + $0x10] sm:$0xff]
          %23 = vst [vmem:[%s17 + $0x20] sm:$0xff] %v22
          %v24 = vld [vmem:[%s16 + $0x18] sm:$0xff]
          %25 = vst [vmem:[%s17 + $0x30] sm:$0xff] %v24
          %v26 = vld [vmem:[%s16 + $0x20] sm:$0xff]
          %27 = vst [vmem:[%s17 + $0x40] sm:$0xff] %v26
          %v28 = vld [vmem:[%s16 + $0x28] sm:$0xff]
          %29 = vst [vmem:[%s17 + $0x50] sm:$0xff] %v28
          %v30 = vld [vmem:[%s16 + $0x30] sm:$0xff]
          %31 = vst [vmem:[%s17 + $0x60] sm:$0xff] %v30
          %v32 = vld [vmem:[%s16 + $0x38] sm:$0xff]
          %33 = vst [vmem:[%s17 + $0x70] sm:$0xff] %v32
        $region18: #{reverse.0} parent=12 // loop_footer
          %s15 = sadd.s32 1, %s11
        $region19: #{reverse.0} parent=12 // loop_footer_branch
          %10 = sbr.rel target = $region15
        $region20: #{reverse.0} parent=12 // loop_exit
          _
      $region13: #{reverse.0} parent=4 // pred_fallthru
        _
    $region5: #{reverse.0} parent=1 // pred_fallthru
      _
    %62 = vnop
    %s63 = scalar_lea.vmem [#allocation0], 7
    %v64 = vld [vmem:[%s63] ss:$-1 sm:$0xff]
    %v65 = vrot.slane %v64, 1
    %66 = vst [vmem:[#allocation1] sm:$0xff] %v65
    %s67 = scalar_lea.vmem [#allocation0], 8
    %s68 = scalar_lea.vmem %s67, 7 [#allocation0]
    %v69 = vld [vmem:[%s68] ss:$-1 sm:$0xff]
    %v70 = vrot.slane %v69, 1
    %v71 = vlaneseq
    %v72 = vshrl.u32 %v71, 7
    %vm73 = vcmp.lt.s32.totalorder %v72, 7
    %74 = vst.msk [vmem:[#allocation1] sm:$0xff] %vm73, %v70
    %s75 = scalar_lea.vmem [#allocation1], 8
    %s76 = scalar_lea.vmem [#allocation0], 16
    %s77 = scalar_lea.vmem %s76, 7 [#allocation0]
    %v78 = vld [vmem:[%s77] ss:$-1 sm:$0xff]
    %v79 = vrot.slane %v78, 1
    %80 = vst [vmem:[%s75] sm:$0xff] %v79
    %s81 = scalar_lea.vmem %s76, 8 [#allocation0]
    %s82 = scalar_lea.vmem %s81, 7 [#allocation0]
    %v83 = vld [vmem:[%s82] ss:$-1 sm:$0xff]
    %v84 = vrot.slane %v83, 1
    %v85 = vlaneseq
    %v86 = vshrl.u32 %v85, 7
    %vm87 = vcmp.lt.s32.totalorder %v86, 7
    %88 = vst.msk [vmem:[%s75] sm:$0xff] %vm87, %v84
    %s89 = scalar_lea.vmem [#allocation1], 16
    %s90 = scalar_lea.vmem [#allocation0], 32
    %s91 = scalar_lea.vmem %s90, 7 [#allocation0]
    %v92 = vld [vmem:[%s91] ss:$-1 sm:$0xff]
    %v93 = vrot.slane %v92, 1
    %94 = vst [vmem:[%s89] sm:$0xff] %v93
    %s95 = scalar_lea.vmem %s90, 8 [#allocation0]
    %s96 = scalar_lea.vmem %s95, 7 [#allocation0]
    %v97 = vld [vmem:[%s96] ss:$-1 sm:$0xff]
    %v98 = vrot.slane %v97, 1
    %v99 = vlaneseq
    %v100 = vshrl.u32 %v99, 7
    %vm101 = vcmp.lt.s32.totalorder %v100, 7
    %102 = vst.msk [vmem:[%s89] sm:$0xff] %vm101, %v98
    %s103 = scalar_lea.vmem [#allocation1], 24
    %s104 = scalar_lea.vmem [#allocation0], 48
    %s105 = scalar_lea.vmem %s104, 7 [#allocation0]
    %v106 = vld [vmem:[%s105] ss:$-1 sm:$0xff]
    %v107 = vrot.slane %v106, 1
    %108 = vst [vmem:[%s103] sm:$0xff] %v107
    %s109 = scalar_lea.vmem %s104, 8 [#allocation0]
    %s110 = scalar_lea.vmem %s109, 7 [#allocation0]
    %v111 = vld [vmem:[%s110] ss:$-1 sm:$0xff]
    %v112 = vrot.slane %v111, 1
    %v113 = vlaneseq
    %v114 = vshrl.u32 %v113, 7
    %vm115 = vcmp.lt.s32.totalorder %v114, 7
    %116 = vst.msk [vmem:[%s103] sm:$0xff] %vm115, %v112
    %s117 = scalar_lea.vmem [#allocation1], 32
    %s118 = scalar_lea.vmem [#allocation0], 64
    %s119 = scalar_lea.vmem %s118, 7 [#allocation0]
    %v120 = vld [vmem:[%s119] ss:$-1 sm:$0xff]
    %v121 = vrot.slane %v120, 1
    %122 = vst [vmem:[%s117] sm:$0xff] %v121
    %s123 = scalar_lea.vmem %s118, 8 [#allocation0]
    %s124 = scalar_lea.vmem %s123, 7 [#allocation0]
    %v125 = vld [vmem:[%s124] ss:$-1 sm:$0xff]
    %v126 = vrot.slane %v125, 1
    %v127 = vlaneseq
    %v128 = vshrl.u32 %v127, 7
    %vm129 = vcmp.lt.s32.totalorder %v128, 7
    %130 = vst.msk [vmem:[%s117] sm:$0xff] %vm129, %v126
    %s131 = scalar_lea.vmem [#allocation1], 40
    %s132 = scalar_lea.vmem [#allocation0], 80
    %s133 = scalar_lea.vmem %s132, 7 [#allocation0]
    %v134 = vld [vmem:[%s133] ss:$-1 sm:$0xff]
    %v135 = vrot.slane %v134, 1
    %136 = vst [vmem:[%s131] sm:$0xff] %v135
    %s137 = scalar_lea.vmem %s132, 8 [#allocation0]
    %s138 = scalar_lea.vmem %s137, 7 [#allocation0]
    %v139 = vld [vmem:[%s138] ss:$-1 sm:$0xff]
    %v140 = vrot.slane %v139, 1
    %v141 = vlaneseq
    %v142 = vshrl.u32 %v141, 7
    %vm143 = vcmp.lt.s32.totalorder %v142, 7
    %144 = vst.msk [vmem:[%s131] sm:$0xff] %vm143, %v140
    %s145 = scalar_lea.vmem [#allocation1], 48
    %s146 = scalar_lea.vmem [#allocation0], 96
    %s147 = scalar_lea.vmem %s146, 7 [#allocation0]
    %v148 = vld [vmem:[%s147] ss:$-1 sm:$0xff]
    %v149 = vrot.slane %v148, 1
    %150 = vst [vmem:[%s145] sm:$0xff] %v149
    %s151 = scalar_lea.vmem %s146, 8 [#allocation0]
    %s152 = scalar_lea.vmem %s151, 7 [#allocation0]
    %v153 = vld [vmem:[%s152] ss:$-1 sm:$0xff]
    %v154 = vrot.slane %v153, 1
    %v155 = vlaneseq
    %v156 = vshrl.u32 %v155, 7
    %vm157 = vcmp.lt.s32.totalorder %v156, 7
    %158 = vst.msk [vmem:[%s145] sm:$0xff] %vm157, %v154
    %s159 = scalar_lea.vmem [#allocation1], 56
    %s160 = scalar_lea.vmem [#allocation0], 112
    %s161 = scalar_lea.vmem %s160, 7 [#allocation0]
    %v162 = vld [vmem:[%s161] ss:$-1 sm:$0xff]
    %v163 = vrot.slane %v162, 1
    %164 = vst [vmem:[%s159] sm:$0xff] %v163
    %s165 = scalar_lea.vmem %s160, 8 [#allocation0]
    %s166 = scalar_lea.vmem %s165, 7 [#allocation0]
    %v167 = vld [vmem:[%s166] ss:$-1 sm:$0xff]
    %v168 = vrot.slane %v167, 1
    %v169 = vlaneseq
    %v170 = vshrl.u32 %v169, 7
    %vm171 = vcmp.lt.s32.totalorder %v170, 7
    %172 = vst.msk [vmem:[%s159] sm:$0xff] %vm171, %v168
    // Predicated region
    $region36: #{reverse.0} parent=1 // pred_check
      _
    $region37: #{reverse.0} parent=1 // pred_check_branch
      %174 = sbr.rel (0) target = $region39
    $region38: #{reverse.0} parent=1 // pred_region
      // Predicated region
      $region40: #{reverse.0} parent=38 // pred_check
        _
      $region41: #{reverse.0} parent=38 // pred_check_branch
        %176 = sbr.rel (0) target = $region43
      $region42: #{reverse.0} parent=38 // pred_region
        // Predicated region
        $region55: #{reverse.0} parent=42 // pred_check
          _
        $region56: #{reverse.0} parent=42 // pred_check_branch
          %205 = sbr.rel (0) target = $region58
        $region57: #{reverse.0} parent=42 // pred_region
          loop: start=0, step=1, limit=1
          $region59: #{reverse.0} parent=57 // loop_pre_header
            _
          $region60: #{reverse.0} parent=57 // loop_header
            %s207 = sphi 0, %s211
            %p208 = scmp.ge.s32.totalorder %s207, 1
            %s212 = sphi [#allocation1], [#allocation1]
            %s213 = sphi %s1, %s1
          $region61: #{reverse.0} parent=57 // loop_header_branch
            %210 = sbr.rel (%p208) target = $region65
          $region62: #{reverse.0} parent=57 // loop_body
            %v214 = vld [vmem:[%s212] sm:$0xff]
            %215 = vst [vmem:[%s213] sm:$0xff] %v214
            %v216 = vld [vmem:[%s212 + $0x8] sm:$0xff]
            %217 = vst [vmem:[%s213 + $0x8] sm:$0xff] %v216
            %v218 = vld [vmem:[%s212 + $0x10] sm:$0xff]
            %219 = vst [vmem:[%s213 + $0x10] sm:$0xff] %v218
            %v220 = vld [vmem:[%s212 + $0x18] sm:$0xff]
            %221 = vst [vmem:[%s213 + $0x18] sm:$0xff] %v220
            %v222 = vld [vmem:[%s212 + $0x20] sm:$0xff]
            %223 = vst [vmem:[%s213 + $0x20] sm:$0xff] %v222
            %v224 = vld [vmem:[%s212 + $0x28] sm:$0xff]
            %225 = vst [vmem:[%s213 + $0x28] sm:$0xff] %v224
            %v226 = vld [vmem:[%s212 + $0x30] sm:$0xff]
            %227 = vst [vmem:[%s213 + $0x30] sm:$0xff] %v226
            %v228 = vld [vmem:[%s212 + $0x38] sm:$0xff]
            %229 = vst [vmem:[%s213 + $0x38] sm:$0xff] %v228
          $region63: #{reverse.0} parent=57 // loop_footer
            %s211 = sadd.s32 1, %s207
          $region64: #{reverse.0} parent=57 // loop_footer_branch
            %206 = sbr.rel target = $region60
          $region65: #{reverse.0} parent=57 // loop_exit
            _
        $region58: #{reverse.0} parent=42 // pred_fallthru
          _
        // Predicated region
        $region66: #{reverse.0} parent=42 // pred_check
          _
        $region67: #{reverse.0} parent=42 // pred_check_branch
          %231 = sbr.rel target = $region69
        $region68: #{reverse.0} parent=42 // pred_region
          _
        $region69: #{reverse.0} parent=42 // pred_fallthru
          _
      $region43: #{reverse.0} parent=38 // pred_fallthru
        _
      // Predicated region
      $region44: #{reverse.0} parent=38 // pred_check
        _
      $region45: #{reverse.0} parent=38 // pred_check_branch
        %178 = sbr.rel target = $region47
      $region46: #{reverse.0} parent=38 // pred_region
        loop: start=0, step=1, limit=1
        $region48: #{reverse.0} parent=46 // loop_pre_header
          _
        $region49: #{reverse.0} parent=46 // loop_header
          %s181 = sphi 0, %s185
          %p182 = scmp.ge.s32.totalorder %s181, 1
          %s186 = sphi [#allocation1], [#allocation1]
          %s187 = sphi %s1, %s1
        $region50: #{reverse.0} parent=46 // loop_header_branch
          %184 = sbr.rel (%p182) target = $region54
        $region51: #{reverse.0} parent=46 // loop_body
          %v188 = vld [vmem:[%s186] sm:$0xff]
          %189 = vst [vmem:[%s187] sm:$0xff] %v188
          %v190 = vld [vmem:[%s186 + $0x8] sm:$0xff]
          %191 = vst [vmem:[%s187 + $0x8] sm:$0xff] %v190
          %v192 = vld [vmem:[%s186 + $0x10] sm:$0xff]
          %193 = vst [vmem:[%s187 + $0x10] sm:$0xff] %v192
          %v194 = vld [vmem:[%s186 + $0x18] sm:$0xff]
          %195 = vst [vmem:[%s187 + $0x18] sm:$0xff] %v194
          %v196 = vld [vmem:[%s186 + $0x20] sm:$0xff]
          %197 = vst [vmem:[%s187 + $0x20] sm:$0xff] %v196
          %v198 = vld [vmem:[%s186 + $0x28] sm:$0xff]
          %199 = vst [vmem:[%s187 + $0x28] sm:$0xff] %v198
          %v200 = vld [vmem:[%s186 + $0x30] sm:$0xff]
          %201 = vst [vmem:[%s187 + $0x30] sm:$0xff] %v200
          %v202 = vld [vmem:[%s186 + $0x38] sm:$0xff]
          %203 = vst [vmem:[%s187 + $0x38] sm:$0xff] %v202
        $region52: #{reverse.0} parent=46 // loop_footer
          %s185 = sadd.s32 1, %s181
        $region53: #{reverse.0} parent=46 // loop_footer_branch
          %180 = sbr.rel target = $region49
        $region54: #{reverse.0} parent=46 // loop_exit
          _
      $region47: #{reverse.0} parent=38 // pred_fallthru
        _
    $region39: #{reverse.0} parent=1 // pred_fallthru
      _
    %232 = vnop

// kernel: fourier_convolution_block.1
$region0: #{fourier_convolution_block.1}
  #allocation0 [shape = 'u32[]', space=smem, size = 0x4, offset = 0x4, fixed_abs, tag = 'smem constant byte address 0x4 - core index']
  #allocation1 [shape = 'u32[144,128]{1,0:T(1,128)}', space=vmem, size = 0x12000, scoped, tag = 'internal scratch']
  #allocation2 [shape = 'f32[4,512]{1,0:T(4,128)}', space=vmem, size = 0x2000, scoped, tag = 'scratch operand']
  #allocation3 [shape = 'f32[4,400]{1,0:T(4,128)}', space=vmem, size = 0x2000, scoped, tag = 'scratch operand']
  #allocation4 [shape = 'f32[1,1]{1,0:T(1,128)S(1)}', space=vmem, size = 0x200, scoped, tag = 'scoped memory for fourier_convolution_block.1']
  %s0 = inlined_call_operand.vmem [shape: f32[2,4,256], index: 0, kind: input, shape index: {}]
  %s1 = inlined_call_operand.vmem [shape: f32[2,4,256], index: 1, kind: input, shape index: {}]
  %s2 = inlined_call_operand.vmem [shape: f32[2,4,144], index: 2, kind: input, shape index: {}]
  %s3 = inlined_call_operand.vmem [shape: f32[2,4,144], index: 3, kind: input, shape index: {}]
  %s4 = inlined_call_operand.vmem [shape: f32[2,256], index: 4, kind: input, shape index: {}]
  %s5 = inlined_call_operand.vmem [shape: f32[2,144], index: 5, kind: input, shape index: {}]
  %s6 = inlined_call_operand.vmem [shape: f32[9,4,4], index: 6, kind: input, shape index: {}]
  %s7 = inlined_call_operand.vmem [shape: f32[4,1], index: 7, kind: input, shape index: {}]
  %s8 = inlined_call_operand.vmem [shape: f32[9,4,4], index: 8, kind: input, shape index: {}]
  %s9 = inlined_call_operand.vmem [shape: f32[4,1], index: 9, kind: input, shape index: {}]
  %s10 = inlined_call_operand.vmem [shape: f32[9,8,4], index: 10, kind: input, shape index: {}]
  %s11 = inlined_call_operand.vmem [shape: f32[9,8,4], index: 11, kind: input, shape index: {}]
  %s12 = inlined_call_operand.vmem [shape: f32[8,1], index: 12, kind: input, shape index: {}]
  %s13 = inlined_call_operand.vmem [shape: f32[4,4], index: 13, kind: input, shape index: {}]
  %s14 = inlined_call_operand.vmem [shape: f32[4,1], index: 14, kind: input, shape index: {}]
  %s15 = inlined_call_operand.vmem [shape: f32[1,4], index: 15, kind: input, shape index: {}]
  %s16 = inlined_call_operand.<no memory space> [shape: f32[1,1], index: 16, kind: input, shape index: {}]
  %s17 = inlined_call_operand.vmem [shape: f32[4,4], index: 17, kind: input, shape index: {}]
  %s18 = inlined_call_operand.vmem [shape: f32[4,1], index: 18, kind: input, shape index: {}]
  %s19 = inlined_call_operand.vmem [shape: f32[4,4], index: 19, kind: input, shape index: {}]
  %s20 = inlined_call_operand.vmem [shape: f32[4,1], index: 20, kind: input, shape index: {}]
  %s21 = inlined_call_operand.vmem [shape: f32[2,4,256], index: 21, kind: output, shape index: {0}]
  %s22 = inlined_call_operand.vmem [shape: f32[2,4,256], index: 22, kind: output, shape index: {1}]
  %s23 = inlined_call_operand.vmem [shape: f32[2,8,144], index: 23, kind: output, shape index: {2}]
  %24 = xla_tuple %s21, %s22, %s23
  %s25 = sld [smem:[#allocation0]]
  $region133: #{fourier_convolution_block.1} parent=0
    _
  %s27 = ssub.s32 1, %s25
  %s28 = scalar_select 0, %s27, %s25
  %v29 = vstv %s16
  %30 = vst [vmem:[#allocation4] sm:$0x1] %v29
  loop: start=0, step=1, limit=4
  $region2: #{fourier_convolution_block.1} parent=0 // loop_pre_header
    _
  $region3: #{fourier_convolution_block.1} parent=0 // loop_header
    %s32 = sphi 0, %s36
    %p33 = scmp.ge.s32.totalorder %s32, 4
    %s42 = sphi 0, %s44
    %s45 = sphi 0, %s42
    %s46 = sphi 0, %s45
    %s62 = sphi 0, %s46
    %s68 = sphi 0, %s70
    %s71 = sphi 0, %s68
    %s72 = sphi 0, %s71
    %s88 = sphi 0, %s72
    %s94 = sphi 0, %s96
    %s97 = sphi 0, %s94
    %s98 = sphi 0, %s97
    %s114 = sphi 0, %s98
    %s120 = sphi 0, %s122
    %s123 = sphi 0, %s120
    %s124 = sphi 0, %s123
    %s140 = sphi 0, %s124
    %s144 = sphi 0, %s144
    %s146 = sphi 0, %s144
    %s147 = sphi 0, %s146
    %s161 = sphi 0, %s147
    %s165 = sphi 0, %s165
    %s167 = sphi 0, %s165
    %s168 = sphi 0, %s167
    %s182 = sphi 0, %s168
    %s186 = sphi 0, %s186
    %s188 = sphi 0, %s186
    %s189 = sphi 0, %s188
    %s203 = sphi 0, %s189
    %s207 = sphi 0, %s207
    %s209 = sphi 0, %s207
    %s210 = sphi 0, %s209
    %s224 = sphi 0, %s210
    %s228 = sphi 0, %s228
    %s230 = sphi 0, %s228
    %s231 = sphi 0, %s230
    %s245 = sphi 0, %s231
    %s249 = sphi 0, %s249
    %s251 = sphi 0, %s249
    %s252 = sphi 0, %s251
    %s266 = sphi 0, %s252
    %s270 = sphi 0, %s270
    %s272 = sphi 0, %s270
    %s273 = sphi 0, %s272
    %s287 = sphi 0, %s273
    %s291 = sphi 0, %s291
    %s293 = sphi 0, %s291
    %s294 = sphi 0, %s293
    %s308 = sphi 0, %s294
    %s312 = sphi 0, %s312
    %s314 = sphi 0, %s312
    %s315 = sphi 0, %s314
    %s329 = sphi 0, %s315
    %s333 = sphi 0, %s333
    %s335 = sphi 0, %s333
    %s336 = sphi 0, %s335
    %s350 = sphi 0, %s336
    %s354 = sphi 0, %s354
    %s356 = sphi 0, %s354
    %s357 = sphi 0, %s356
    %s371 = sphi 0, %s357
    %s375 = sphi 0, %s375
    %s377 = sphi 0, %s375
    %s378 = sphi 0, %s377
    %s392 = sphi 0, %s378
    %s396 = sphi 0, %s396
    %s398 = sphi 0, %s396
    %s399 = sphi 0, %s398
    %s413 = sphi 0, %s399
    %s417 = sphi 0, %s417
    %s419 = sphi 0, %s417
    %s420 = sphi 0, %s419
    %s434 = sphi 0, %s420
    %s438 = sphi 0, %s438
    %s440 = sphi 0, %s438
    %s441 = sphi 0, %s440
    %s455 = sphi 0, %s441
    %s459 = sphi 0, %s459
    %s461 = sphi 0, %s459
    %s462 = sphi 0, %s461
    %s476 = sphi 0, %s462
    %s480 = sphi 0, %s480
    %s482 = sphi 0, %s480
    %s483 = sphi 0, %s482
    %s497 = sphi 0, %s483
    %s503 = sphi 0, %s505
    %s506 = sphi 0, %s503
    %s507 = sphi 0, %s506
    %s523 = sphi 0, %s507
    %s529 = sphi 0, %s531
    %s532 = sphi 0, %s529
    %s533 = sphi 0, %s532
    %s549 = sphi 0, %s533
    %s555 = sphi 0, %s557
    %s558 = sphi 0, %s555
    %s559 = sphi 0, %s558
    %s575 = sphi 0, %s559
  $region4: #{fourier_convolution_block.1} parent=0 // loop_header_branch
    %35 = sbr.rel (%p33) target = $region8
  $region5: #{fourier_convolution_block.1} parent=0 // loop_body
    %s37 = ssub.s32 %s32, 1
    %s38 = ssub.s32 %s32, 2
    %s39 = sadd.s32 %s32, 1
    %s40 = ssub.s32 %s32, %s39
    %p41 = scmp.eq.s32.totalorder %s40, 0
    %s43 = sadd.s32 %s42, 1
    %s44 = scalar_select %p41, %s42, %s43
    %p47 = pneg %p41
    %p48 = scmp.eq.s32.totalorder %s32, 1
    %p49 = por %p47, %p48
    %p50 = scmp.ne.s32.totalorder %s42, %s45
    %p51 = scmp.eq.s32.totalorder %s32, 0
    %p52 = por %p50, %p51
    %p53 = scmp.ne.s32.totalorder %s42, %s45
    %p54 = scmp.eq.s32.totalorder %s37, 1
    %p55 = por %p53, %p54
    %p56 = scmp.ne.s32.totalorder %s45, %s46
    %p57 = scmp.eq.s32.totalorder %s37, 0
    %p58 = por %p56, %p57
    %p59 = scmp.ne.s32.totalorder %s45, %s46
    %p60 = scmp.eq.s32.totalorder %s38, 1
    %p61 = por %p59, %p60
    %p63 = scmp.ne.s32.totalorder %s46, %s62
    %p64 = scmp.eq.s32.totalorder %s38, 0
    %p65 = por %p63, %p64
    %s66 = ssub.s32 %s32, %s39
    %p67 = scmp.eq.s32.totalorder %s66, 0
    %s69 = sadd.s32 %s68, 1
    %s70 = scalar_select %p67, %s68, %s69
    %p73 = pneg %p67
    %p74 = scmp.eq.s32.totalorder %s32, 1
    %p75 = por %p73, %p74
    %p76 = scmp.ne.s32.totalorder %s68, %s71
    %p77 = scmp.eq.s32.totalorder %s32, 0
    %p78 = por %p76, %p77
    %p79 = scmp.ne.s32.totalorder %s68, %s71
    %p80 = scmp.eq.s32.totalorder %s37, 1
    %p81 = por %p79, %p80
    %p82 = scmp.ne.s32.totalorder %s71, %s72
    %p83 = scmp.eq.s32.totalorder %s37, 0
    %p84 = por %p82, %p83
    %p85 = scmp.ne.s32.totalorder %s71, %s72
    %p86 = scmp.eq.s32.totalorder %s38, 1
    %p87 = por %p85, %p86
    %p89 = scmp.ne.s32.totalorder %s72, %s88
    %p90 = scmp.eq.s32.totalorder %s38, 0
    %p91 = por %p89, %p90
    %s92 = ssub.s32 %s32, %s39
    %p93 = scmp.eq.s32.totalorder %s92, 0
    %s95 = sadd.s32 %s94, 1
    %s96 = scalar_select %p93, %s94, %s95
    %p99 = pneg %p93
    %p100 = scmp.eq.s32.totalorder %s32, 1
    %p101 = por %p99, %p100
    %p102 = scmp.ne.s32.totalorder %s94, %s97
    %p103 = scmp.eq.s32.totalorder %s32, 0
    %p104 = por %p102, %p103
    %p105 = scmp.ne.s32.totalorder %s94, %s97
    %p106 = scmp.eq.s32.totalorder %s37, 1
    %p107 = por %p105, %p106
    %p108 = scmp.ne.s32.totalorder %s97, %s98
    %p109 = scmp.eq.s32.totalorder %s37, 0
    %p110 = por %p108, %p109
    %p111 = scmp.ne.s32.totalorder %s97, %s98
    %p112 = scmp.eq.s32.totalorder %s38, 1
    %p113 = por %p111, %p112
    %p115 = scmp.ne.s32.totalorder %s98, %s114
    %p116 = scmp.eq.s32.totalorder %s38, 0
    %p117 = por %p115, %p116
    %s118 = ssub.s32 %s32, %s39
    %p119 = scmp.eq.s32.totalorder %s118, 0
    %s121 = sadd.s32 %s120, 1
    %s122 = scalar_select %p119, %s120, %s121
    %p125 = pneg %p119
    %p126 = scmp.eq.s32.totalorder %s32, 1
    %p127 = por %p125, %p126
    %p128 = scmp.ne.s32.totalorder %s120, %s123
    %p129 = scmp.eq.s32.totalorder %s32, 0
    %p130 = por %p128, %p129
    %p131 = scmp.ne.s32.totalorder %s120, %s123
    %p132 = scmp.eq.s32.totalorder %s37, 1
    %p133 = por %p131, %p132
    %p134 = scmp.ne.s32.totalorder %s123, %s124
    %p135 = scmp.eq.s32.totalorder %s37, 0
    %p136 = por %p134, %p135
    %p137 = scmp.ne.s32.totalorder %s123, %s124
    %p138 = scmp.eq.s32.totalorder %s38, 1
    %p139 = por %p137, %p138
    %p141 = scmp.ne.s32.totalorder %s124, %s140
    %p142 = scmp.eq.s32.totalorder %s38, 0
    %p143 = por %p141, %p142
    %s145 = sadd.s32 %s144, 1
    %p148 = scmp.eq.s32.totalorder %s32, 1
    %p149 = scmp.ne.s32.totalorder %s144, %s146
    %p150 = scmp.eq.s32.totalorder %s32, 0
    %p151 = por %p149, %p150
    %p152 = scmp.ne.s32.totalorder %s144, %s146
    %p153 = scmp.eq.s32.totalorder %s37, 1
    %p154 = por %p152, %p153
    %p155 = scmp.ne.s32.totalorder %s146, %s147
    %p156 = scmp.eq.s32.totalorder %s37, 0
    %p157 = por %p155, %p156
    %p158 = scmp.ne.s32.totalorder %s146, %s147
    %p159 = scmp.eq.s32.totalorder %s38, 1
    %p160 = por %p158, %p159
    %p162 = scmp.ne.s32.totalorder %s147, %s161
    %p163 = scmp.eq.s32.totalorder %s38, 0
    %p164 = por %p162, %p163
    %s166 = sadd.s32 %s165, 1
    %p169 = scmp.eq.s32.totalorder %s32, 1
    %p170 = scmp.ne.s32.totalorder %s165, %s167
    %p171 = scmp.eq.s32.totalorder %s32, 0
    %p172 = por %p170, %p171
    %p173 = scmp.ne.s32.totalorder %s165, %s167
    %p174 = scmp.eq.s32.totalorder %s37, 1
    %p175 = por %p173, %p174
    %p176 = scmp.ne.s32.totalorder %s167, %s168
    %p177 = scmp.eq.s32.totalorder %s37, 0
    %p178 = por %p176, %p177
    %p179 = scmp.ne.s32.totalorder %s167, %s168
    %p180 = scmp.eq.s32.totalorder %s38, 1
    %p181 = por %p179, %p180
    %p183 = scmp.ne.s32.totalorder %s168, %s182
    %p184 = scmp.eq.s32.totalorder %s38, 0
    %p185 = por %p183, %p184
    %s187 = sadd.s32 %s186, 1
    %p190 = scmp.eq.s32.totalorder %s32, 1
    %p191 = scmp.ne.s32.totalorder %s186, %s188
    %p192 = scmp.eq.s32.totalorder %s32, 0
    %p193 = por %p191, %p192
    %p194 = scmp.ne.s32.totalorder %s186, %s188
    %p195 = scmp.eq.s32.totalorder %s37, 1
    %p196 = por %p194, %p195
    %p197 = scmp.ne.s32.totalorder %s188, %s189
    %p198 = scmp.eq.s32.totalorder %s37, 0
    %p199 = por %p197, %p198
    %p200 = scmp.ne.s32.totalorder %s188, %s189
    %p201 = scmp.eq.s32.totalorder %s38, 1
    %p202 = por %p200, %p201
    %p204 = scmp.ne.s32.totalorder %s189, %s203
    %p205 = scmp.eq.s32.totalorder %s38, 0
    %p206 = por %p204, %p205
    %s208 = sadd.s32 %s207, 1
    %p211 = scmp.eq.s32.totalorder %s32, 1
    %p212 = scmp.ne.s32.totalorder %s207, %s209
    %p213 = scmp.eq.s32.totalorder %s32, 0
    %p214 = por %p212, %p213
    %p215 = scmp.ne.s32.totalorder %s207, %s209
    %p216 = scmp.eq.s32.totalorder %s37, 1
    %p217 = por %p215, %p216
    %p218 = scmp.ne.s32.totalorder %s209, %s210
    %p219 = scmp.eq.s32.totalorder %s37, 0
    %p220 = por %p218, %p219
    %p221 = scmp.ne.s32.totalorder %s209, %s210
    %p222 = scmp.eq.s32.totalorder %s38, 1
    %p223 = por %p221, %p222
    %p225 = scmp.ne.s32.totalorder %s210, %s224
    %p226 = scmp.eq.s32.totalorder %s38, 0
    %p227 = por %p225, %p226
    %s229 = sadd.s32 %s228, 1
    %p232 = scmp.eq.s32.totalorder %s32, 1
    %p233 = scmp.ne.s32.totalorder %s228, %s230
    %p234 = scmp.eq.s32.totalorder %s32, 0
    %p235 = por %p233, %p234
    %p236 = scmp.ne.s32.totalorder %s228, %s230
    %p237 = scmp.eq.s32.totalorder %s37, 1
    %p238 = por %p236, %p237
    %p239 = scmp.ne.s32.totalorder %s230, %s231
    %p240 = scmp.eq.s32.totalorder %s37, 0
    %p241 = por %p239, %p240
    %p242 = scmp.ne.s32.totalorder %s230, %s231
    %p243 = scmp.eq.s32.totalorder %s38, 1
    %p244 = por %p242, %p243
    %p246 = scmp.ne.s32.totalorder %s231, %s245
    %p247 = scmp.eq.s32.totalorder %s38, 0
    %p248 = por %p246, %p247
    %s250 = sadd.s32 %s249, 1
    %p253 = scmp.eq.s32.totalorder %s32, 1
    %p254 = scmp.ne.s32.totalorder %s249, %s251
    %p255 = scmp.eq.s32.totalorder %s32, 0
    %p256 = por %p254, %p255
    %p257 = scmp.ne.s32.totalorder %s249, %s251
    %p258 = scmp.eq.s32.totalorder %s37, 1
    %p259 = por %p257, %p258
    %p260 = scmp.ne.s32.totalorder %s251, %s252
    %p261 = scmp.eq.s32.totalorder %s37, 0
    %p262 = por %p260, %p261
    %p263 = scmp.ne.s32.totalorder %s251, %s252
    %p264 = scmp.eq.s32.totalorder %s38, 1
    %p265 = por %p263, %p264
    %p267 = scmp.ne.s32.totalorder %s252, %s266
    %p268 = scmp.eq.s32.totalorder %s38, 0
    %p269 = por %p267, %p268
    %s271 = sadd.s32 %s270, 1
    %p274 = scmp.eq.s32.totalorder %s32, 1
    %p275 = scmp.ne.s32.totalorder %s270, %s272
    %p276 = scmp.eq.s32.totalorder %s32, 0
    %p277 = por %p275, %p276
    %p278 = scmp.ne.s32.totalorder %s270, %s272
    %p279 = scmp.eq.s32.totalorder %s37, 1
    %p280 = por %p278, %p279
    %p281 = scmp.ne.s32.totalorder %s272, %s273
    %p282 = scmp.eq.s32.totalorder %s37, 0
    %p283 = por %p281, %p282
    %p284 = scmp.ne.s32.totalorder %s272, %s273
    %p285 = scmp.eq.s32.totalorder %s38, 1
    %p286 = por %p284, %p285
    %p288 = scmp.ne.s32.totalorder %s273, %s287
    %p289 = scmp.eq.s32.totalorder %s38, 0
    %p290 = por %p288, %p289
    %s292 = sadd.s32 %s291, 1
    %p295 = scmp.eq.s32.totalorder %s32, 1
    %p296 = scmp.ne.s32.totalorder %s291, %s293
    %p297 = scmp.eq.s32.totalorder %s32, 0
    %p298 = por %p296, %p297
    %p299 = scmp.ne.s32.totalorder %s291, %s293
    %p300 = scmp.eq.s32.totalorder %s37, 1
    %p301 = por %p299, %p300
    %p302 = scmp.ne.s32.totalorder %s293, %s294
    %p303 = scmp.eq.s32.totalorder %s37, 0
    %p304 = por %p302, %p303
    %p305 = scmp.ne.s32.totalorder %s293, %s294
    %p306 = scmp.eq.s32.totalorder %s38, 1
    %p307 = por %p305, %p306
    %p309 = scmp.ne.s32.totalorder %s294, %s308
    %p310 = scmp.eq.s32.totalorder %s38, 0
    %p311 = por %p309, %p310
    %s313 = sadd.s32 %s312, 1
    %p316 = scmp.eq.s32.totalorder %s32, 1
    %p317 = scmp.ne.s32.totalorder %s312, %s314
    %p318 = scmp.eq.s32.totalorder %s32, 0
    %p319 = por %p317, %p318
    %p320 = scmp.ne.s32.totalorder %s312, %s314
    %p321 = scmp.eq.s32.totalorder %s37, 1
    %p322 = por %p320, %p321
    %p323 = scmp.ne.s32.totalorder %s314, %s315
    %p324 = scmp.eq.s32.totalorder %s37, 0
    %p325 = por %p323, %p324
    %p326 = scmp.ne.s32.totalorder %s314, %s315
    %p327 = scmp.eq.s32.totalorder %s38, 1
    %p328 = por %p326, %p327
    %p330 = scmp.ne.s32.totalorder %s315, %s329
    %p331 = scmp.eq.s32.totalorder %s38, 0
    %p332 = por %p330, %p331
    %s334 = sadd.s32 %s333, 1
    %p337 = scmp.eq.s32.totalorder %s32, 1
    %p338 = scmp.ne.s32.totalorder %s333, %s335
    %p339 = scmp.eq.s32.totalorder %s32, 0
    %p340 = por %p338, %p339
    %p341 = scmp.ne.s32.totalorder %s333, %s335
    %p342 = scmp.eq.s32.totalorder %s37, 1
    %p343 = por %p341, %p342
    %p344 = scmp.ne.s32.totalorder %s335, %s336
    %p345 = scmp.eq.s32.totalorder %s37, 0
    %p346 = por %p344, %p345
    %p347 = scmp.ne.s32.totalorder %s335, %s336
    %p348 = scmp.eq.s32.totalorder %s38, 1
    %p349 = por %p347, %p348
    %p351 = scmp.ne.s32.totalorder %s336, %s350
    %p352 = scmp.eq.s32.totalorder %s38, 0
    %p353 = por %p351, %p352
    %s355 = sadd.s32 %s354, 1
    %p358 = scmp.eq.s32.totalorder %s32, 1
    %p359 = scmp.ne.s32.totalorder %s354, %s356
    %p360 = scmp.eq.s32.totalorder %s32, 0
    %p361 = por %p359, %p360
    %p362 = scmp.ne.s32.totalorder %s354, %s356
    %p363 = scmp.eq.s32.totalorder %s37, 1
    %p364 = por %p362, %p363
    %p365 = scmp.ne.s32.totalorder %s356, %s357
    %p366 = scmp.eq.s32.totalorder %s37, 0
    %p367 = por %p365, %p366
    %p368 = scmp.ne.s32.totalorder %s356, %s357
    %p369 = scmp.eq.s32.totalorder %s38, 1
    %p370 = por %p368, %p369
    %p372 = scmp.ne.s32.totalorder %s357, %s371
    %p373 = scmp.eq.s32.totalorder %s38, 0
    %p374 = por %p372, %p373
    %s376 = sadd.s32 %s375, 1
    %p379 = scmp.eq.s32.totalorder %s32, 1
    %p380 = scmp.ne.s32.totalorder %s375, %s377
    %p381 = scmp.eq.s32.totalorder %s32, 0
    %p382 = por %p380, %p381
    %p383 = scmp.ne.s32.totalorder %s375, %s377
    %p384 = scmp.eq.s32.totalorder %s37, 1
    %p385 = por %p383, %p384
    %p386 = scmp.ne.s32.totalorder %s377, %s378
    %p387 = scmp.eq.s32.totalorder %s37, 0
    %p388 = por %p386, %p387
    %p389 = scmp.ne.s32.totalorder %s377, %s378
    %p390 = scmp.eq.s32.totalorder %s38, 1
    %p391 = por %p389, %p390
    %p393 = scmp.ne.s32.totalorder %s378, %s392
    %p394 = scmp.eq.s32.totalorder %s38, 0
    %p395 = por %p393, %p394
    %s397 = sadd.s32 %s396, 1
    %p400 = scmp.eq.s32.totalorder %s32, 1
    %p401 = scmp.ne.s32.totalorder %s396, %s398
    %p402 = scmp.eq.s32.totalorder %s32, 0
    %p403 = por %p401, %p402
    %p404 = scmp.ne.s32.totalorder %s396, %s398
    %p405 = scmp.eq.s32.totalorder %s37, 1
    %p406 = por %p404, %p405
    %p407 = scmp.ne.s32.totalorder %s398, %s399
    %p408 = scmp.eq.s32.totalorder %s37, 0
    %p409 = por %p407, %p408
    %p410 = scmp.ne.s32.totalorder %s398, %s399
    %p411 = scmp.eq.s32.totalorder %s38, 1
    %p412 = por %p410, %p411
    %p414 = scmp.ne.s32.totalorder %s399, %s413
    %p415 = scmp.eq.s32.totalorder %s38, 0
    %p416 = por %p414, %p415
    %s418 = sadd.s32 %s417, 1
    %p421 = scmp.eq.s32.totalorder %s32, 1
    %p422 = scmp.ne.s32.totalorder %s417, %s419
    %p423 = scmp.eq.s32.totalorder %s32, 0
    %p424 = por %p422, %p423
    %p425 = scmp.ne.s32.totalorder %s417, %s419
    %p426 = scmp.eq.s32.totalorder %s37, 1
    %p427 = por %p425, %p426
    %p428 = scmp.ne.s32.totalorder %s419, %s420
    %p429 = scmp.eq.s32.totalorder %s37, 0
    %p430 = por %p428, %p429
    %p431 = scmp.ne.s32.totalorder %s419, %s420
    %p432 = scmp.eq.s32.totalorder %s38, 1
    %p433 = por %p431, %p432
    %p435 = scmp.ne.s32.totalorder %s420, %s434
    %p436 = scmp.eq.s32.totalorder %s38, 0
    %p437 = por %p435, %p436
    %s439 = sadd.s32 %s438, 1
    %p442 = scmp.eq.s32.totalorder %s32, 1
    %p443 = scmp.ne.s32.totalorder %s438, %s440
    %p444 = scmp.eq.s32.totalorder %s32, 0
    %p445 = por %p443, %p444
    %p446 = scmp.ne.s32.totalorder %s438, %s440
    %p447 = scmp.eq.s32.totalorder %s37, 1
    %p448 = por %p446, %p447
    %p449 = scmp.ne.s32.totalorder %s440, %s441
    %p450 = scmp.eq.s32.totalorder %s37, 0
    %p451 = por %p449, %p450
    %p452 = scmp.ne.s32.totalorder %s440, %s441
    %p453 = scmp.eq.s32.totalorder %s38, 1
    %p454 = por %p452, %p453
    %p456 = scmp.ne.s32.totalorder %s441, %s455
    %p457 = scmp.eq.s32.totalorder %s38, 0
    %p458 = por %p456, %p457
    %s460 = sadd.s32 %s459, 1
    %p463 = scmp.eq.s32.totalorder %s32, 1
    %p464 = scmp.ne.s32.totalorder %s459, %s461
    %p465 = scmp.eq.s32.totalorder %s32, 0
    %p466 = por %p464, %p465
    %p467 = scmp.ne.s32.totalorder %s459, %s461
    %p468 = scmp.eq.s32.totalorder %s37, 1
    %p469 = por %p467, %p468
    %p470 = scmp.ne.s32.totalorder %s461, %s462
    %p471 = scmp.eq.s32.totalorder %s37, 0
    %p472 = por %p470, %p471
    %p473 = scmp.ne.s32.totalorder %s461, %s462
    %p474 = scmp.eq.s32.totalorder %s38, 1
    %p475 = por %p473, %p474
    %p477 = scmp.ne.s32.totalorder %s462, %s476
    %p478 = scmp.eq.s32.totalorder %s38, 0
    %p479 = por %p477, %p478
    %s481 = sadd.s32 %s480, 1
    %p484 = scmp.eq.s32.totalorder %s32, 1
    %p485 = scmp.ne.s32.totalorder %s480, %s482
    %p486 = scmp.eq.s32.totalorder %s32, 0
    %p487 = por %p485, %p486
    %p488 = scmp.ne.s32.totalorder %s480, %s482
    %p489 = scmp.eq.s32.totalorder %s37, 1
    %p490 = por %p488, %p489
    %p491 = scmp.ne.s32.totalorder %s482, %s483
    %p492 = scmp.eq.s32.totalorder %s37, 0
    %p493 = por %p491, %p492
    %p494 = scmp.ne.s32.totalorder %s482, %s483
    %p495 = scmp.eq.s32.totalorder %s38, 1
    %p496 = por %p494, %p495
    %p498 = scmp.ne.s32.totalorder %s483, %s497
    %p499 = scmp.eq.s32.totalorder %s38, 0
    %p500 = por %p498, %p499
    %s501 = ssub.s32 %s32, %s39
    %p502 = scmp.eq.s32.totalorder %s501, 0
    %s504 = sadd.s32 %s503, 1
    %s505 = scalar_select %p502, %s503, %s504
    %p508 = pneg %p502
    %p509 = scmp.eq.s32.totalorder %s32, 1
    %p510 = por %p508, %p509
    %p511 = scmp.ne.s32.totalorder %s503, %s506
    %p512 = scmp.eq.s32.totalorder %s32, 0
    %p513 = por %p511, %p512
    %p514 = scmp.ne.s32.totalorder %s503, %s506
    %p515 = scmp.eq.s32.totalorder %s37, 1
    %p516 = por %p514, %p515
    %p517 = scmp.ne.s32.totalorder %s506, %s507
    %p518 = scmp.eq.s32.totalorder %s37, 0
    %p519 = por %p517, %p518
    %p520 = scmp.ne.s32.totalorder %s506, %s507
    %p521 = scmp.eq.s32.totalorder %s38, 1
    %p522 = por %p520, %p521
    %p524 = scmp.ne.s32.totalorder %s507, %s523
    %p525 = scmp.eq.s32.totalorder %s38, 0
    %p526 = por %p524, %p525
    %s527 = ssub.s32 %s32, %s39
    %p528 = scmp.eq.s32.totalorder %s527, 0
    %s530 = sadd.s32 %s529, 1
    %s531 = scalar_select %p528, %s529, %s530
    %p534 = pneg %p528
    %p535 = scmp.eq.s32.totalorder %s32, 1
    %p536 = por %p534, %p535
    %p537 = scmp.ne.s32.totalorder %s529, %s532
    %p538 = scmp.eq.s32.totalorder %s32, 0
    %p539 = por %p537, %p538
    %p540 = scmp.ne.s32.totalorder %s529, %s532
    %p541 = scmp.eq.s32.totalorder %s37, 1
    %p542 = por %p540, %p541
    %p543 = scmp.ne.s32.totalorder %s532, %s533
    %p544 = scmp.eq.s32.totalorder %s37, 0
    %p545 = por %p543, %p544
    %p546 = scmp.ne.s32.totalorder %s532, %s533
    %p547 = scmp.eq.s32.totalorder %s38, 1
    %p548 = por %p546, %p547
    %p550 = scmp.ne.s32.totalorder %s533, %s549
    %p551 = scmp.eq.s32.totalorder %s38, 0
    %p552 = por %p550, %p551
    %s553 = ssub.s32 %s32, %s39
    %p554 = scmp.eq.s32.totalorder %s553, 0
    %s556 = sadd.s32 %s555, 1
    %s557 = scalar_select %p554, %s555, %s556
    %p560 = pneg %p554
    %p561 = scmp.eq.s32.totalorder %s32, 1
    %p562 = por %p560, %p561
    %p563 = scmp.ne.s32.totalorder %s555, %s558
    %p564 = scmp.eq.s32.totalorder %s32, 0
    %p565 = por %p563, %p564
    %p566 = scmp.ne.s32.totalorder %s555, %s558
    %p567 = scmp.eq.s32.totalorder %s37, 1
    %p568 = por %p566, %p567
    %p569 = scmp.ne.s32.totalorder %s558, %s559
    %p570 = scmp.eq.s32.totalorder %s37, 0
    %p571 = por %p569, %p570
    %p572 = scmp.ne.s32.totalorder %s558, %s559
    %p573 = scmp.eq.s32.totalorder %s38, 1
    %p574 = por %p572, %p573
    %p576 = scmp.ne.s32.totalorder %s559, %s575
    %p577 = scmp.eq.s32.totalorder %s38, 0
    %p578 = por %p576, %p577
    %p579 = scmp.le.s32.totalorder 1, %s32
    %p580 = scmp.lt.s32.totalorder %s32, 3
    %p581 = pnand %p579, %p580
    %p582 = pneg %p581
    // Predicated region
    $region9: #{fourier_convolution_block.1} parent=5 // pred_check
      _
    $region10: #{fourier_convolution_block.1} parent=5 // pred_check_branch
      %584 = sbr.rel (%p581) target = $region12
    $region11: #{fourier_convolution_block.1} parent=5 // pred_region
      %s585 = ssub.s32 %s32, 1
      // Predicated region
      $region13: #{fourier_convolution_block.1} parent=11 // pred_check
        %p586 = pneg %p157
      $region14: #{fourier_convolution_block.1} parent=11 // pred_check_branch
        %588 = sbr.rel (%p586) target = $region16
      $region15: #{fourier_convolution_block.1} parent=11 // pred_region
        _
      $region16: #{fourier_convolution_block.1} parent=11 // pred_fallthru
        _
      // Predicated region
      $region17: #{fourier_convolution_block.1} parent=11 // pred_check
        %p589 = pneg %p178
      $region18: #{fourier_convolution_block.1} parent=11 // pred_check_branch
        %591 = sbr.rel (%p589) target = $region20
      $region19: #{fourier_convolution_block.1} parent=11 // pred_region
        _
      $region20: #{fourier_convolution_block.1} parent=11 // pred_fallthru
        _
      // Predicated region
      $region21: #{fourier_convolution_block.1} parent=11 // pred_check
        %p592 = pneg %p199
      $region22: #{fourier_convolution_block.1} parent=11 // pred_check_branch
        %594 = sbr.rel (%p592) target = $region24
      $region23: #{fourier_convolution_block.1} parent=11 // pred_region
        _
      $region24: #{fourier_convolution_block.1} parent=11 // pred_fallthru
        _
      // Predicated region
      $region25: #{fourier_convolution_block.1} parent=11 // pred_check
        %p595 = pneg %p220
      $region26: #{fourier_convolution_block.1} parent=11 // pred_check_branch
        %597 = sbr.rel (%p595) target = $region28
      $region27: #{fourier_convolution_block.1} parent=11 // pred_region
        _
      $region28: #{fourier_convolution_block.1} parent=11 // pred_fallthru
        _
      // Predicated region
      $region29: #{fourier_convolution_block.1} parent=11 // pred_check
        %p598 = pneg %p241
      $region30: #{fourier_convolution_block.1} parent=11 // pred_check_branch
        %600 = sbr.rel (%p598) target = $region32
      $region31: #{fourier_convolution_block.1} parent=11 // pred_region
        _
      $region32: #{fourier_convolution_block.1} parent=11 // pred_fallthru
        _
      // Predicated region
      $region33: #{fourier_convolution_block.1} parent=11 // pred_check
        %p601 = pneg %p262
      $region34: #{fourier_convolution_block.1} parent=11 // pred_check_branch
        %603 = sbr.rel (%p601) target = $region36
      $region35: #{fourier_convolution_block.1} parent=11 // pred_region
        _
      $region36: #{fourier_convolution_block.1} parent=11 // pred_fallthru
        _
      // Predicated region
      $region37: #{fourier_convolution_block.1} parent=11 // pred_check
        %p604 = pneg %p283
      $region38: #{fourier_convolution_block.1} parent=11 // pred_check_branch
        %606 = sbr.rel (%p604) target = $region40
      $region39: #{fourier_convolution_block.1} parent=11 // pred_region
        _
      $region40: #{fourier_convolution_block.1} parent=11 // pred_fallthru
        _
      // Predicated region
      $region41: #{fourier_convolution_block.1} parent=11 // pred_check
        %p607 = pneg %p304
      $region42: #{fourier_convolution_block.1} parent=11 // pred_check_branch
        %609 = sbr.rel (%p607) target = $region44
      $region43: #{fourier_convolution_block.1} parent=11 // pred_region
        _
      $region44: #{fourier_convolution_block.1} parent=11 // pred_fallthru
        _
      // Predicated region
      $region45: #{fourier_convolution_block.1} parent=11 // pred_check
        %p610 = pneg %p325
      $region46: #{fourier_convolution_block.1} parent=11 // pred_check_branch
        %612 = sbr.rel (%p610) target = $region48
      $region47: #{fourier_convolution_block.1} parent=11 // pred_region
        _
      $region48: #{fourier_convolution_block.1} parent=11 // pred_fallthru
        _
      // Predicated region
      $region49: #{fourier_convolution_block.1} parent=11 // pred_check
        %p613 = pneg %p346
      $region50: #{fourier_convolution_block.1} parent=11 // pred_check_branch
        %615 = sbr.rel (%p613) target = $region52
      $region51: #{fourier_convolution_block.1} parent=11 // pred_region
        _
      $region52: #{fourier_convolution_block.1} parent=11 // pred_fallthru
        _
      // Predicated region
      $region53: #{fourier_convolution_block.1} parent=11 // pred_check
        %p616 = pneg %p367
      $region54: #{fourier_convolution_block.1} parent=11 // pred_check_branch
        %618 = sbr.rel (%p616) target = $region56
      $region55: #{fourier_convolution_block.1} parent=11 // pred_region
        _
      $region56: #{fourier_convolution_block.1} parent=11 // pred_fallthru
        _
      // Predicated region
      $region57: #{fourier_convolution_block.1} parent=11 // pred_check
        %p619 = pneg %p388
      $region58: #{fourier_convolution_block.1} parent=11 // pred_check_branch
        %621 = sbr.rel (%p619) target = $region60
      $region59: #{fourier_convolution_block.1} parent=11 // pred_region
        _
      $region60: #{fourier_convolution_block.1} parent=11 // pred_fallthru
        _
      // Predicated region
      $region61: #{fourier_convolution_block.1} parent=11 // pred_check
        %p622 = pneg %p409
      $region62: #{fourier_convolution_block.1} parent=11 // pred_check_branch
        %624 = sbr.rel (%p622) target = $region64
      $region63: #{fourier_convolution_block.1} parent=11 // pred_region
        _
      $region64: #{fourier_convolution_block.1} parent=11 // pred_fallthru
        _
      // Predicated region
      $region65: #{fourier_convolution_block.1} parent=11 // pred_check
        %p625 = pneg %p430
      $region66: #{fourier_convolution_block.1} parent=11 // pred_check_branch
        %627 = sbr.rel (%p625) target = $region68
      $region67: #{fourier_convolution_block.1} parent=11 // pred_region
        _
      $region68: #{fourier_convolution_block.1} parent=11 // pred_fallthru
        _
      // Predicated region
      $region69: #{fourier_convolution_block.1} parent=11 // pred_check
        %p628 = pneg %p451
      $region70: #{fourier_convolution_block.1} parent=11 // pred_check_branch
        %630 = sbr.rel (%p628) target = $region72
      $region71: #{fourier_convolution_block.1} parent=11 // pred_region
        _
      $region72: #{fourier_convolution_block.1} parent=11 // pred_fallthru
        _
      // Predicated region
      $region73: #{fourier_convolution_block.1} parent=11 // pred_check
        %p631 = pneg %p472
      $region74: #{fourier_convolution_block.1} parent=11 // pred_check_branch
        %633 = sbr.rel (%p631) target = $region76
      $region75: #{fourier_convolution_block.1} parent=11 // pred_region
        _
      $region76: #{fourier_convolution_block.1} parent=11 // pred_fallthru
        _
      // Predicated region
      $region77: #{fourier_convolution_block.1} parent=11 // pred_check
        %p634 = pneg %p493
      $region78: #{fourier_convolution_block.1} parent=11 // pred_check_branch
        %636 = sbr.rel (%p634) target = $region80
      $region79: #{fourier_convolution_block.1} parent=11 // pred_region
        _
      $region80: #{fourier_convolution_block.1} parent=11 // pred_fallthru
        _
    $region12: #{fourier_convolution_block.1} parent=5 // pred_fallthru
      _
    %p637 = scmp.lt.s32.totalorder %s32, 2
    // Predicated region
    $region81: #{fourier_convolution_block.1} parent=5 // pred_check
      %p638 = pneg %p637
    $region82: #{fourier_convolution_block.1} parent=5 // pred_check_branch
      %640 = sbr.rel (%p638) target = $region84
    $region83: #{fourier_convolution_block.1} parent=5 // pred_region
      // Predicated region
      $region85: #{fourier_convolution_block.1} parent=83 // pred_check
        %p641 = pneg %p52
      $region86: #{fourier_convolution_block.1} parent=83 // pred_check_branch
        %643 = sbr.rel (%p641) target = $region88
      $region87: #{fourier_convolution_block.1} parent=83 // pred_region
        %p644 = scmp.lt.s32.totalorder %s32, 1
        %s645 = scalar_select %p644, %s32, 1
        %s646 = smul.addr %s645, 2
        %s647 = smul.addr %s646, 4
        %s648 = scalar_lea.vmem %s0, %s647
      $region88: #{fourier_convolution_block.1} parent=83 // pred_fallthru
        _
      // Predicated region
      $region89: #{fourier_convolution_block.1} parent=83 // pred_check
        %p649 = pneg %p78
      $region90: #{fourier_convolution_block.1} parent=83 // pred_check_branch
        %651 = sbr.rel (%p649) target = $region92
      $region91: #{fourier_convolution_block.1} parent=83 // pred_region
        %p652 = scmp.lt.s32.totalorder %s32, 1
        %s653 = scalar_select %p652, %s32, 1
        %s654 = smul.addr %s653, 2
        %s655 = smul.addr %s654, 4
        %s656 = scalar_lea.vmem %s1, %s655
      $region92: #{fourier_convolution_block.1} parent=83 // pred_fallthru
        _
      // Predicated region
      $region93: #{fourier_convolution_block.1} parent=83 // pred_check
        %p657 = pneg %p104
      $region94: #{fourier_convolution_block.1} parent=83 // pred_check_branch
        %659 = sbr.rel (%p657) target = $region96
      $region95: #{fourier_convolution_block.1} parent=83 // pred_region
        %p660 = scmp.lt.s32.totalorder %s32, 1
        %s661 = scalar_select %p660, %s32, 1
        %s662 = smul.addr %s661, 2
        %s663 = smul.addr %s662, 4
        %s664 = scalar_lea.vmem %s2, %s663
      $region96: #{fourier_convolution_block.1} parent=83 // pred_fallthru
        _
      // Predicated region
      $region97: #{fourier_convolution_block.1} parent=83 // pred_check
        %p665 = pneg %p130
      $region98: #{fourier_convolution_block.1} parent=83 // pred_check_branch
        %667 = sbr.rel (%p665) target = $region100
      $region99: #{fourier_convolution_block.1} parent=83 // pred_region
        %p668 = scmp.lt.s32.totalorder %s32, 1
        %s669 = scalar_select %p668, %s32, 1
        %s670 = smul.addr %s669, 2
        %s671 = smul.addr %s670, 4
        %s672 = scalar_lea.vmem %s3, %s671
      $region100: #{fourier_convolution_block.1} parent=83 // pred_fallthru
        _
    $region84: #{fourier_convolution_block.1} parent=5 // pred_fallthru
      _
    %p673 = scmp.le.s32.totalorder 1, %s32
    %p674 = scmp.lt.s32.totalorder %s32, 3
    %p675 = pnand %p673, %p674
    %p676 = pneg %p675
    // Predicated region
    $region101: #{fourier_convolution_block.1} parent=5 // pred_check
      _
    $region102: #{fourier_convolution_block.1} parent=5 // pred_check_branch
      %678 = sbr.rel (%p675) target = $region104
    $region103: #{fourier_convolution_block.1} parent=5 // pred_region
      %s679 = ssub.s32 %s32, 1
      %p680 = scmp.lt.s32.totalorder %s37, 1
      %s681 = scalar_select %p680, %s37, 1
      %s682 = smul.addr %s681, 2
      %s683 = smul.addr %s682, 4
      %s684 = scalar_lea.vmem %s0, %s683
      %p685 = pneg %p58
      %p686 = pneg %p55
      %p687 = scmp.lt.s32.totalorder %s37, 1
      %s688 = scalar_select %p687, %s37, 1
      %s689 = smul.addr %s688, 2
      %s690 = smul.addr %s689, 4
      %s691 = scalar_lea.vmem %s1, %s690
      %p692 = pneg %p84
      %p693 = pneg %p81
      %p694 = scmp.lt.s32.totalorder %s37, 1
      %s695 = scalar_select %p694, %s37, 1
      %s696 = smul.addr %s695, 2
      %s697 = smul.addr %s696, 4
      %s698 = scalar_lea.vmem %s2, %s697
      %p699 = pneg %p110
      %p700 = pneg %p107
      %p701 = scmp.lt.s32.totalorder %s37, 1
      %s702 = scalar_select %p701, %s37, 1
      %s703 = smul.addr %s702, 2
      %s704 = smul.addr %s703, 4
      %s705 = scalar_lea.vmem %s3, %s704
      %p706 = pneg %p136
      %p707 = pneg %p133
      %p708 = pneg %p157
      %p709 = pneg %p154
      %p710 = pneg %p178
      %p711 = pneg %p175
      %p712 = pneg %p199
      %p713 = pneg %p196
      %p714 = pneg %p220
      %p715 = pneg %p217
      %p716 = pneg %p241
      %p717 = pneg %p238
      %p718 = pneg %p262
      %p719 = pneg %p259
      %p720 = pneg %p283
      %p721 = pneg %p280
      %p722 = pneg %p304
      %p723 = pneg %p301
      %p724 = pneg %p325
      %p725 = pneg %p322
      %p726 = pneg %p346
      %p727 = pneg %p343
      %p728 = pneg %p367
      %p729 = pneg %p364
      %p730 = pneg %p388
      %p731 = pneg %p385
      %p732 = pneg %p409
      %p733 = pneg %p406
      %p734 = pneg %p430
      %p735 = pneg %p427
      %p736 = pneg %p451
      %p737 = pneg %p448
      %p738 = pneg %p472
      %p739 = pneg %p469
      %p740 = pneg %p493
      %p741 = pneg %p490
      %p742 = pneg %p519
      %p743 = pneg %p516
      %p744 = scmp.lt.s32.totalorder %s37, 1
      %s745 = scalar_select %p744, %s37, 1
      %s746 = smul.addr %s745, 2
      %s747 = smul.addr %s746, 4
      %s748 = scalar_lea.vmem %s21, %s747
      %p749 = pneg %p545
      %p750 = pneg %p542
      %p751 = scmp.lt.s32.totalorder %s37, 1
      %s752 = scalar_select %p751, %s37, 1
      %s753 = smul.addr %s752, 2
      %s754 = smul.addr %s753, 4
      %s755 = scalar_lea.vmem %s22, %s754
      %p756 = pneg %p571
      %p757 = pneg %p568
      %p758 = scmp.lt.s32.totalorder %s37, 1
      %s759 = scalar_select %p758, %s37, 1
      %s760 = smul.addr %s759, 2
      %s761 = smul.addr %s760, 8
      %s762 = scalar_lea.vmem %s23, %s761
      %p763 = scmp.lt.s32.totalorder %s37, 1
      %s764 = scalar_select %p763, %s37, 1
      %s765 = smul.addr %s764, 2
      %s766 = smul.addr %s765, 4
      %s767 = scalar_lea.vmem %s0, %s766
      %p768 = scmp.lt.s32.totalorder %s37, 1
      %s769 = scalar_select %p768, %s37, 1
      %s770 = smul.addr %s769, 2
      %s771 = smul.addr %s770, 4
      %s772 = scalar_lea.vmem %s1, %s771
      %p773 = scmp.lt.s32.totalorder %s37, 1
      %s774 = scalar_select %p773, %s37, 1
      %s775 = smul.addr %s774, 2
      %s776 = smul.addr %s775, 4
      %s777 = scalar_lea.vmem %s2, %s776
      %p778 = scmp.lt.s32.totalorder %s37, 1
      %s779 = scalar_select %p778, %s37, 1
      %s780 = smul.addr %s779, 2
      %s781 = smul.addr %s780, 4
      %s782 = scalar_lea.vmem %s3, %s781
      %p783 = scmp.lt.s32.totalorder %s37, 1
      %s784 = scalar_select %p783, %s37, 1
      %s785 = smul.addr %s784, 2
      %s786 = smul.addr %s785, 4
      %s787 = scalar_lea.vmem %s21, %s786
      %p788 = scmp.lt.s32.totalorder %s37, 1
      %s789 = scalar_select %p788, %s37, 1
      %s790 = smul.addr %s789, 2
      %s791 = smul.addr %s790, 4
      %s792 = scalar_lea.vmem %s22, %s791
      %p793 = scmp.lt.s32.totalorder %s37, 1
      %s794 = scalar_select %p793, %s37, 1
      %s795 = smul.addr %s794, 2
      %s796 = smul.addr %s795, 8
      %s797 = scalar_lea.vmem %s23, %s796
      %798 = vst [vmem:[#allocation2] sm:$0xff] 0.0
      %799 = vst [vmem:[#allocation2 + $0x8] sm:$0xff] 0.0
      %800 = vst [vmem:[#allocation3] sm:$0xff] 0.0
      %vm801 = vcmask 1043456
      %vm802 = vcmask 130052
      %vm803 = vmor %vm802, %vm801
      %804 = vst.msk [vmem:[#allocation3 + $0x8] sm:$0xff] %vm803, 0.0
      %v805 = vld [vmem:[%s767] sm:$0xff]
      %v806 = vld [vmem:[%s772] sm:$0xff]
      %v807 = vld [vmem:[%s4] ss:$2 sm:$0x3]
      %s808 = scalar_lea.vmem %s4, 1
      %v809 = vld [vmem:[%s808] ss:$2 sm:$0x3]
      %v810 = vld [vmem:[%s5] ss:$2 sm:$0x3]
      %s811 = scalar_lea.vmem %s5, 1
      %v812 = vld [vmem:[%s811] ss:$2 sm:$0x3]
      %813 = vst [vmem:[#allocation2 + $0x4] sm:$0xff] %v806
      %v814 = vld [vmem:[#allocation2] sm:$0xff]
      %v815 = vld [vmem:[#allocation2 + $0x8] sm:$0xf]
      %v817 = vlaneseq
      %v818 = vshrl.u32 %v817, 7
      %v819 = vsub.s32 0, %v818
      %v820 = vrot.slane %v807, %v819
      %v821 = vlaneseq
      %v822 = vshrl.u32 %v821, 7
      %v823 = vsub.s32 1, %v822
      %v824 = vrot.slane %v807, %v823
      %v825 = vcombine.low %v820, %v824
      %826 = vrot.lane.b32.xlu0 %v825, 111
      %v827 = vpop.permute.xlu0 %826
      %v828 = vrot.slane %v827, 4
      %vm829 = vcmask 908288
      %v830 = vsel %vm829, %v828, %v827
      %v833 = vmul.f32 %v814, %v830
      %v834 = vmul.f32 %v815, %v828
      %v835 = vld [vmem:[%s6] sm:$0xf]
      %s836 = scalar_lea.vmem %s6, 4
      %v837 = vld [vmem:[%s836] sm:$0xf]
      %v840 = vcombine.high %v814, %v814
      %841 = vrot.lane.b32.xlu0 %v814, 16
      %v842 = vpop.permute.xlu0 %841
      %843 = vrot.lane.b32.xlu0 %v840, 16
      %v844 = vpop.permute.xlu0 %843
      %845 = vrot.lane.b32.xlu0 %v815, 16
      %v846 = vpop.permute.xlu0 %845
      %vm847 = vcmask 130048
      %v848 = vsel %vm847, %v842, %v844
      %v849 = vsel %vm847, %v844, %v846
      %vm850 = vcmask 31744
      %v852 = vsel %vm850, %v837, 0
      %v854 = vsel %vm801, %v848, 0
      %v856 = vsel %vm801, %v849, 0
      %858 = vmatprep.subr.mxu0 %v856
      %859 = vmatpush1.msra.mxu0 %v854
      %860 = vmatprep.subr.mxu0 0.0
      %861 = vmatpush1.msra.mxu0 0.0
      %862 = vmatprep.subr.mxu0 0.0
      %863 = vmatpush1.msra.mxu0 0.0
      %864 = vmatprep.subr.mxu0 0.0
      %865 = vmatpush1.msra.mxu0 0.0
      %866 = vmatprep.subr.mxu0 0.0
      %867 = vmatpush1.msra.mxu0 0.0
      %868 = vmatprep.subr.mxu0 0.0
      %869 = vmatpush1.msra.mxu0 0.0
      %870 = vmatprep.subr.mxu0 0.0
      %871 = vmatpush1.msra.mxu0 0.0
      %872 = vmatprep.subr.mxu0 0.0
      %873 = vmatpush1.msra.mxu0 0.0
      %874 = vmatprep.subr.mxu0 0.0
      %875 = vmatpush1.msra.mxu0 0.0
      %876 = vmatprep.subr.mxu0 0.0
      %877 = vmatpush1.msra.mxu0 0.0
      %878 = vmatprep.subr.mxu0 0.0
      %879 = vmatpush1.msra.mxu0 0.0
      %880 = vmatprep.subr.mxu0 0.0
      %881 = vmatpush1.msra.mxu0 0.0
      %882 = vmatprep.subr.mxu0 0.0
      %883 = vmatpush1.msra.mxu0 0.0
      %884 = vmatprep.subr.mxu0 0.0
      %885 = vmatpush1.msra.mxu0 0.0
      %886 = vmatprep.subr.mxu0 0.0
      %887 = vmatpush1.msra.mxu0 0.0
      %888 = vmatprep.subr.mxu0 0.0
      %889 = vmatpush1.msra.mxu0 0.0
      %890 = vmatprep.subr.mxu0 0.0
      %891 = vmatpush1.msra.mxu0 0.0
      %892 = vmatprep.subr.mxu0 0.0
      %893 = vmatpush1.msra.mxu0 0.0
      %894 = vmatprep.subr.mxu0 0.0
      %895 = vmatpush1.msra.mxu0 0.0
      %896 = vmatprep.subr.mxu0 0.0
      %897 = vmatpush1.msra.mxu0 0.0
      %898 = vmatprep.subr.mxu0 0.0
      %899 = vmatpush1.msra.mxu0 0.0
      %900 = vmatprep.subr.mxu0 0.0
      %901 = vmatpush1.msra.mxu0 0.0
      %902 = vmatprep.subr.mxu0 0.0
      %903 = vmatpush1.msra.mxu0 0.0
      %904 = vmatprep.subr.mxu0 0.0
      %905 = vmatpush1.msra.mxu0 0.0
      %906 = vmatprep.subr.mxu0 0.0
      %907 = vmatpush1.msra.mxu0 0.0
      %908 = vmatprep.subr.mxu0 0.0
      %909 = vmatpush1.msra.mxu0 0.0
      %910 = vmatprep.subr.mxu0 0.0
      %911 = vmatpush1.msra.mxu0 0.0
      %912 = vmatprep.subr.mxu0 0.0
      %913 = vmatpush1.msra.mxu0 0.0
      %914 = vmatprep.subr.mxu0 0.0
      %915 = vmatpush1.msra.mxu0 0.0
      %916 = vmatprep.subr.mxu0 0.0
      %917 = vmatpush1.msra.mxu0 0.0
      %918 = vmatprep.subr.mxu0 0.0
      %919 = vmatpush1.msra.mxu0 0.0
      %920 = vmatprep.subr.mxu0 0.0
      %921 = vmatpush1.msra.mxu0 0.0
      %922 = vmatprep.mubr.f32.mxu0 0.0
      %923 = vmatmul.mubr.f32.gmra.mrb[0].mxu0 %v852
      %v924 = vpop.f32.mrb[0].mxu0
      %v925 = vadd.f32 0.0, %v924
      %v926 = vpop.f32.mrb[0].mxu0
      %v927 = vadd.f32 0.0, %v926
      %928 = vdwg.mxu0
      %v931 = vcombine.high %v833, %v833
      %932 = vrot.lane.b32.xlu0 %v833, 17
      %v933 = vpop.permute.xlu0 %932
      %934 = vrot.lane.b32.xlu0 %v931, 17
      %v935 = vpop.permute.xlu0 %934
      %936 = vrot.lane.b32.xlu0 %v834, 17
      %v937 = vpop.permute.xlu0 %936
      %vm938 = vcmask 138240
      %v939 = vsel %vm938, %v933, %v935
      %v940 = vsel %vm938, %v935, %v937
      %v942 = vsel %vm850, %v835, 0
      %v944 = vsel %vm801, %v939, 0
      %v946 = vsel %vm801, %v940, 0
      %948 = vmatprep.subr.mxu0 %v946
      %949 = vmatpush1.msra.mxu0 %v944
      %950 = vmatprep.subr.mxu0 0.0
      %951 = vmatpush1.msra.mxu0 0.0
      %952 = vmatprep.subr.mxu0 0.0
      %953 = vmatpush1.msra.mxu0 0.0
      %954 = vmatprep.subr.mxu0 0.0
      %955 = vmatpush1.msra.mxu0 0.0
      %956 = vmatprep.subr.mxu0 0.0
      %957 = vmatpush1.msra.mxu0 0.0
      %958 = vmatprep.subr.mxu0 0.0
      %959 = vmatpush1.msra.mxu0 0.0
      %960 = vmatprep.subr.mxu0 0.0
      %961 = vmatpush1.msra.mxu0 0.0
      %962 = vmatprep.subr.mxu0 0.0
      %963 = vmatpush1.msra.mxu0 0.0
      %964 = vmatprep.subr.mxu0 0.0
      %965 = vmatpush1.msra.mxu0 0.0
      %966 = vmatprep.subr.mxu0 0.0
      %967 = vmatpush1.msra.mxu0 0.0
      %968 = vmatprep.subr.mxu0 0.0
      %969 = vmatpush1.msra.mxu0 0.0
      %970 = vmatprep.subr.mxu0 0.0
      %971 = vmatpush1.msra.mxu0 0.0
      %972 = vmatprep.subr.mxu0 0.0
      %973 = vmatpush1.msra.mxu0 0.0
      %974 = vmatprep.subr.mxu0 0.0
      %975 = vmatpush1.msra.mxu0 0.0
      %976 = vmatprep.subr.mxu0 0.0
      %977 = vmatpush1.msra.mxu0 0.0
      %978 = vmatprep.subr.mxu0 0.0
      %979 = vmatpush1.msra.mxu0 0.0
      %980 = vmatprep.subr.mxu0 0.0
      %981 = vmatpush1.msra.mxu0 0.0
      %982 = vmatprep.subr.mxu0 0.0
      %983 = vmatpush1.msra.mxu0 0.0
      %984 = vmatprep.subr.mxu0 0.0
      %985 = vmatpush1.msra.mxu0 0.0
      %986 = vmatprep.subr.mxu0 0.0
      %987 = vmatpush1.msra.mxu0 0.0
      %988 = vmatprep.subr.mxu0 0.0
      %989 = vmatpush1.msra.mxu0 0.0
      %990 = vmatprep.subr.mxu0 0.0
      %991 = vmatpush1.msra.mxu0 0.0
      %992 = vmatprep.subr.mxu0 0.0
      %993 = vmatpush1.msra.mxu0 0.0
      %994 = vmatprep.subr.mxu0 0.0
      %995 = vmatpush1.msra.mxu0 0.0
      %996 = vmatprep.subr.mxu0 0.0
      %997 = vmatpush1.msra.mxu0 0.0
      %998 = vmatprep.subr.mxu0 0.0
      %999 = vmatpush1.msra.mxu0 0.0
      %1000 = vmatprep.subr.mxu0 0.0
      %1001 = vmatpush1.msra.mxu0 0.0
      %1002 = vmatprep.subr.mxu0 0.0
      %1003 = vmatpush1.msra.mxu0 0.0
      %1004 = vmatprep.subr.mxu0 0.0
      %1005 = vmatpush1.msra.mxu0 0.0
      %1006 = vmatprep.subr.mxu0 0.0
      %1007 = vmatpush1.msra.mxu0 0.0
      %1008 = vmatprep.subr.mxu0 0.0
      %1009 = vmatpush1.msra.mxu0 0.0
      %1010 = vmatprep.subr.mxu0 0.0
      %1011 = vmatpush1.msra.mxu0 0.0
      %1012 = vmatprep.mubr.f32.mxu0 0.0
      %1013 = vmatmul.mubr.f32.gmra.mrb[0].mxu0 %v942
      %v1014 = vpop.f32.mrb[0].mxu0
      %v1015 = vadd.f32 %v925, %v1014
      %v1016 = vpop.f32.mrb[0].mxu0
      %v1017 = vadd.f32 %v927, %v1016
      %1018 = vdwg.mxu0
      %v1019 = vld [vmem:[#allocation2] sm:$0xff]
      %v1020 = vld [vmem:[#allocation2 + $0x8] sm:$0xf]
      %v1022 = vlaneseq
      %v1023 = vshrl.u32 %v1022, 7
      %v1024 = vsub.s32 0, %v1023
      %v1025 = vrot.slane %v809, %v1024
      %v1026 = vlaneseq
      %v1027 = vshrl.u32 %v1026, 7
      %v1028 = vsub.s32 1, %v1027
      %v1029 = vrot.slane %v809, %v1028
      %v1030 = vcombine.low %v1025, %v1029
      %1031 = vrot.lane.b32.xlu0 %v1030, 113
      %v1032 = vpop.permute.xlu0 %1031
      %v1033 = vrot.slane %v1032, 4
      %vm1034 = vcmask 924672
      %v1035 = vsel %vm1034, %v1033, %v1032
      %v1038 = vmul.f32 %v1019, %v1035
      %v1039 = vmul.f32 %v1020, %v1033
      %s1040 = scalar_lea.vmem %s6, 8
      %v1041 = vld [vmem:[%s1040] sm:$0xf]
      %v1044 = vcombine.high %v1038, %v1038
      %1045 = vrot.lane.b32.xlu0 %v1038, 15
      %v1046 = vpop.permute.xlu0 %1045
      %1047 = vrot.lane.b32.xlu0 %v1044, 15
      %v1048 = vpop.permute.xlu0 %1047
      %1049 = vrot.lane.b32.xlu0 %v1039, 15
      %v1050 = vpop.permute.xlu0 %1049
      %vm1051 = vcmask 121856
      %v1052 = vsel %vm1051, %v1046, %v1048
      %v1053 = vsel %vm1051, %v1048, %v1050
      %v1055 = vsel %vm850, %v1041, 0
      %v1057 = vsel %vm801, %v1052, 0
      %v1059 = vsel %vm801, %v1053, 0
      %1061 = vmatprep.subr.mxu0 %v1059
      %1062 = vmatpush1.msra.mxu0 %v1057
      %1063 = vmatprep.subr.mxu0 0.0
      %1064 = vmatpush1.msra.mxu0 0.0
      %1065 = vmatprep.subr.mxu0 0.0
      %1066 = vmatpush1.msra.mxu0 0.0
      %1067 = vmatprep.subr.mxu0 0.0
      %1068 = vmatpush1.msra.mxu0 0.0
      %1069 = vmatprep.subr.mxu0 0.0
      %1070 = vmatpush1.msra.mxu0 0.0
      %1071 = vmatprep.subr.mxu0 0.0
      %1072 = vmatpush1.msra.mxu0 0.0
      %1073 = vmatprep.subr.mxu0 0.0
      %1074 = vmatpush1.msra.mxu0 0.0
      %1075 = vmatprep.subr.mxu0 0.0
      %1076 = vmatpush1.msra.mxu0 0.0
      %1077 = vmatprep.subr.mxu0 0.0
      %1078 = vmatpush1.msra.mxu0 0.0
      %1079 = vmatprep.subr.mxu0 0.0
      %1080 = vmatpush1.msra.mxu0 0.0
      %1081 = vmatprep.subr.mxu0 0.0
      %1082 = vmatpush1.msra.mxu0 0.0
      %1083 = vmatprep.subr.mxu0 0.0
      %1084 = vmatpush1.msra.mxu0 0.0
      %1085 = vmatprep.subr.mxu0 0.0
      %1086 = vmatpush1.msra.mxu0 0.0
      %1087 = vmatprep.subr.mxu0 0.0
      %1088 = vmatpush1.msra.mxu0 0.0
      %1089 = vmatprep.subr.mxu0 0.0
      %1090 = vmatpush1.msra.mxu0 0.0
      %1091 = vmatprep.subr.mxu0 0.0
      %1092 = vmatpush1.msra.mxu0 0.0
      %1093 = vmatprep.subr.mxu0 0.0
      %1094 = vmatpush1.msra.mxu0 0.0
      %1095 = vmatprep.subr.mxu0 0.0
      %1096 = vmatpush1.msra.mxu0 0.0
      %1097 = vmatprep.subr.mxu0 0.0
      %1098 = vmatpush1.msra.mxu0 0.0
      %1099 = vmatprep.subr.mxu0 0.0
      %1100 = vmatpush1.msra.mxu0 0.0
      %1101 = vmatprep.subr.mxu0 0.0
      %1102 = vmatpush1.msra.mxu0 0.0
      %1103 = vmatprep.subr.mxu0 0.0
      %1104 = vmatpush1.msra.mxu0 0.0
      %1105 = vmatprep.subr.mxu0 0.0
      %1106 = vmatpush1.msra.mxu0 0.0
      %1107 = vmatprep.subr.mxu0 0.0
      %1108 = vmatpush1.msra.mxu0 0.0
      %1109 = vmatprep.subr.mxu0 0.0
      %1110 = vmatpush1.msra.mxu0 0.0
      %1111 = vmatprep.subr.mxu0 0.0
      %1112 = vmatpush1.msra.mxu0 0.0
      %1113 = vmatprep.subr.mxu0 0.0
      %1114 = vmatpush1.msra.mxu0 0.0
      %1115 = vmatprep.subr.mxu0 0.0
      %1116 = vmatpush1.msra.mxu0 0.0
      %1117 = vmatprep.subr.mxu0 0.0
      %1118 = vmatpush1.msra.mxu0 0.0
      %1119 = vmatprep.subr.mxu0 0.0
      %1120 = vmatpush1.msra.mxu0 0.0
      %1121 = vmatprep.subr.mxu0 0.0
      %1122 = vmatpush1.msra.mxu0 0.0
      %1123 = vmatprep.subr.mxu0 0.0
      %1124 = vmatpush1.msra.mxu0 0.0
      %1125 = vmatprep.mubr.f32.mxu0 0.0
      %1126 = vmatmul.mubr.f32.gmra.mrb[0].mxu0 %v1055
      %v1127 = vpop.f32.mrb[0].mxu0
      %v1128 = vadd.f32 0.0, %v1127
      %v1129 = vpop.f32.mrb[0].mxu0
      %v1130 = vadd.f32 0.0, %v1129
      %1131 = vdwg.mxu0
      %v1132 = vadd.f32 %v1015, %v1128
      %v1133 = vadd.f32 %v1017, %v1130
      %v1134 = vld [vmem:[#allocation2] sm:$0xff]
      %v1135 = vld [vmem:[#allocation2 + $0x8] sm:$0xf]
      %1136 = vrot.lane.b32.xlu0 %v825, 127
      %v1137 = vpop.permute.xlu0 %1136
      %v1138 = vrot.slane %v1137, 4
      %vm1139 = vcmask 1039360
      %v1140 = vsel %vm1139, %v1138, %v1137
      %v1143 = vmul.f32 %v1134, %v1140
      %v1144 = vmul.f32 %v1135, %v1138
      %s1145 = scalar_lea.vmem %s6, 12
      %v1146 = vld [vmem:[%s1145] sm:$0xf]
      %v1149 = vcombine.high %v1143, %v1143
      %1150 = vrot.lane.b32.xlu0 %v1143, 1
      %v1151 = vpop.permute.xlu0 %1150
      %1152 = vrot.lane.b32.xlu0 %v1149, 1
      %v1153 = vpop.permute.xlu0 %1152
      %1154 = vrot.lane.b32.xlu0 %v1144, 1
      %v1155 = vpop.permute.xlu0 %1154
      %vm1156 = vcmask 7168
      %v1157 = vsel %vm1156, %v1151, %v1153
      %v1158 = vsel %vm1156, %v1153, %v1155
      %v1160 = vsel %vm850, %v1146, 0
      %v1162 = vsel %vm801, %v1157, 0
      %v1164 = vsel %vm801, %v1158, 0
      %1166 = vmatprep.subr.mxu0 %v1164
      %1167 = vmatpush1.msra.mxu0 %v1162
      %1168 = vmatprep.subr.mxu0 0.0
      %1169 = vmatpush1.msra.mxu0 0.0
      %1170 = vmatprep.subr.mxu0 0.0
      %1171 = vmatpush1.msra.mxu0 0.0
      %1172 = vmatprep.subr.mxu0 0.0
      %1173 = vmatpush1.msra.mxu0 0.0
      %1174 = vmatprep.subr.mxu0 0.0
      %1175 = vmatpush1.msra.mxu0 0.0
      %1176 = vmatprep.subr.mxu0 0.0
      %1177 = vmatpush1.msra.mxu0 0.0
      %1178 = vmatprep.subr.mxu0 0.0
      %1179 = vmatpush1.msra.mxu0 0.0
      %1180 = vmatprep.subr.mxu0 0.0
      %1181 = vmatpush1.msra.mxu0 0.0
      %1182 = vmatprep.subr.mxu0 0.0
      %1183 = vmatpush1.msra.mxu0 0.0
      %1184 = vmatprep.subr.mxu0 0.0
      %1185 = vmatpush1.msra.mxu0 0.0
      %1186 = vmatprep.subr.mxu0 0.0
      %1187 = vmatpush1.msra.mxu0 0.0
      %1188 = vmatprep.subr.mxu0 0.0
      %1189 = vmatpush1.msra.mxu0 0.0
      %1190 = vmatprep.subr.mxu0 0.0
      %1191 = vmatpush1.msra.mxu0 0.0
      %1192 = vmatprep.subr.mxu0 0.0
      %1193 = vmatpush1.msra.mxu0 0.0
      %1194 = vmatprep.subr.mxu0 0.0
      %1195 = vmatpush1.msra.mxu0 0.0
      %1196 = vmatprep.subr.mxu0 0.0
      %1197 = vmatpush1.msra.mxu0 0.0
      %1198 = vmatprep.subr.mxu0 0.0
      %1199 = vmatpush1.msra.mxu0 0.0
      %1200 = vmatprep.subr.mxu0 0.0
      %1201 = vmatpush1.msra.mxu0 0.0
      %1202 = vmatprep.subr.mxu0 0.0
      %1203 = vmatpush1.msra.mxu0 0.0
      %1204 = vmatprep.subr.mxu0 0.0
      %1205 = vmatpush1.msra.mxu0 0.0
      %1206 = vmatprep.subr.mxu0 0.0
      %1207 = vmatpush1.msra.mxu0 0.0
      %1208 = vmatprep.subr.mxu0 0.0
      %1209 = vmatpush1.msra.mxu0 0.0
      %1210 = vmatprep.subr.mxu0 0.0
      %1211 = vmatpush1.msra.mxu0 0.0
      %1212 = vmatprep.subr.mxu0 0.0
      %1213 = vmatpush1.msra.mxu0 0.0
      %1214 = vmatprep.subr.mxu0 0.0
      %1215 = vmatpush1.msra.mxu0 0.0
      %1216 = vmatprep.subr.mxu0 0.0
      %1217 = vmatpush1.msra.mxu0 0.0
      %1218 = vmatprep.subr.mxu0 0.0
      %1219 = vmatpush1.msra.mxu0 0.0
      %1220 = vmatprep.subr.mxu0 0.0
      %1221 = vmatpush1.msra.mxu0 0.0
      %1222 = vmatprep.subr.mxu0 0.0
      %1223 = vmatpush1.msra.mxu0 0.0
      %1224 = vmatprep.subr.mxu0 0.0
      %1225 = vmatpush1.msra.mxu0 0.0
      %1226 = vmatprep.subr.mxu0 0.0
      %1227 = vmatpush1.msra.mxu0 0.0
      %1228 = vmatprep.subr.mxu0 0.0
      %1229 = vmatpush1.msra.mxu0 0.0
      %1230 = vmatprep.mubr.f32.mxu0 0.0
      %1231 = vmatmul.mubr.f32.gmra.mrb[0].mxu0 %v1160
      %v1232 = vpop.f32.mrb[0].mxu0
      %v1233 = vadd.f32 0.0, %v1232
      %v1234 = vpop.f32.mrb[0].mxu0
      %v1235 = vadd.f32 0.0, %v1234
      %1236 = vdwg.mxu0
      %v1237 = vadd.f32 %v1132, %v1233
      %v1238 = vadd.f32 %v1133, %v1235
      %v1239 = vld [vmem:[#allocation2 + $0x4] sm:$0xff]
      %s1240 = scalar_lea.vmem %s6, 16
      %v1241 = vld [vmem:[%s1240] sm:$0xf]
      %v1243 = vcombine.high %v1239, %v1239
      %v1245 = vsel %vm850, %v1241, 0
      %v1247 = vsel %vm801, %v1239, 0
      %v1249 = vsel %vm801, %v1243, 0
      %1251 = vmatprep.subr.mxu0 %v1249
      %1252 = vmatpush1.msra.mxu0 %v1247
      %1253 = vmatprep.subr.mxu0 0.0
      %1254 = vmatpush1.msra.mxu0 0.0
      %1255 = vmatprep.subr.mxu0 0.0
      %1256 = vmatpush1.msra.mxu0 0.0
      %1257 = vmatprep.subr.mxu0 0.0
      %1258 = vmatpush1.msra.mxu0 0.0
      %1259 = vmatprep.subr.mxu0 0.0
      %1260 = vmatpush1.msra.mxu0 0.0
      %1261 = vmatprep.subr.mxu0 0.0
      %1262 = vmatpush1.msra.mxu0 0.0
      %1263 = vmatprep.subr.mxu0 0.0
      %1264 = vmatpush1.msra.mxu0 0.0
      %1265 = vmatprep.subr.mxu0 0.0
      %1266 = vmatpush1.msra.mxu0 0.0
      %1267 = vmatprep.subr.mxu0 0.0
      %1268 = vmatpush1.msra.mxu0 0.0
      %1269 = vmatprep.subr.mxu0 0.0
      %1270 = vmatpush1.msra.mxu0 0.0
      %1271 = vmatprep.subr.mxu0 0.0
      %1272 = vmatpush1.msra.mxu0 0.0
      %1273 = vmatprep.subr.mxu0 0.0
      %1274 = vmatpush1.msra.mxu0 0.0
      %1275 = vmatprep.subr.mxu0 0.0
      %1276 = vmatpush1.msra.mxu0 0.0
      %1277 = vmatprep.subr.mxu0 0.0
      %1278 = vmatpush1.msra.mxu0 0.0
      %1279 = vmatprep.subr.mxu0 0.0
      %1280 = vmatpush1.msra.mxu0 0.0
      %1281 = vmatprep.subr.mxu0 0.0
      %1282 = vmatpush1.msra.mxu0 0.0
      %1283 = vmatprep.subr.mxu0 0.0
      %1284 = vmatpush1.msra.mxu0 0.0
      %1285 = vmatprep.subr.mxu0 0.0
      %1286 = vmatpush1.msra.mxu0 0.0
      %1287 = vmatprep.subr.mxu0 0.0
      %1288 = vmatpush1.msra.mxu0 0.0
      %1289 = vmatprep.subr.mxu0 0.0
      %1290 = vmatpush1.msra.mxu0 0.0
      %1291 = vmatprep.subr.mxu0 0.0
      %1292 = vmatpush1.msra.mxu0 0.0
      %1293 = vmatprep.subr.mxu0 0.0
      %1294 = vmatpush1.msra.mxu0 0.0
      %1295 = vmatprep.subr.mxu0 0.0
      %1296 = vmatpush1.msra.mxu0 0.0
      %1297 = vmatprep.subr.mxu0 0.0
      %1298 = vmatpush1.msra.mxu0 0.0
      %1299 = vmatprep.subr.mxu0 0.0
      %1300 = vmatpush1.msra.mxu0 0.0
      %1301 = vmatprep.subr.mxu0 0.0
      %1302 = vmatpush1.msra.mxu0 0.0
      %1303 = vmatprep.subr.mxu0 0.0
      %1304 = vmatpush1.msra.mxu0 0.0
      %1305 = vmatprep.subr.mxu0 0.0
      %1306 = vmatpush1.msra.mxu0 0.0
      %1307 = vmatprep.subr.mxu0 0.0
      %1308 = vmatpush1.msra.mxu0 0.0
      %1309 = vmatprep.subr.mxu0 0.0
      %1310 = vmatpush1.msra.mxu0 0.0
      %1311 = vmatprep.subr.mxu0 0.0
      %1312 = vmatpush1.msra.mxu0 0.0
      %1313 = vmatprep.subr.mxu0 0.0
      %1314 = vmatpush1.msra.mxu0 0.0
      %1315 = vmatprep.mubr.f32.mxu0 0.0
      %1316 = vmatmul.mubr.f32.gmra.mrb[0].mxu0 %v1245
      %v1317 = vpop.f32.mrb[0].mxu0
      %v1318 = vadd.f32 0.0, %v1317
      %v1319 = vpop.f32.mrb[0].mxu0
      %v1320 = vadd.f32 0.0, %v1319
      %1321 = vdwg.mxu0
      %v1322 = vadd.f32 %v1237, %v1318
      %v1323 = vadd.f32 %v1238, %v1320
      %v1324 = vld [vmem:[#allocation2 + $0x4] sm:$0xff]
      %v1325 = vld [vmem:[#allocation2 + $0xc] sm:$0xf]
      %1326 = vrot.lane.b32.xlu0 %v1030, 1
      %v1327 = vpop.permute.xlu0 %1326
      %v1328 = vrot.slane %v1327, 4
      %v1329 = vsel %vm1156, %v1328, %v1327
      %v1332 = vmul.f32 %v1324, %v1329
      %v1333 = vmul.f32 %v1325, %v1328
      %s1334 = scalar_lea.vmem %s6, 20
      %v1335 = vld [vmem:[%s1334] sm:$0xf]
      %v1338 = vcombine.high %v1332, %v1332
      %1339 = vrot.lane.b32.xlu0 %v1332, 127
      %v1340 = vpop.permute.xlu0 %1339
      %1341 = vrot.lane.b32.xlu0 %v1338, 127
      %v1342 = vpop.permute.xlu0 %1341
      %1343 = vrot.lane.b32.xlu0 %v1333, 127
      %v1344 = vpop.permute.xlu0 %1343
      %v1345 = vsel %vm1139, %v1340, %v1342
      %v1346 = vsel %vm1139, %v1342, %v1344
      %v1348 = vsel %vm850, %v1335, 0
      %v1350 = vsel %vm801, %v1345, 0
      %v1352 = vsel %vm801, %v1346, 0
      %1354 = vmatprep.subr.mxu0 %v1352
      %1355 = vmatpush1.msra.mxu0 %v1350
      %1356 = vmatprep.subr.mxu0 0.0
      %1357 = vmatpush1.msra.mxu0 0.0
      %1358 = vmatprep.subr.mxu0 0.0
      %1359 = vmatpush1.msra.mxu0 0.0
      %1360 = vmatprep.subr.mxu0 0.0
      %1361 = vmatpush1.msra.mxu0 0.0
      %1362 = vmatprep.subr.mxu0 0.0
      %1363 = vmatpush1.msra.mxu0 0.0
      %1364 = vmatprep.subr.mxu0 0.0
      %1365 = vmatpush1.msra.mxu0 0.0
      %1366 = vmatprep.subr.mxu0 0.0
      %1367 = vmatpush1.msra.mxu0 0.0
      %1368 = vmatprep.subr.mxu0 0.0
      %1369 = vmatpush1.msra.mxu0 0.0
      %1370 = vmatprep.subr.mxu0 0.0
      %1371 = vmatpush1.msra.mxu0 0.0
      %1372 = vmatprep.subr.mxu0 0.0
      %1373 = vmatpush1.msra.mxu0 0.0
      %1374 = vmatprep.subr.mxu0 0.0
      %1375 = vmatpush1.msra.mxu0 0.0
      %1376 = vmatprep.subr.mxu0 0.0
      %1377 = vmatpush1.msra.mxu0 0.0
      %1378 = vmatprep.subr.mxu0 0.0
      %1379 = vmatpush1.msra.mxu0 0.0
      %1380 = vmatprep.subr.mxu0 0.0
      %1381 = vmatpush1.msra.mxu0 0.0
      %1382 = vmatprep.subr.mxu0 0.0
      %1383 = vmatpush1.msra.mxu0 0.0
      %1384 = vmatprep.subr.mxu0 0.0
      %1385 = vmatpush1.msra.mxu0 0.0
      %1386 = vmatprep.subr.mxu0 0.0
      %1387 = vmatpush1.msra.mxu0 0.0
      %1388 = vmatprep.subr.mxu0 0.0
      %1389 = vmatpush1.msra.mxu0 0.0
      %1390 = vmatprep.subr.mxu0 0.0
      %1391 = vmatpush1.msra.mxu0 0.0
      %1392 = vmatprep.subr.mxu0 0.0
      %1393 = vmatpush1.msra.mxu0 0.0
      %1394 = vmatprep.subr.mxu0 0.0
      %1395 = vmatpush1.msra.mxu0 0.0
      %1396 = vmatprep.subr.mxu0 0.0
      %1397 = vmatpush1.msra.mxu0 0.0
      %1398 = vmatprep.subr.mxu0 0.0
      %1399 = vmatpush1.msra.mxu0 0.0
      %1400 = vmatprep.subr.mxu0 0.0
      %1401 = vmatpush1.msra.mxu0 0.0
      %1402 = vmatprep.subr.mxu0 0.0
      %1403 = vmatpush1.msra.mxu0 0.0
      %1404 = vmatprep.subr.mxu0 0.0
      %1405 = vmatpush1.msra.mxu0 0.0
      %1406 = vmatprep.subr.mxu0 0.0
      %1407 = vmatpush1.msra.mxu0 0.0
      %1408 = vmatprep.subr.mxu0 0.0
      %1409 = vmatpush1.msra.mxu0 0.0
      %1410 = vmatprep.subr.mxu0 0.0
      %1411 = vmatpush1.msra.mxu0 0.0
      %1412 = vmatprep.subr.mxu0 0.0
      %1413 = vmatpush1.msra.mxu0 0.0
      %1414 = vmatprep.subr.mxu0 0.0
      %1415 = vmatpush1.msra.mxu0 0.0
      %1416 = vmatprep.subr.mxu0 0.0
      %1417 = vmatpush1.msra.mxu0 0.0
      %1418 = vmatprep.mubr.f32.mxu0 0.0
      %1419 = vmatmul.mubr.f32.gmra.mrb[0].mxu0 %v1348
      %v1420 = vpop.f32.mrb[0].mxu0
      %v1421 = vadd.f32 0.0, %v1420
      %v1422 = vpop.f32.mrb[0].mxu0
      %v1423 = vadd.f32 0.0, %v1422
      %1424 = vdwg.mxu0
      %v1425 = vadd.f32 %v1322, %v1421
      %v1426 = vadd.f32 %v1323, %v1423
      %v1427 = vld [vmem:[#allocation2 + $0x4] sm:$0xff]
      %v1428 = vld [vmem:[#allocation2 + $0xc] sm:$0xf]
      %1429 = vrot.lane.b32.xlu0 %v825, 15
      %v1430 = vpop.permute.xlu0 %1429
      %v1431 = vrot.slane %v1430, 4
      %v1432 = vsel %vm1051, %v1431, %v1430
      %v1435 = vmul.f32 %v1427, %v1432
      %v1436 = vmul.f32 %v1428, %v1431
      %s1437 = scalar_lea.vmem %s6, 24
      %v1438 = vld [vmem:[%s1437] sm:$0xf]
      %v1441 = vcombine.high %v1435, %v1435
      %1442 = vrot.lane.b32.xlu0 %v1435, 113
      %v1443 = vpop.permute.xlu0 %1442
      %1444 = vrot.lane.b32.xlu0 %v1441, 113
      %v1445 = vpop.permute.xlu0 %1444
      %1446 = vrot.lane.b32.xlu0 %v1436, 113
      %v1447 = vpop.permute.xlu0 %1446
      %v1448 = vsel %vm1034, %v1443, %v1445
      %v1449 = vsel %vm1034, %v1445, %v1447
      %v1451 = vsel %vm850, %v1438, 0
      %v1453 = vsel %vm801, %v1448, 0
      %v1455 = vsel %vm801, %v1449, 0
      %1457 = vmatprep.subr.mxu0 %v1455
      %1458 = vmatpush1.msra.mxu0 %v1453
      %1459 = vmatprep.subr.mxu0 0.0
      %1460 = vmatpush1.msra.mxu0 0.0
      %1461 = vmatprep.subr.mxu0 0.0
      %1462 = vmatpush1.msra.mxu0 0.0
      %1463 = vmatprep.subr.mxu0 0.0
      %1464 = vmatpush1.msra.mxu0 0.0
      %1465 = vmatprep.subr.mxu0 0.0
      %1466 = vmatpush1.msra.mxu0 0.0
      %1467 = vmatprep.subr.mxu0 0.0
      %1468 = vmatpush1.msra.mxu0 0.0
      %1469 = vmatprep.subr.mxu0 0.0
      %1470 = vmatpush1.msra.mxu0 0.0
      %1471 = vmatprep.subr.mxu0 0.0
      %1472 = vmatpush1.msra.mxu0 0.0
      %1473 = vmatprep.subr.mxu0 0.0
      %1474 = vmatpush1.msra.mxu0 0.0
      %1475 = vmatprep.subr.mxu0 0.0
      %1476 = vmatpush1.msra.mxu0 0.0
      %1477 = vmatprep.subr.mxu0 0.0
      %1478 = vmatpush1.msra.mxu0 0.0
      %1479 = vmatprep.subr.mxu0 0.0
      %1480 = vmatpush1.msra.mxu0 0.0
      %1481 = vmatprep.subr.mxu0 0.0
      %1482 = vmatpush1.msra.mxu0 0.0
      %1483 = vmatprep.subr.mxu0 0.0
      %1484 = vmatpush1.msra.mxu0 0.0
      %1485 = vmatprep.subr.mxu0 0.0
      %1486 = vmatpush1.msra.mxu0 0.0
      %1487 = vmatprep.subr.mxu0 0.0
      %1488 = vmatpush1.msra.mxu0 0.0
      %1489 = vmatprep.subr.mxu0 0.0
      %1490 = vmatpush1.msra.mxu0 0.0
      %1491 = vmatprep.subr.mxu0 0.0
      %1492 = vmatpush1.msra.mxu0 0.0
      %1493 = vmatprep.subr.mxu0 0.0
      %1494 = vmatpush1.msra.mxu0 0.0
      %1495 = vmatprep.subr.mxu0 0.0
      %1496 = vmatpush1.msra.mxu0 0.0
      %1497 = vmatprep.subr.mxu0 0.0
      %1498 = vmatpush1.msra.mxu0 0.0
      %1499 = vmatprep.subr.mxu0 0.0
      %1500 = vmatpush1.msra.mxu0 0.0
      %1501 = vmatprep.subr.mxu0 0.0
      %1502 = vmatpush1.msra.mxu0 0.0
      %1503 = vmatprep.subr.mxu0 0.0
      %1504 = vmatpush1.msra.mxu0 0.0
      %1505 = vmatprep.subr.mxu0 0.0
      %1506 = vmatpush1.msra.mxu0 0.0
      %1507 = vmatprep.subr.mxu0 0.0
      %1508 = vmatpush1.msra.mxu0 0.0
      %1509 = vmatprep.subr.mxu0 0.0
      %1510 = vmatpush1.msra.mxu0 0.0
      %1511 = vmatprep.subr.mxu0 0.0
      %1512 = vmatpush1.msra.mxu0 0.0
      %1513 = vmatprep.subr.mxu0 0.0
      %1514 = vmatpush1.msra.mxu0 0.0
      %1515 = vmatprep.subr.mxu0 0.0
      %1516 = vmatpush1.msra.mxu0 0.0
      %1517 = vmatprep.subr.mxu0 0.0
      %1518 = vmatpush1.msra.mxu0 0.0
      %1519 = vmatprep.subr.mxu0 0.0
      %1520 = vmatpush1.msra.mxu0 0.0
      %1521 = vmatprep.mubr.f32.mxu0 0.0
      %1522 = vmatmul.mubr.f32.gmra.mrb[0].mxu0 %v1451
      %v1523 = vpop.f32.mrb[0].mxu0
      %v1524 = vadd.f32 0.0, %v1523
      %v1525 = vpop.f32.mrb[0].mxu0
      %v1526 = vadd.f32 0.0, %v1525
      %1527 = vdwg.mxu0
      %v1528 = vadd.f32 %v1425, %v1524
      %v1529 = vadd.f32 %v1426, %v1526
      %v1530 = vld [vmem:[#allocation2 + $0x4] sm:$0xff]
      %v1531 = vld [vmem:[#allocation2 + $0xc] sm:$0xf]
      %s1532 = scalar_lea.vmem %s6, 28
      %v1533 = vld [vmem:[%s1532] sm:$0xf]
      %v1536 = vcombine.high %v1530, %v1530
      %1537 = vrot.lane.b32.xlu0 %v1530, 112
      %v1538 = vpop.permute.xlu0 %1537
      %1539 = vrot.lane.b32.xlu0 %v1536, 112
      %v1540 = vpop.permute.xlu0 %1539
      %1541 = vrot.lane.b32.xlu0 %v1531, 112
      %v1542 = vpop.permute.xlu0 %1541
      %vm1543 = vcmask 916480
      %v1544 = vsel %vm1543, %v1538, %v1540
      %v1545 = vsel %vm1543, %v1540, %v1542
      %v1547 = vsel %vm850, %v1533, 0
      %v1549 = vsel %vm801, %v1544, 0
      %v1551 = vsel %vm801, %v1545, 0
      %1553 = vmatprep.subr.mxu0 %v1551
      %1554 = vmatpush1.msra.mxu0 %v1549
      %1555 = vmatprep.subr.mxu0 0.0
      %1556 = vmatpush1.msra.mxu0 0.0
      %1557 = vmatprep.subr.mxu0 0.0
      %1558 = vmatpush1.msra.mxu0 0.0
      %1559 = vmatprep.subr.mxu0 0.0
      %1560 = vmatpush1.msra.mxu0 0.0
      %1561 = vmatprep.subr.mxu0 0.0
      %1562 = vmatpush1.msra.mxu0 0.0
      %1563 = vmatprep.subr.mxu0 0.0
      %1564 = vmatpush1.msra.mxu0 0.0
      %1565 = vmatprep.subr.mxu0 0.0
      %1566 = vmatpush1.msra.mxu0 0.0
      %1567 = vmatprep.subr.mxu0 0.0
      %1568 = vmatpush1.msra.mxu0 0.0
      %1569 = vmatprep.subr.mxu0 0.0
      %1570 = vmatpush1.msra.mxu0 0.0
      %1571 = vmatprep.subr.mxu0 0.0
      %1572 = vmatpush1.msra.mxu0 0.0
      %1573 = vmatprep.subr.mxu0 0.0
      %1574 = vmatpush1.msra.mxu0 0.0
      %1575 = vmatprep.subr.mxu0 0.0
      %1576 = vmatpush1.msra.mxu0 0.0
      %1577 = vmatprep.subr.mxu0 0.0
      %1578 = vmatpush1.msra.mxu0 0.0
      %1579 = vmatprep.subr.mxu0 0.0
      %1580 = vmatpush1.msra.mxu0 0.0
      %1581 = vmatprep.subr.mxu0 0.0
      %1582 = vmatpush1.msra.mxu0 0.0
      %1583 = vmatprep.subr.mxu0 0.0
      %1584 = vmatpush1.msra.mxu0 0.0
      %1585 = vmatprep.subr.mxu0 0.0
      %1586 = vmatpush1.msra.mxu0 0.0
      %1587 = vmatprep.subr.mxu0 0.0
      %1588 = vmatpush1.msra.mxu0 0.0
      %1589 = vmatprep.subr.mxu0 0.0
      %1590 = vmatpush1.msra.mxu0 0.0
      %1591 = vmatprep.subr.mxu0 0.0
      %1592 = vmatpush1.msra.mxu0 0.0
      %1593 = vmatprep.subr.mxu0 0.0
      %1594 = vmatpush1.msra.mxu0 0.0
      %1595 = vmatprep.subr.mxu0 0.0
      %1596 = vmatpush1.msra.mxu0 0.0
      %1597 = vmatprep.subr.mxu0 0.0
      %1598 = vmatpush1.msra.mxu0 0.0
      %1599 = vmatprep.subr.mxu0 0.0
      %1600 = vmatpush1.msra.mxu0 0.0
      %1601 = vmatprep.subr.mxu0 0.0
      %1602 = vmatpush1.msra.mxu0 0.0
      %1603 = vmatprep.subr.mxu0 0.0
      %1604 = vmatpush1.msra.mxu0 0.0
      %1605 = vmatprep.subr.mxu0 0.0
      %1606 = vmatpush1.msra.mxu0 0.0
      %1607 = vmatprep.subr.mxu0 0.0
      %1608 = vmatpush1.msra.mxu0 0.0
      %1609 = vmatprep.subr.mxu0 0.0
      %1610 = vmatpush1.msra.mxu0 0.0
      %1611 = vmatprep.subr.mxu0 0.0
      %1612 = vmatpush1.msra.mxu0 0.0
      %1613 = vmatprep.subr.mxu0 0.0
      %1614 = vmatpush1.msra.mxu0 0.0
      %1615 = vmatprep.subr.mxu0 0.0
      %1616 = vmatpush1.msra.mxu0 0.0
      %1617 = vmatprep.mubr.f32.mxu0 0.0
      %1618 = vmatmul.mubr.f32.gmra.mrb[0].mxu0 %v1547
      %v1619 = vpop.f32.mrb[0].mxu0
      %v1620 = vadd.f32 0.0, %v1619
      %v1621 = vpop.f32.mrb[0].mxu0
      %v1622 = vadd.f32 0.0, %v1621
      %1623 = vdwg.mxu0
      %v1624 = vadd.f32 %v1528, %v1620
      %v1625 = vadd.f32 %v1529, %v1622
      %v1626 = vld [vmem:[#allocation2 + $0x4] sm:$0xff]
      %v1627 = vld [vmem:[#allocation2 + $0xc] sm:$0xf]
      %1628 = vrot.lane.b32.xlu0 %v1030, 17
      %v1629 = vpop.permute.xlu0 %1628
      %v1630 = vrot.slane %v1629, 4
      %v1631 = vsel %vm938, %v1630, %v1629
      %v1634 = vmul.f32 %v1626, %v1631
      %v1635 = vmul.f32 %v1627, %v1630
      %s1636 = scalar_lea.vmem %s6, 32
      %v1637 = vld [vmem:[%s1636] sm:$0xf]
      %v1640 = vcombine.high %v1634, %v1634
      %1641 = vrot.lane.b32.xlu0 %v1634, 111
      %v1642 = vpop.permute.xlu0 %1641
      %1643 = vrot.lane.b32.xlu0 %v1640, 111
      %v1644 = vpop.permute.xlu0 %1643
      %1645 = vrot.lane.b32.xlu0 %v1635, 111
      %v1646 = vpop.permute.xlu0 %1645
      %v1647 = vsel %vm829, %v1642, %v1644
      %v1648 = vsel %vm829, %v1644, %v1646
      %v1650 = vsel %vm850, %v1637, 0
      %v1652 = vsel %vm801, %v1647, 0
      %v1654 = vsel %vm801, %v1648, 0
      %1656 = vmatprep.subr.mxu0 %v1654
      %1657 = vmatpush1.msra.mxu0 %v1652
      %1658 = vmatprep.subr.mxu0 0.0
      %1659 = vmatpush1.msra.mxu0 0.0
      %1660 = vmatprep.subr.mxu0 0.0
      %1661 = vmatpush1.msra.mxu0 0.0
      %1662 = vmatprep.subr.mxu0 0.0
      %1663 = vmatpush1.msra.mxu0 0.0
      %1664 = vmatprep.subr.mxu0 0.0
      %1665 = vmatpush1.msra.mxu0 0.0
      %1666 = vmatprep.subr.mxu0 0.0
      %1667 = vmatpush1.msra.mxu0 0.0
      %1668 = vmatprep.subr.mxu0 0.0
      %1669 = vmatpush1.msra.mxu0 0.0
      %1670 = vmatprep.subr.mxu0 0.0
      %1671 = vmatpush1.msra.mxu0 0.0
      %1672 = vmatprep.subr.mxu0 0.0
      %1673 = vmatpush1.msra.mxu0 0.0
      %1674 = vmatprep.subr.mxu0 0.0
      %1675 = vmatpush1.msra.mxu0 0.0
      %1676 = vmatprep.subr.mxu0 0.0
      %1677 = vmatpush1.msra.mxu0 0.0
      %1678 = vmatprep.subr.mxu0 0.0
      %1679 = vmatpush1.msra.mxu0 0.0
      %1680 = vmatprep.subr.mxu0 0.0
      %1681 = vmatpush1.msra.mxu0 0.0
      %1682 = vmatprep.subr.mxu0 0.0
      %1683 = vmatpush1.msra.mxu0 0.0
      %1684 = vmatprep.subr.mxu0 0.0
      %1685 = vmatpush1.msra.mxu0 0.0
      %1686 = vmatprep.subr.mxu0 0.0
      %1687 = vmatpush1.msra.mxu0 0.0
      %1688 = vmatprep.subr.mxu0 0.0
      %1689 = vmatpush1.msra.mxu0 0.0
      %1690 = vmatprep.subr.mxu0 0.0
      %1691 = vmatpush1.msra.mxu0 0.0
      %1692 = vmatprep.subr.mxu0 0.0
      %1693 = vmatpush1.msra.mxu0 0.0
      %1694 = vmatprep.subr.mxu0 0.0
      %1695 = vmatpush1.msra.mxu0 0.0
      %1696 = vmatprep.subr.mxu0 0.0
      %1697 = vmatpush1.msra.mxu0 0.0
      %1698 = vmatprep.subr.mxu0 0.0
      %1699 = vmatpush1.msra.mxu0 0.0
      %1700 = vmatprep.subr.mxu0 0.0
      %1701 = vmatpush1.msra.mxu0 0.0
      %1702 = vmatprep.subr.mxu0 0.0
      %1703 = vmatpush1.msra.mxu0 0.0
      %1704 = vmatprep.subr.mxu0 0.0
      %1705 = vmatpush1.msra.mxu0 0.0
      %1706 = vmatprep.subr.mxu0 0.0
      %1707 = vmatpush1.msra.mxu0 0.0
      %1708 = vmatprep.subr.mxu0 0.0
      %1709 = vmatpush1.msra.mxu0 0.0
      %1710 = vmatprep.subr.mxu0 0.0
      %1711 = vmatpush1.msra.mxu0 0.0
      %1712 = vmatprep.subr.mxu0 0.0
      %1713 = vmatpush1.msra.mxu0 0.0
      %1714 = vmatprep.subr.mxu0 0.0
      %1715 = vmatpush1.msra.mxu0 0.0
      %1716 = vmatprep.subr.mxu0 0.0
      %1717 = vmatpush1.msra.mxu0 0.0
      %1718 = vmatprep.subr.mxu0 0.0
      %1719 = vmatpush1.msra.mxu0 0.0
      %1720 = vmatprep.mubr.f32.mxu0 0.0
      %1721 = vmatmul.mubr.f32.gmra.mrb[0].mxu0 %v1650
      %v1722 = vpop.f32.mrb[0].mxu0
      %v1723 = vadd.f32 0.0, %v1722
      %v1724 = vpop.f32.mrb[0].mxu0
      %v1725 = vadd.f32 0.0, %v1724
      %1726 = vdwg.mxu0
      %v1727 = vadd.f32 %v1624, %v1723
      %v1728 = vadd.f32 %v1625, %v1725
      %v1729 = vld [vmem:[%s7] sm:$0xf]
      %1731 = vset.pattern.permute.xlu0 0
      %1732 = vperm.xlu0 %1731, %v1729
      %v1733 = vpop.permute.xlu0 %1732
      %v1735 = vadd.f32 %v1727, %v1733
      %v1736 = vadd.f32 %v1728, %v1733
      %vm1737 = vcmp.ge.f32.partialorder %v1735, 0.0
      %vm1738 = vcmp.ge.f32.partialorder %v1736, 0.0
      %v1739 = vmul.f32 %v1735, 0.01
      %v1740 = vmul.f32 %v1736, 0.01
      %v1741 = vsel %vm1737, %v1735, %v1739
      %v1742 = vsel %vm1738, %v1736, %v1740
      %1743 = vst [vmem:[#allocation2 + $0x4] sm:$0xff] %v805
      %v1744 = vld [vmem:[#allocation2] sm:$0xff]
      %v1745 = vld [vmem:[#allocation2 + $0x8] sm:$0xf]
      %v1746 = vmul.f32 %v1744, %v830
      %v1747 = vmul.f32 %v1745, %v828
      %v1748 = vld [vmem:[%s8] sm:$0xf]
      %s1749 = scalar_lea.vmem %s8, 4
      %v1750 = vld [vmem:[%s1749] sm:$0xf]
      %v1753 = vcombine.high %v1744, %v1744
      %1754 = vrot.lane.b32.xlu0 %v1744, 16
      %v1755 = vpop.permute.xlu0 %1754
      %1756 = vrot.lane.b32.xlu0 %v1753, 16
      %v1757 = vpop.permute.xlu0 %1756
      %1758 = vrot.lane.b32.xlu0 %v1745, 16
      %v1759 = vpop.permute.xlu0 %1758
      %v1760 = vsel %vm847, %v1755, %v1757
      %v1761 = vsel %vm847, %v1757, %v1759
      %v1763 = vsel %vm850, %v1750, 0
      %v1765 = vsel %vm801, %v1760, 0
      %v1767 = vsel %vm801, %v1761, 0
      %1769 = vmatprep.subr.mxu0 %v1767
      %1770 = vmatpush1.msra.mxu0 %v1765
      %1771 = vmatprep.subr.mxu0 0.0
      %1772 = vmatpush1.msra.mxu0 0.0
      %1773 = vmatprep.subr.mxu0 0.0
      %1774 = vmatpush1.msra.mxu0 0.0
      %1775 = vmatprep.subr.mxu0 0.0
      %1776 = vmatpush1.msra.mxu0 0.0
      %1777 = vmatprep.subr.mxu0 0.0
      %1778 = vmatpush1.msra.mxu0 0.0
      %1779 = vmatprep.subr.mxu0 0.0
      %1780 = vmatpush1.msra.mxu0 0.0
      %1781 = vmatprep.subr.mxu0 0.0
      %1782 = vmatpush1.msra.mxu0 0.0
      %1783 = vmatprep.subr.mxu0 0.0
      %1784 = vmatpush1.msra.mxu0 0.0
      %1785 = vmatprep.subr.mxu0 0.0
      %1786 = vmatpush1.msra.mxu0 0.0
      %1787 = vmatprep.subr.mxu0 0.0
      %1788 = vmatpush1.msra.mxu0 0.0
      %1789 = vmatprep.subr.mxu0 0.0
      %1790 = vmatpush1.msra.mxu0 0.0
      %1791 = vmatprep.subr.mxu0 0.0
      %1792 = vmatpush1.msra.mxu0 0.0
      %1793 = vmatprep.subr.mxu0 0.0
      %1794 = vmatpush1.msra.mxu0 0.0
      %1795 = vmatprep.subr.mxu0 0.0
      %1796 = vmatpush1.msra.mxu0 0.0
      %1797 = vmatprep.subr.mxu0 0.0
      %1798 = vmatpush1.msra.mxu0 0.0
      %1799 = vmatprep.subr.mxu0 0.0
      %1800 = vmatpush1.msra.mxu0 0.0
      %1801 = vmatprep.subr.mxu0 0.0
      %1802 = vmatpush1.msra.mxu0 0.0
      %1803 = vmatprep.subr.mxu0 0.0
      %1804 = vmatpush1.msra.mxu0 0.0
      %1805 = vmatprep.subr.mxu0 0.0
      %1806 = vmatpush1.msra.mxu0 0.0
      %1807 = vmatprep.subr.mxu0 0.0
      %1808 = vmatpush1.msra.mxu0 0.0
      %1809 = vmatprep.subr.mxu0 0.0
      %1810 = vmatpush1.msra.mxu0 0.0
      %1811 = vmatprep.subr.mxu0 0.0
      %1812 = vmatpush1.msra.mxu0 0.0
      %1813 = vmatprep.subr.mxu0 0.0
      %1814 = vmatpush1.msra.mxu0 0.0
      %1815 = vmatprep.subr.mxu0 0.0
      %1816 = vmatpush1.msra.mxu0 0.0
      %1817 = vmatprep.subr.mxu0 0.0
      %1818 = vmatpush1.msra.mxu0 0.0
      %1819 = vmatprep.subr.mxu0 0.0
      %1820 = vmatpush1.msra.mxu0 0.0
      %1821 = vmatprep.subr.mxu0 0.0
      %1822 = vmatpush1.msra.mxu0 0.0
      %1823 = vmatprep.subr.mxu0 0.0
      %1824 = vmatpush1.msra.mxu0 0.0
      %1825 = vmatprep.subr.mxu0 0.0
      %1826 = vmatpush1.msra.mxu0 0.0
      %1827 = vmatprep.subr.mxu0 0.0
      %1828 = vmatpush1.msra.mxu0 0.0
      %1829 = vmatprep.subr.mxu0 0.0
      %1830 = vmatpush1.msra.mxu0 0.0
      %1831 = vmatprep.subr.mxu0 0.0
      %1832 = vmatpush1.msra.mxu0 0.0
      %1833 = vmatprep.mubr.f32.mxu0 0.0
      %1834 = vmatmul.mubr.f32.gmra.mrb[0].mxu0 %v1763
      %v1835 = vpop.f32.mrb[0].mxu0
      %v1836 = vadd.f32 0.0, %v1835
      %v1837 = vpop.f32.mrb[0].mxu0
      %v1838 = vadd.f32 0.0, %v1837
      %1839 = vdwg.mxu0
      %v1842 = vcombine.high %v1746, %v1746
      %1843 = vrot.lane.b32.xlu0 %v1746, 17
      %v1844 = vpop.permute.xlu0 %1843
      %1845 = vrot.lane.b32.xlu0 %v1842, 17
      %v1846 = vpop.permute.xlu0 %1845
      %1847 = vrot.lane.b32.xlu0 %v1747, 17
      %v1848 = vpop.permute.xlu0 %1847
      %v1849 = vsel %vm938, %v1844, %v1846
      %v1850 = vsel %vm938, %v1846, %v1848
      %v1852 = vsel %vm850, %v1748, 0
      %v1854 = vsel %vm801, %v1849, 0
      %v1856 = vsel %vm801, %v1850, 0
      %1858 = vmatprep.subr.mxu0 %v1856
      %1859 = vmatpush1.msra.mxu0 %v1854
      %1860 = vmatprep.subr.mxu0 0.0
      %1861 = vmatpush1.msra.mxu0 0.0
      %1862 = vmatprep.subr.mxu0 0.0
      %1863 = vmatpush1.msra.mxu0 0.0
      %1864 = vmatprep.subr.mxu0 0.0
      %1865 = vmatpush1.msra.mxu0 0.0
      %1866 = vmatprep.subr.mxu0 0.0
      %1867 = vmatpush1.msra.mxu0 0.0
      %1868 = vmatprep.subr.mxu0 0.0
      %1869 = vmatpush1.msra.mxu0 0.0
      %1870 = vmatprep.subr.mxu0 0.0
      %1871 = vmatpush1.msra.mxu0 0.0
      %1872 = vmatprep.subr.mxu0 0.0
      %1873 = vmatpush1.msra.mxu0 0.0
      %1874 = vmatprep.subr.mxu0 0.0
      %1875 = vmatpush1.msra.mxu0 0.0
      %1876 = vmatprep.subr.mxu0 0.0
      %1877 = vmatpush1.msra.mxu0 0.0
      %1878 = vmatprep.subr.mxu0 0.0
      %1879 = vmatpush1.msra.mxu0 0.0
      %1880 = vmatprep.subr.mxu0 0.0
      %1881 = vmatpush1.msra.mxu0 0.0
      %1882 = vmatprep.subr.mxu0 0.0
      %1883 = vmatpush1.msra.mxu0 0.0
      %1884 = vmatprep.subr.mxu0 0.0
      %1885 = vmatpush1.msra.mxu0 0.0
      %1886 = vmatprep.subr.mxu0 0.0
      %1887 = vmatpush1.msra.mxu0 0.0
      %1888 = vmatprep.subr.mxu0 0.0
      %1889 = vmatpush1.msra.mxu0 0.0
      %1890 = vmatprep.subr.mxu0 0.0
      %1891 = vmatpush1.msra.mxu0 0.0
      %1892 = vmatprep.subr.mxu0 0.0
      %1893 = vmatpush1.msra.mxu0 0.0
      %1894 = vmatprep.subr.mxu0 0.0
      %1895 = vmatpush1.msra.mxu0 0.0
      %1896 = vmatprep.subr.mxu0 0.0
      %1897 = vmatpush1.msra.mxu0 0.0
      %1898 = vmatprep.subr.mxu0 0.0
      %1899 = vmatpush1.msra.mxu0 0.0
      %1900 = vmatprep.subr.mxu0 0.0
      %1901 = vmatpush1.msra.mxu0 0.0
      %1902 = vmatprep.subr.mxu0 0.0
      %1903 = vmatpush1.msra.mxu0 0.0
      %1904 = vmatprep.subr.mxu0 0.0
      %1905 = vmatpush1.msra.mxu0 0.0
      %1906 = vmatprep.subr.mxu0 0.0
      %1907 = vmatpush1.msra.mxu0 0.0
      %1908 = vmatprep.subr.mxu0 0.0
      %1909 = vmatpush1.msra.mxu0 0.0
      %1910 = vmatprep.subr.mxu0 0.0
      %1911 = vmatpush1.msra.mxu0 0.0
      %1912 = vmatprep.subr.mxu0 0.0
      %1913 = vmatpush1.msra.mxu0 0.0
      %1914 = vmatprep.subr.mxu0 0.0
      %1915 = vmatpush1.msra.mxu0 0.0
      %1916 = vmatprep.subr.mxu0 0.0
      %1917 = vmatpush1.msra.mxu0 0.0
      %1918 = vmatprep.subr.mxu0 0.0
      %1919 = vmatpush1.msra.mxu0 0.0
      %1920 = vmatprep.subr.mxu0 0.0
      %1921 = vmatpush1.msra.mxu0 0.0
      %1922 = vmatprep.mubr.f32.mxu0 0.0
      %1923 = vmatmul.mubr.f32.gmra.mrb[0].mxu0 %v1852
      %v1924 = vpop.f32.mrb[0].mxu0
      %v1925 = vadd.f32 %v1836, %v1924
      %v1926 = vpop.f32.mrb[0].mxu0
      %v1927 = vadd.f32 %v1838, %v1926
      %1928 = vdwg.mxu0
      %v1929 = vld [vmem:[#allocation2] sm:$0xff]
      %v1930 = vld [vmem:[#allocation2 + $0x8] sm:$0xf]
      %v1931 = vmul.f32 %v1929, %v1035
      %v1932 = vmul.f32 %v1930, %v1033
      %s1933 = scalar_lea.vmem %s8, 8
      %v1934 = vld [vmem:[%s1933] sm:$0xf]
      %v1937 = vcombine.high %v1931, %v1931
      %1938 = vrot.lane.b32.xlu0 %v1931, 15
      %v1939 = vpop.permute.xlu0 %1938
      %1940 = vrot.lane.b32.xlu0 %v1937, 15
      %v1941 = vpop.permute.xlu0 %1940
      %1942 = vrot.lane.b32.xlu0 %v1932, 15
      %v1943 = vpop.permute.xlu0 %1942
      %v1944 = vsel %vm1051, %v1939, %v1941
      %v1945 = vsel %vm1051, %v1941, %v1943
      %v1947 = vsel %vm850, %v1934, 0
      %v1949 = vsel %vm801, %v1944, 0
      %v1951 = vsel %vm801, %v1945, 0
      %1953 = vmatprep.subr.mxu0 %v1951
      %1954 = vmatpush1.msra.mxu0 %v1949
      %1955 = vmatprep.subr.mxu0 0.0
      %1956 = vmatpush1.msra.mxu0 0.0
      %1957 = vmatprep.subr.mxu0 0.0
      %1958 = vmatpush1.msra.mxu0 0.0
      %1959 = vmatprep.subr.mxu0 0.0
      %1960 = vmatpush1.msra.mxu0 0.0
      %1961 = vmatprep.subr.mxu0 0.0
      %1962 = vmatpush1.msra.mxu0 0.0
      %1963 = vmatprep.subr.mxu0 0.0
      %1964 = vmatpush1.msra.mxu0 0.0
      %1965 = vmatprep.subr.mxu0 0.0
      %1966 = vmatpush1.msra.mxu0 0.0
      %1967 = vmatprep.subr.mxu0 0.0
      %1968 = vmatpush1.msra.mxu0 0.0
      %1969 = vmatprep.subr.mxu0 0.0
      %1970 = vmatpush1.msra.mxu0 0.0
      %1971 = vmatprep.subr.mxu0 0.0
      %1972 = vmatpush1.msra.mxu0 0.0
      %1973 = vmatprep.subr.mxu0 0.0
      %1974 = vmatpush1.msra.mxu0 0.0
      %1975 = vmatprep.subr.mxu0 0.0
      %1976 = vmatpush1.msra.mxu0 0.0
      %1977 = vmatprep.subr.mxu0 0.0
      %1978 = vmatpush1.msra.mxu0 0.0
      %1979 = vmatprep.subr.mxu0 0.0
      %1980 = vmatpush1.msra.mxu0 0.0
      %1981 = vmatprep.subr.mxu0 0.0
      %1982 = vmatpush1.msra.mxu0 0.0
      %1983 = vmatprep.subr.mxu0 0.0
      %1984 = vmatpush1.msra.mxu0 0.0
      %1985 = vmatprep.subr.mxu0 0.0
      %1986 = vmatpush1.msra.mxu0 0.0
      %1987 = vmatprep.subr.mxu0 0.0
      %1988 = vmatpush1.msra.mxu0 0.0
      %1989 = vmatprep.subr.mxu0 0.0
      %1990 = vmatpush1.msra.mxu0 0.0
      %1991 = vmatprep.subr.mxu0 0.0
      %1992 = vmatpush1.msra.mxu0 0.0
      %1993 = vmatprep.subr.mxu0 0.0
      %1994 = vmatpush1.msra.mxu0 0.0
      %1995 = vmatprep.subr.mxu0 0.0
      %1996 = vmatpush1.msra.mxu0 0.0
      %1997 = vmatprep.subr.mxu0 0.0
      %1998 = vmatpush1.msra.mxu0 0.0
      %1999 = vmatprep.subr.mxu0 0.0
      %2000 = vmatpush1.msra.mxu0 0.0
      %2001 = vmatprep.subr.mxu0 0.0
      %2002 = vmatpush1.msra.mxu0 0.0
      %2003 = vmatprep.subr.mxu0 0.0
      %2004 = vmatpush1.msra.mxu0 0.0
      %2005 = vmatprep.subr.mxu0 0.0
      %2006 = vmatpush1.msra.mxu0 0.0
      %2007 = vmatprep.subr.mxu0 0.0
      %2008 = vmatpush1.msra.mxu0 0.0
      %2009 = vmatprep.subr.mxu0 0.0
      %2010 = vmatpush1.msra.mxu0 0.0
      %2011 = vmatprep.subr.mxu0 0.0
      %2012 = vmatpush1.msra.mxu0 0.0
      %2013 = vmatprep.subr.mxu0 0.0
      %2014 = vmatpush1.msra.mxu0 0.0
      %2015 = vmatprep.subr.mxu0 0.0
      %2016 = vmatpush1.msra.mxu0 0.0
      %2017 = vmatprep.mubr.f32.mxu0 0.0
      %2018 = vmatmul.mubr.f32.gmra.mrb[0].mxu0 %v1947
      %v2019 = vpop.f32.mrb[0].mxu0
      %v2020 = vadd.f32 0.0, %v2019
      %v2021 = vpop.f32.mrb[0].mxu0
      %v2022 = vadd.f32 0.0, %v2021
      %2023 = vdwg.mxu0
      %v2024 = vadd.f32 %v1925, %v2020
      %v2025 = vadd.f32 %v1927, %v2022
      %v2026 = vld [vmem:[#allocation2] sm:$0xff]
      %v2027 = vld [vmem:[#allocation2 + $0x8] sm:$0xf]
      %v2028 = vmul.f32 %v2026, %v1140
      %v2029 = vmul.f32 %v2027, %v1138
      %s2030 = scalar_lea.vmem %s8, 12
      %v2031 = vld [vmem:[%s2030] sm:$0xf]
      %v2034 = vcombine.high %v2028, %v2028
      %2035 = vrot.lane.b32.xlu0 %v2028, 1
      %v2036 = vpop.permute.xlu0 %2035
      %2037 = vrot.lane.b32.xlu0 %v2034, 1
      %v2038 = vpop.permute.xlu0 %2037
      %2039 = vrot.lane.b32.xlu0 %v2029, 1
      %v2040 = vpop.permute.xlu0 %2039
      %v2041 = vsel %vm1156, %v2036, %v2038
      %v2042 = vsel %vm1156, %v2038, %v2040
      %v2044 = vsel %vm850, %v2031, 0
      %v2046 = vsel %vm801, %v2041, 0
      %v2048 = vsel %vm801, %v2042, 0
      %2050 = vmatprep.subr.mxu0 %v2048
      %2051 = vmatpush1.msra.mxu0 %v2046
      %2052 = vmatprep.subr.mxu0 0.0
      %2053 = vmatpush1.msra.mxu0 0.0
      %2054 = vmatprep.subr.mxu0 0.0
      %2055 = vmatpush1.msra.mxu0 0.0
      %2056 = vmatprep.subr.mxu0 0.0
      %2057 = vmatpush1.msra.mxu0 0.0
      %2058 = vmatprep.subr.mxu0 0.0
      %2059 = vmatpush1.msra.mxu0 0.0
      %2060 = vmatprep.subr.mxu0 0.0
      %2061 = vmatpush1.msra.mxu0 0.0
      %2062 = vmatprep.subr.mxu0 0.0
      %2063 = vmatpush1.msra.mxu0 0.0
      %2064 = vmatprep.subr.mxu0 0.0
      %2065 = vmatpush1.msra.mxu0 0.0
      %2066 = vmatprep.subr.mxu0 0.0
      %2067 = vmatpush1.msra.mxu0 0.0
      %2068 = vmatprep.subr.mxu0 0.0
      %2069 = vmatpush1.msra.mxu0 0.0
      %2070 = vmatprep.subr.mxu0 0.0
      %2071 = vmatpush1.msra.mxu0 0.0
      %2072 = vmatprep.subr.mxu0 0.0
      %2073 = vmatpush1.msra.mxu0 0.0
      %2074 = vmatprep.subr.mxu0 0.0
      %2075 = vmatpush1.msra.mxu0 0.0
      %2076 = vmatprep.subr.mxu0 0.0
      %2077 = vmatpush1.msra.mxu0 0.0
      %2078 = vmatprep.subr.mxu0 0.0
      %2079 = vmatpush1.msra.mxu0 0.0
      %2080 = vmatprep.subr.mxu0 0.0
      %2081 = vmatpush1.msra.mxu0 0.0
      %2082 = vmatprep.subr.mxu0 0.0
      %2083 = vmatpush1.msra.mxu0 0.0
      %2084 = vmatprep.subr.mxu0 0.0
      %2085 = vmatpush1.msra.mxu0 0.0
      %2086 = vmatprep.subr.mxu0 0.0
      %2087 = vmatpush1.msra.mxu0 0.0
      %2088 = vmatprep.subr.mxu0 0.0
      %2089 = vmatpush1.msra.mxu0 0.0
      %2090 = vmatprep.subr.mxu0 0.0
      %2091 = vmatpush1.msra.mxu0 0.0
      %2092 = vmatprep.subr.mxu0 0.0
      %2093 = vmatpush1.msra.mxu0 0.0
      %2094 = vmatprep.subr.mxu0 0.0
      %2095 = vmatpush1.msra.mxu0 0.0
      %2096 = vmatprep.subr.mxu0 0.0
      %2097 = vmatpush1.msra.mxu0 0.0
      %2098 = vmatprep.subr.mxu0 0.0
      %2099 = vmatpush1.msra.mxu0 0.0
      %2100 = vmatprep.subr.mxu0 0.0
      %2101 = vmatpush1.msra.mxu0 0.0
      %2102 = vmatprep.subr.mxu0 0.0
      %2103 = vmatpush1.msra.mxu0 0.0
      %2104 = vmatprep.subr.mxu0 0.0
      %2105 = vmatpush1.msra.mxu0 0.0
      %2106 = vmatprep.subr.mxu0 0.0
      %2107 = vmatpush1.msra.mxu0 0.0
      %2108 = vmatprep.subr.mxu0 0.0
      %2109 = vmatpush1.msra.mxu0 0.0
      %2110 = vmatprep.subr.mxu0 0.0
      %2111 = vmatpush1.msra.mxu0 0.0
      %2112 = vmatprep.subr.mxu0 0.0
      %2113 = vmatpush1.msra.mxu0 0.0
      %2114 = vmatprep.mubr.f32.mxu0 0.0
      %2115 = vmatmul.mubr.f32.gmra.mrb[0].mxu0 %v2044
      %v2116 = vpop.f32.mrb[0].mxu0
      %v2117 = vadd.f32 0.0, %v2116
      %v2118 = vpop.f32.mrb[0].mxu0
      %v2119 = vadd.f32 0.0, %v2118
      %2120 = vdwg.mxu0
      %v2121 = vadd.f32 %v2024, %v2117
      %v2122 = vadd.f32 %v2025, %v2119
      %v2123 = vld [vmem:[#allocation2 + $0x4] sm:$0xff]
      %s2124 = scalar_lea.vmem %s8, 16
      %v2125 = vld [vmem:[%s2124] sm:$0xf]
      %v2127 = vcombine.high %v2123, %v2123
      %v2129 = vsel %vm850, %v2125, 0
      %v2131 = vsel %vm801, %v2123, 0
      %v2133 = vsel %vm801, %v2127, 0
      %2135 = vmatprep.subr.mxu0 %v2133
      %2136 = vmatpush1.msra.mxu0 %v2131
      %2137 = vmatprep.subr.mxu0 0.0
      %2138 = vmatpush1.msra.mxu0 0.0
      %2139 = vmatprep.subr.mxu0 0.0
      %2140 = vmatpush1.msra.mxu0 0.0
      %2141 = vmatprep.subr.mxu0 0.0
      %2142 = vmatpush1.msra.mxu0 0.0
      %2143 = vmatprep.subr.mxu0 0.0
      %2144 = vmatpush1.msra.mxu0 0.0
      %2145 = vmatprep.subr.mxu0 0.0
      %2146 = vmatpush1.msra.mxu0 0.0
      %2147 = vmatprep.subr.mxu0 0.0
      %2148 = vmatpush1.msra.mxu0 0.0
      %2149 = vmatprep.subr.mxu0 0.0
      %2150 = vmatpush1.msra.mxu0 0.0
      %2151 = vmatprep.subr.mxu0 0.0
      %2152 = vmatpush1.msra.mxu0 0.0
      %2153 = vmatprep.subr.mxu0 0.0
      %2154 = vmatpush1.msra.mxu0 0.0
      %2155 = vmatprep.subr.mxu0 0.0
      %2156 = vmatpush1.msra.mxu0 0.0
      %2157 = vmatprep.subr.mxu0 0.0
      %2158 = vmatpush1.msra.mxu0 0.0
      %2159 = vmatprep.subr.mxu0 0.0
      %2160 = vmatpush1.msra.mxu0 0.0
      %2161 = vmatprep.subr.mxu0 0.0
      %2162 = vmatpush1.msra.mxu0 0.0
      %2163 = vmatprep.subr.mxu0 0.0
      %2164 = vmatpush1.msra.mxu0 0.0
      %2165 = vmatprep.subr.mxu0 0.0
      %2166 = vmatpush1.msra.mxu0 0.0
      %2167 = vmatprep.subr.mxu0 0.0
      %2168 = vmatpush1.msra.mxu0 0.0
      %2169 = vmatprep.subr.mxu0 0.0
      %2170 = vmatpush1.msra.mxu0 0.0
      %2171 = vmatprep.subr.mxu0 0.0
      %2172 = vmatpush1.msra.mxu0 0.0
      %2173 = vmatprep.subr.mxu0 0.0
      %2174 = vmatpush1.msra.mxu0 0.0
      %2175 = vmatprep.subr.mxu0 0.0
      %2176 = vmatpush1.msra.mxu0 0.0
      %2177 = vmatprep.subr.mxu0 0.0
      %2178 = vmatpush1.msra.mxu0 0.0
      %2179 = vmatprep.subr.mxu0 0.0
      %2180 = vmatpush1.msra.mxu0 0.0
      %2181 = vmatprep.subr.mxu0 0.0
      %2182 = vmatpush1.msra.mxu0 0.0
      %2183 = vmatprep.subr.mxu0 0.0
      %2184 = vmatpush1.msra.mxu0 0.0
      %2185 = vmatprep.subr.mxu0 0.0
      %2186 = vmatpush1.msra.mxu0 0.0
      %2187 = vmatprep.subr.mxu0 0.0
      %2188 = vmatpush1.msra.mxu0 0.0
      %2189 = vmatprep.subr.mxu0 0.0
      %2190 = vmatpush1.msra.mxu0 0.0
      %2191 = vmatprep.subr.mxu0 0.0
      %2192 = vmatpush1.msra.mxu0 0.0
      %2193 = vmatprep.subr.mxu0 0.0
      %2194 = vmatpush1.msra.mxu0 0.0
      %2195 = vmatprep.subr.mxu0 0.0
      %2196 = vmatpush1.msra.mxu0 0.0
      %2197 = vmatprep.subr.mxu0 0.0
      %2198 = vmatpush1.msra.mxu0 0.0
      %2199 = vmatprep.mubr.f32.mxu0 0.0
      %2200 = vmatmul.mubr.f32.gmra.mrb[0].mxu0 %v2129
      %v2201 = vpop.f32.mrb[0].mxu0
      %v2202 = vadd.f32 0.0, %v2201
      %v2203 = vpop.f32.mrb[0].mxu0
      %v2204 = vadd.f32 0.0, %v2203
      %2205 = vdwg.mxu0
      %v2206 = vadd.f32 %v2121, %v2202
      %v2207 = vadd.f32 %v2122, %v2204
      %v2208 = vld [vmem:[#allocation2 + $0x4] sm:$0xff]
      %v2209 = vld [vmem:[#allocation2 + $0xc] sm:$0xf]
      %v2210 = vmul.f32 %v2208, %v1329
      %v2211 = vmul.f32 %v2209, %v1328
      %s2212 = scalar_lea.vmem %s8, 20
      %v2213 = vld [vmem:[%s2212] sm:$0xf]
      %v2216 = vcombine.high %v2210, %v2210
      %2217 = vrot.lane.b32.xlu0 %v2210, 127
      %v2218 = vpop.permute.xlu0 %2217
      %2219 = vrot.lane.b32.xlu0 %v2216, 127
      %v2220 = vpop.permute.xlu0 %2219
      %2221 = vrot.lane.b32.xlu0 %v2211, 127
      %v2222 = vpop.permute.xlu0 %2221
      %v2223 = vsel %vm1139, %v2218, %v2220
      %v2224 = vsel %vm1139, %v2220, %v2222
      %v2226 = vsel %vm850, %v2213, 0
      %v2228 = vsel %vm801, %v2223, 0
      %v2230 = vsel %vm801, %v2224, 0
      %2232 = vmatprep.subr.mxu0 %v2230
      %2233 = vmatpush1.msra.mxu0 %v2228
      %2234 = vmatprep.subr.mxu0 0.0
      %2235 = vmatpush1.msra.mxu0 0.0
      %2236 = vmatprep.subr.mxu0 0.0
      %2237 = vmatpush1.msra.mxu0 0.0
      %2238 = vmatprep.subr.mxu0 0.0
      %2239 = vmatpush1.msra.mxu0 0.0
      %2240 = vmatprep.subr.mxu0 0.0
      %2241 = vmatpush1.msra.mxu0 0.0
      %2242 = vmatprep.subr.mxu0 0.0
      %2243 = vmatpush1.msra.mxu0 0.0
      %2244 = vmatprep.subr.mxu0 0.0
      %2245 = vmatpush1.msra.mxu0 0.0
      %2246 = vmatprep.subr.mxu0 0.0
      %2247 = vmatpush1.msra.mxu0 0.0
      %2248 = vmatprep.subr.mxu0 0.0
      %2249 = vmatpush1.msra.mxu0 0.0
      %2250 = vmatprep.subr.mxu0 0.0
      %2251 = vmatpush1.msra.mxu0 0.0
      %2252 = vmatprep.subr.mxu0 0.0
      %2253 = vmatpush1.msra.mxu0 0.0
      %2254 = vmatprep.subr.mxu0 0.0
      %2255 = vmatpush1.msra.mxu0 0.0
      %2256 = vmatprep.subr.mxu0 0.0
      %2257 = vmatpush1.msra.mxu0 0.0
      %2258 = vmatprep.subr.mxu0 0.0
      %2259 = vmatpush1.msra.mxu0 0.0
      %2260 = vmatprep.subr.mxu0 0.0
      %2261 = vmatpush1.msra.mxu0 0.0
      %2262 = vmatprep.subr.mxu0 0.0
      %2263 = vmatpush1.msra.mxu0 0.0
      %2264 = vmatprep.subr.mxu0 0.0
      %2265 = vmatpush1.msra.mxu0 0.0
      %2266 = vmatprep.subr.mxu0 0.0
      %2267 = vmatpush1.msra.mxu0 0.0
      %2268 = vmatprep.subr.mxu0 0.0
      %2269 = vmatpush1.msra.mxu0 0.0
      %2270 = vmatprep.subr.mxu0 0.0
      %2271 = vmatpush1.msra.mxu0 0.0
      %2272 = vmatprep.subr.mxu0 0.0
      %2273 = vmatpush1.msra.mxu0 0.0
      %2274 = vmatprep.subr.mxu0 0.0
      %2275 = vmatpush1.msra.mxu0 0.0
      %2276 = vmatprep.subr.mxu0 0.0
      %2277 = vmatpush1.msra.mxu0 0.0
      %2278 = vmatprep.subr.mxu0 0.0
      %2279 = vmatpush1.msra.mxu0 0.0
      %2280 = vmatprep.subr.mxu0 0.0
      %2281 = vmatpush1.msra.mxu0 0.0
      %2282 = vmatprep.subr.mxu0 0.0
      %2283 = vmatpush1.msra.mxu0 0.0
      %2284 = vmatprep.subr.mxu0 0.0
      %2285 = vmatpush1.msra.mxu0 0.0
      %2286 = vmatprep.subr.mxu0 0.0
      %2287 = vmatpush1.msra.mxu0 0.0
      %2288 = vmatprep.subr.mxu0 0.0
      %2289 = vmatpush1.msra.mxu0 0.0
      %2290 = vmatprep.subr.mxu0 0.0
      %2291 = vmatpush1.msra.mxu0 0.0
      %2292 = vmatprep.subr.mxu0 0.0
      %2293 = vmatpush1.msra.mxu0 0.0
      %2294 = vmatprep.subr.mxu0 0.0
      %2295 = vmatpush1.msra.mxu0 0.0
      %2296 = vmatprep.mubr.f32.mxu0 0.0
      %2297 = vmatmul.mubr.f32.gmra.mrb[0].mxu0 %v2226
      %v2298 = vpop.f32.mrb[0].mxu0
      %v2299 = vadd.f32 0.0, %v2298
      %v2300 = vpop.f32.mrb[0].mxu0
      %v2301 = vadd.f32 0.0, %v2300
      %2302 = vdwg.mxu0
      %v2303 = vadd.f32 %v2206, %v2299
      %v2304 = vadd.f32 %v2207, %v2301
      %v2305 = vld [vmem:[#allocation2 + $0x4] sm:$0xff]
      %v2306 = vld [vmem:[#allocation2 + $0xc] sm:$0xf]
      %v2307 = vmul.f32 %v2305, %v1432
      %v2308 = vmul.f32 %v2306, %v1431
      %s2309 = scalar_lea.vmem %s8, 24
      %v2310 = vld [vmem:[%s2309] sm:$0xf]
      %v2313 = vcombine.high %v2307, %v2307
      %2314 = vrot.lane.b32.xlu0 %v2307, 113
      %v2315 = vpop.permute.xlu0 %2314
      %2316 = vrot.lane.b32.xlu0 %v2313, 113
      %v2317 = vpop.permute.xlu0 %2316
      %2318 = vrot.lane.b32.xlu0 %v2308, 113
      %v2319 = vpop.permute.xlu0 %2318
      %v2320 = vsel %vm1034, %v2315, %v2317
      %v2321 = vsel %vm1034, %v2317, %v2319
      %v2323 = vsel %vm850, %v2310, 0
      %v2325 = vsel %vm801, %v2320, 0
      %v2327 = vsel %vm801, %v2321, 0
      %2329 = vmatprep.subr.mxu0 %v2327
      %2330 = vmatpush1.msra.mxu0 %v2325
      %2331 = vmatprep.subr.mxu0 0.0
      %2332 = vmatpush1.msra.mxu0 0.0
      %2333 = vmatprep.subr.mxu0 0.0
      %2334 = vmatpush1.msra.mxu0 0.0
      %2335 = vmatprep.subr.mxu0 0.0
      %2336 = vmatpush1.msra.mxu0 0.0
      %2337 = vmatprep.subr.mxu0 0.0
      %2338 = vmatpush1.msra.mxu0 0.0
      %2339 = vmatprep.subr.mxu0 0.0
      %2340 = vmatpush1.msra.mxu0 0.0
      %2341 = vmatprep.subr.mxu0 0.0
      %2342 = vmatpush1.msra.mxu0 0.0
      %2343 = vmatprep.subr.mxu0 0.0
      %2344 = vmatpush1.msra.mxu0 0.0
      %2345 = vmatprep.subr.mxu0 0.0
      %2346 = vmatpush1.msra.mxu0 0.0
      %2347 = vmatprep.subr.mxu0 0.0
      %2348 = vmatpush1.msra.mxu0 0.0
      %2349 = vmatprep.subr.mxu0 0.0
      %2350 = vmatpush1.msra.mxu0 0.0
      %2351 = vmatprep.subr.mxu0 0.0
      %2352 = vmatpush1.msra.mxu0 0.0
      %2353 = vmatprep.subr.mxu0 0.0
      %2354 = vmatpush1.msra.mxu0 0.0
      %2355 = vmatprep.subr.mxu0 0.0
      %2356 = vmatpush1.msra.mxu0 0.0
      %2357 = vmatprep.subr.mxu0 0.0
      %2358 = vmatpush1.msra.mxu0 0.0
      %2359 = vmatprep.subr.mxu0 0.0
      %2360 = vmatpush1.msra.mxu0 0.0
      %2361 = vmatprep.subr.mxu0 0.0
      %2362 = vmatpush1.msra.mxu0 0.0
      %2363 = vmatprep.subr.mxu0 0.0
      %2364 = vmatpush1.msra.mxu0 0.0
      %2365 = vmatprep.subr.mxu0 0.0
      %2366 = vmatpush1.msra.mxu0 0.0
      %2367 = vmatprep.subr.mxu0 0.0
      %2368 = vmatpush1.msra.mxu0 0.0
      %2369 = vmatprep.subr.mxu0 0.0
      %2370 = vmatpush1.msra.mxu0 0.0
      %2371 = vmatprep.subr.mxu0 0.0
      %2372 = vmatpush1.msra.mxu0 0.0
      %2373 = vmatprep.subr.mxu0 0.0
      %2374 = vmatpush1.msra.mxu0 0.0
      %2375 = vmatprep.subr.mxu0 0.0
      %2376 = vmatpush1.msra.mxu0 0.0
      %2377 = vmatprep.subr.mxu0 0.0
      %2378 = vmatpush1.msra.mxu0 0.0
      %2379 = vmatprep.subr.mxu0 0.0
      %2380 = vmatpush1.msra.mxu0 0.0
      %2381 = vmatprep.subr.mxu0 0.0
      %2382 = vmatpush1.msra.mxu0 0.0
      %2383 = vmatprep.subr.mxu0 0.0
      %2384 = vmatpush1.msra.mxu0 0.0
      %2385 = vmatprep.subr.mxu0 0.0
      %2386 = vmatpush1.msra.mxu0 0.0
      %2387 = vmatprep.subr.mxu0 0.0
      %2388 = vmatpush1.msra.mxu0 0.0
      %2389 = vmatprep.subr.mxu0 0.0
      %2390 = vmatpush1.msra.mxu0 0.0
      %2391 = vmatprep.subr.mxu0 0.0
      %2392 = vmatpush1.msra.mxu0 0.0
      %2393 = vmatprep.mubr.f32.mxu0 0.0
      %2394 = vmatmul.mubr.f32.gmra.mrb[0].mxu0 %v2323
      %v2395 = vpop.f32.mrb[0].mxu0
      %v2396 = vadd.f32 0.0, %v2395
      %v2397 = vpop.f32.mrb[0].mxu0
      %v2398 = vadd.f32 0.0, %v2397
      %2399 = vdwg.mxu0
      %v2400 = vadd.f32 %v2303, %v2396
      %v2401 = vadd.f32 %v2304, %v2398
      %v2402 = vld [vmem:[#allocation2 + $0x4] sm:$0xff]
      %v2403 = vld [vmem:[#allocation2 + $0xc] sm:$0xf]
      %s2404 = scalar_lea.vmem %s8, 28
      %v2405 = vld [vmem:[%s2404] sm:$0xf]
      %v2408 = vcombine.high %v2402, %v2402
      %2409 = vrot.lane.b32.xlu0 %v2402, 112
      %v2410 = vpop.permute.xlu0 %2409
      %2411 = vrot.lane.b32.xlu0 %v2408, 112
      %v2412 = vpop.permute.xlu0 %2411
      %2413 = vrot.lane.b32.xlu0 %v2403, 112
      %v2414 = vpop.permute.xlu0 %2413
      %v2415 = vsel %vm1543, %v2410, %v2412
      %v2416 = vsel %vm1543, %v2412, %v2414
      %v2418 = vsel %vm850, %v2405, 0
      %v2420 = vsel %vm801, %v2415, 0
      %v2422 = vsel %vm801, %v2416, 0
      %2424 = vmatprep.subr.mxu0 %v2422
      %2425 = vmatpush1.msra.mxu0 %v2420
      %2426 = vmatprep.subr.mxu0 0.0
      %2427 = vmatpush1.msra.mxu0 0.0
      %2428 = vmatprep.subr.mxu0 0.0
      %2429 = vmatpush1.msra.mxu0 0.0
      %2430 = vmatprep.subr.mxu0 0.0
      %2431 = vmatpush1.msra.mxu0 0.0
      %2432 = vmatprep.subr.mxu0 0.0
      %2433 = vmatpush1.msra.mxu0 0.0
      %2434 = vmatprep.subr.mxu0 0.0
      %2435 = vmatpush1.msra.mxu0 0.0
      %2436 = vmatprep.subr.mxu0 0.0
      %2437 = vmatpush1.msra.mxu0 0.0
      %2438 = vmatprep.subr.mxu0 0.0
      %2439 = vmatpush1.msra.mxu0 0.0
      %2440 = vmatprep.subr.mxu0 0.0
      %2441 = vmatpush1.msra.mxu0 0.0
      %2442 = vmatprep.subr.mxu0 0.0
      %2443 = vmatpush1.msra.mxu0 0.0
      %2444 = vmatprep.subr.mxu0 0.0
      %2445 = vmatpush1.msra.mxu0 0.0
      %2446 = vmatprep.subr.mxu0 0.0
      %2447 = vmatpush1.msra.mxu0 0.0
      %2448 = vmatprep.subr.mxu0 0.0
      %2449 = vmatpush1.msra.mxu0 0.0
      %2450 = vmatprep.subr.mxu0 0.0
      %2451 = vmatpush1.msra.mxu0 0.0
      %2452 = vmatprep.subr.mxu0 0.0
      %2453 = vmatpush1.msra.mxu0 0.0
      %2454 = vmatprep.subr.mxu0 0.0
      %2455 = vmatpush1.msra.mxu0 0.0
      %2456 = vmatprep.subr.mxu0 0.0
      %2457 = vmatpush1.msra.mxu0 0.0
      %2458 = vmatprep.subr.mxu0 0.0
      %2459 = vmatpush1.msra.mxu0 0.0
      %2460 = vmatprep.subr.mxu0 0.0
      %2461 = vmatpush1.msra.mxu0 0.0
      %2462 = vmatprep.subr.mxu0 0.0
      %2463 = vmatpush1.msra.mxu0 0.0
      %2464 = vmatprep.subr.mxu0 0.0
      %2465 = vmatpush1.msra.mxu0 0.0
      %2466 = vmatprep.subr.mxu0 0.0
      %2467 = vmatpush1.msra.mxu0 0.0
      %2468 = vmatprep.subr.mxu0 0.0
      %2469 = vmatpush1.msra.mxu0 0.0
      %2470 = vmatprep.subr.mxu0 0.0
      %2471 = vmatpush1.msra.mxu0 0.0
      %2472 = vmatprep.subr.mxu0 0.0
      %2473 = vmatpush1.msra.mxu0 0.0
      %2474 = vmatprep.subr.mxu0 0.0
      %2475 = vmatpush1.msra.mxu0 0.0
      %2476 = vmatprep.subr.mxu0 0.0
      %2477 = vmatpush1.msra.mxu0 0.0
      %2478 = vmatprep.subr.mxu0 0.0
      %2479 = vmatpush1.msra.mxu0 0.0
      %2480 = vmatprep.subr.mxu0 0.0
      %2481 = vmatpush1.msra.mxu0 0.0
      %2482 = vmatprep.subr.mxu0 0.0
      %2483 = vmatpush1.msra.mxu0 0.0
      %2484 = vmatprep.subr.mxu0 0.0
      %2485 = vmatpush1.msra.mxu0 0.0
      %2486 = vmatprep.subr.mxu0 0.0
      %2487 = vmatpush1.msra.mxu0 0.0
      %2488 = vmatprep.mubr.f32.mxu0 0.0
      %2489 = vmatmul.mubr.f32.gmra.mrb[0].mxu0 %v2418
      %v2490 = vpop.f32.mrb[0].mxu0
      %v2491 = vadd.f32 0.0, %v2490
      %v2492 = vpop.f32.mrb[0].mxu0
      %v2493 = vadd.f32 0.0, %v2492
      %2494 = vdwg.mxu0
      %v2495 = vadd.f32 %v2400, %v2491
      %v2496 = vadd.f32 %v2401, %v2493
      %v2497 = vld [vmem:[#allocation2 + $0x4] sm:$0xff]
      %v2498 = vld [vmem:[#allocation2 + $0xc] sm:$0xf]
      %v2499 = vmul.f32 %v2497, %v1631
      %v2500 = vmul.f32 %v2498, %v1630
      %s2501 = scalar_lea.vmem %s8, 32
      %v2502 = vld [vmem:[%s2501] sm:$0xf]
      %v2505 = vcombine.high %v2499, %v2499
      %2506 = vrot.lane.b32.xlu0 %v2499, 111
      %v2507 = vpop.permute.xlu0 %2506
      %2508 = vrot.lane.b32.xlu0 %v2505, 111
      %v2509 = vpop.permute.xlu0 %2508
      %2510 = vrot.lane.b32.xlu0 %v2500, 111
      %v2511 = vpop.permute.xlu0 %2510
      %v2512 = vsel %vm829, %v2507, %v2509
      %v2513 = vsel %vm829, %v2509, %v2511
      %v2515 = vsel %vm850, %v2502, 0
      %v2517 = vsel %vm801, %v2512, 0
      %v2519 = vsel %vm801, %v2513, 0
      %2521 = vmatprep.subr.mxu0 %v2519
      %2522 = vmatpush1.msra.mxu0 %v2517
      %2523 = vmatprep.subr.mxu0 0.0
      %2524 = vmatpush1.msra.mxu0 0.0
      %2525 = vmatprep.subr.mxu0 0.0
      %2526 = vmatpush1.msra.mxu0 0.0
      %2527 = vmatprep.subr.mxu0 0.0
      %2528 = vmatpush1.msra.mxu0 0.0
      %2529 = vmatprep.subr.mxu0 0.0
      %2530 = vmatpush1.msra.mxu0 0.0
      %2531 = vmatprep.subr.mxu0 0.0
      %2532 = vmatpush1.msra.mxu0 0.0
      %2533 = vmatprep.subr.mxu0 0.0
      %2534 = vmatpush1.msra.mxu0 0.0
      %2535 = vmatprep.subr.mxu0 0.0
      %2536 = vmatpush1.msra.mxu0 0.0
      %2537 = vmatprep.subr.mxu0 0.0
      %2538 = vmatpush1.msra.mxu0 0.0
      %2539 = vmatprep.subr.mxu0 0.0
      %2540 = vmatpush1.msra.mxu0 0.0
      %2541 = vmatprep.subr.mxu0 0.0
      %2542 = vmatpush1.msra.mxu0 0.0
      %2543 = vmatprep.subr.mxu0 0.0
      %2544 = vmatpush1.msra.mxu0 0.0
      %2545 = vmatprep.subr.mxu0 0.0
      %2546 = vmatpush1.msra.mxu0 0.0
      %2547 = vmatprep.subr.mxu0 0.0
      %2548 = vmatpush1.msra.mxu0 0.0
      %2549 = vmatprep.subr.mxu0 0.0
      %2550 = vmatpush1.msra.mxu0 0.0
      %2551 = vmatprep.subr.mxu0 0.0
      %2552 = vmatpush1.msra.mxu0 0.0
      %2553 = vmatprep.subr.mxu0 0.0
      %2554 = vmatpush1.msra.mxu0 0.0
      %2555 = vmatprep.subr.mxu0 0.0
      %2556 = vmatpush1.msra.mxu0 0.0
      %2557 = vmatprep.subr.mxu0 0.0
      %2558 = vmatpush1.msra.mxu0 0.0
      %2559 = vmatprep.subr.mxu0 0.0
      %2560 = vmatpush1.msra.mxu0 0.0
      %2561 = vmatprep.subr.mxu0 0.0
      %2562 = vmatpush1.msra.mxu0 0.0
      %2563 = vmatprep.subr.mxu0 0.0
      %2564 = vmatpush1.msra.mxu0 0.0
      %2565 = vmatprep.subr.mxu0 0.0
      %2566 = vmatpush1.msra.mxu0 0.0
      %2567 = vmatprep.subr.mxu0 0.0
      %2568 = vmatpush1.msra.mxu0 0.0
      %2569 = vmatprep.subr.mxu0 0.0
      %2570 = vmatpush1.msra.mxu0 0.0
      %2571 = vmatprep.subr.mxu0 0.0
      %2572 = vmatpush1.msra.mxu0 0.0
      %2573 = vmatprep.subr.mxu0 0.0
      %2574 = vmatpush1.msra.mxu0 0.0
      %2575 = vmatprep.subr.mxu0 0.0
      %2576 = vmatpush1.msra.mxu0 0.0
      %2577 = vmatprep.subr.mxu0 0.0
      %2578 = vmatpush1.msra.mxu0 0.0
      %2579 = vmatprep.subr.mxu0 0.0
      %2580 = vmatpush1.msra.mxu0 0.0
      %2581 = vmatprep.subr.mxu0 0.0
      %2582 = vmatpush1.msra.mxu0 0.0
      %2583 = vmatprep.subr.mxu0 0.0
      %2584 = vmatpush1.msra.mxu0 0.0
      %2585 = vmatprep.mubr.f32.mxu0 0.0
      %2586 = vmatmul.mubr.f32.gmra.mrb[0].mxu0 %v2515
      %v2587 = vpop.f32.mrb[0].mxu0
      %v2588 = vadd.f32 0.0, %v2587
      %v2589 = vpop.f32.mrb[0].mxu0
      %v2590 = vadd.f32 0.0, %v2589
      %2591 = vdwg.mxu0
      %v2592 = vadd.f32 %v2495, %v2588
      %v2593 = vadd.f32 %v2496, %v2590
      %v2594 = vld [vmem:[%s9] sm:$0xf]
      %2596 = vset.pattern.permute.xlu0 0
      %2597 = vperm.xlu0 %2596, %v2594
      %v2598 = vpop.permute.xlu0 %2597
      %v2600 = vadd.f32 %v2592, %v2598
      %v2601 = vadd.f32 %v2593, %v2598
      %vm2602 = vcmp.ge.f32.partialorder %v2600, 0.0
      %vm2603 = vcmp.ge.f32.partialorder %v2601, 0.0
      %v2604 = vmul.f32 %v2600, 0.01
      %v2605 = vmul.f32 %v2601, 0.01
      %v2606 = vsel %vm2602, %v2600, %v2604
      %v2607 = vsel %vm2603, %v2601, %v2605
      %v2608 = vadd.f32 %v1741, %v2606
      %v2609 = vadd.f32 %v1742, %v2607
      %v2612 = vcombine.low %v2608, %v2609
      %2614 = vst [vmem:[%s787] sm:$0xff] %v2612
      %v2615 = vld [vmem:[%s13] sm:$0xf]
      %v2616 = vld [vmem:[%s14] sm:$0xf]
      %2618 = vset.pattern.permute.xlu0 0
      %2619 = vperm.xlu0 %2618, %v2616
      %v2620 = vpop.permute.xlu0 %2619
      %v2623 = vcombine.high %v805, %v805
      %v2625 = vsel %vm850, %v2615, 0
      %v2627 = vsel %vm801, %v805, 0
      %v2629 = vsel %vm801, %v2623, 0
      %2631 = vmatprep.subr.mxu0 %v2629
      %2632 = vmatpush1.msra.mxu0 %v2627
      %2633 = vmatprep.subr.mxu0 0.0
      %2634 = vmatpush1.msra.mxu0 0.0
      %2635 = vmatprep.subr.mxu0 0.0
      %2636 = vmatpush1.msra.mxu0 0.0
      %2637 = vmatprep.subr.mxu0 0.0
      %2638 = vmatpush1.msra.mxu0 0.0
      %2639 = vmatprep.subr.mxu0 0.0
      %2640 = vmatpush1.msra.mxu0 0.0
      %2641 = vmatprep.subr.mxu0 0.0
      %2642 = vmatpush1.msra.mxu0 0.0
      %2643 = vmatprep.subr.mxu0 0.0
      %2644 = vmatpush1.msra.mxu0 0.0
      %2645 = vmatprep.subr.mxu0 0.0
      %2646 = vmatpush1.msra.mxu0 0.0
      %2647 = vmatprep.subr.mxu0 0.0
      %2648 = vmatpush1.msra.mxu0 0.0
      %2649 = vmatprep.subr.mxu0 0.0
      %2650 = vmatpush1.msra.mxu0 0.0
      %2651 = vmatprep.subr.mxu0 0.0
      %2652 = vmatpush1.msra.mxu0 0.0
      %2653 = vmatprep.subr.mxu0 0.0
      %2654 = vmatpush1.msra.mxu0 0.0
      %2655 = vmatprep.subr.mxu0 0.0
      %2656 = vmatpush1.msra.mxu0 0.0
      %2657 = vmatprep.subr.mxu0 0.0
      %2658 = vmatpush1.msra.mxu0 0.0
      %2659 = vmatprep.subr.mxu0 0.0
      %2660 = vmatpush1.msra.mxu0 0.0
      %2661 = vmatprep.subr.mxu0 0.0
      %2662 = vmatpush1.msra.mxu0 0.0
      %2663 = vmatprep.subr.mxu0 0.0
      %2664 = vmatpush1.msra.mxu0 0.0
      %2665 = vmatprep.subr.mxu0 0.0
      %2666 = vmatpush1.msra.mxu0 0.0
      %2667 = vmatprep.subr.mxu0 0.0
      %2668 = vmatpush1.msra.mxu0 0.0
      %2669 = vmatprep.subr.mxu0 0.0
      %2670 = vmatpush1.msra.mxu0 0.0
      %2671 = vmatprep.subr.mxu0 0.0
      %2672 = vmatpush1.msra.mxu0 0.0
      %2673 = vmatprep.subr.mxu0 0.0
      %2674 = vmatpush1.msra.mxu0 0.0
      %2675 = vmatprep.subr.mxu0 0.0
      %2676 = vmatpush1.msra.mxu0 0.0
      %2677 = vmatprep.subr.mxu0 0.0
      %2678 = vmatpush1.msra.mxu0 0.0
      %2679 = vmatprep.subr.mxu0 0.0
      %2680 = vmatpush1.msra.mxu0 0.0
      %2681 = vmatprep.subr.mxu0 0.0
      %2682 = vmatpush1.msra.mxu0 0.0
      %2683 = vmatprep.subr.mxu0 0.0
      %2684 = vmatpush1.msra.mxu0 0.0
      %2685 = vmatprep.subr.mxu0 0.0
      %2686 = vmatpush1.msra.mxu0 0.0
      %2687 = vmatprep.subr.mxu0 0.0
      %2688 = vmatpush1.msra.mxu0 0.0
      %2689 = vmatprep.subr.mxu0 0.0
      %2690 = vmatpush1.msra.mxu0 0.0
      %2691 = vmatprep.subr.mxu0 0.0
      %2692 = vmatpush1.msra.mxu0 0.0
      %2693 = vmatprep.subr.mxu0 0.0
      %2694 = vmatpush1.msra.mxu0 0.0
      %2695 = vmatprep.mubr.f32.mxu0 0.0
      %2696 = vmatmul.mubr.f32.gmra.mrb[0].mxu0 %v2625
      %v2697 = vpop.f32.mrb[0].mxu0
      %v2698 = vadd.f32 %v2620, %v2697
      %v2699 = vpop.f32.mrb[0].mxu0
      %v2700 = vadd.f32 %v2620, %v2699
      %2701 = vdwg.mxu0
      %v2702 = vld [vmem:[%s15] sm:$0x1]
      %v2703 = vld [vmem:[#allocation4] sm:$0x1]
      %2705 = vset.pattern.permute.xlu0 0
      %2706 = vperm.xlu0 %2705, %v2703
      %v2707 = vpop.permute.xlu0 %2706
      %v2709 = vlaneseq
      %v2710 = vshrl.u32 %v2709, 7
      %v2711 = vsub.s32 0, %v2710
      %v2712 = vrot.slane %v2707, %v2711
      %v2714 = vsel %vm850, %v2702, 0
      %v2717 = vsel %vm801, %v2698, 0
      %v2720 = vsel %vm801, %v2700, 0
      %2722 = vmatprep.subr.mxu0 %v2720
      %2723 = vmatpush1.msra.mxu0 %v2717
      %2724 = vmatprep.subr.mxu0 0.0
      %2725 = vmatpush1.msra.mxu0 0.0
      %2726 = vmatprep.subr.mxu0 0.0
      %2727 = vmatpush1.msra.mxu0 0.0
      %2728 = vmatprep.subr.mxu0 0.0
      %2729 = vmatpush1.msra.mxu0 0.0
      %2730 = vmatprep.subr.mxu0 0.0
      %2731 = vmatpush1.msra.mxu0 0.0
      %2732 = vmatprep.subr.mxu0 0.0
      %2733 = vmatpush1.msra.mxu0 0.0
      %2734 = vmatprep.subr.mxu0 0.0
      %2735 = vmatpush1.msra.mxu0 0.0
      %2736 = vmatprep.subr.mxu0 0.0
      %2737 = vmatpush1.msra.mxu0 0.0
      %2738 = vmatprep.subr.mxu0 0.0
      %2739 = vmatpush1.msra.mxu0 0.0
      %2740 = vmatprep.subr.mxu0 0.0
      %2741 = vmatpush1.msra.mxu0 0.0
      %2742 = vmatprep.subr.mxu0 0.0
      %2743 = vmatpush1.msra.mxu0 0.0
      %2744 = vmatprep.subr.mxu0 0.0
      %2745 = vmatpush1.msra.mxu0 0.0
      %2746 = vmatprep.subr.mxu0 0.0
      %2747 = vmatpush1.msra.mxu0 0.0
      %2748 = vmatprep.subr.mxu0 0.0
      %2749 = vmatpush1.msra.mxu0 0.0
      %2750 = vmatprep.subr.mxu0 0.0
      %2751 = vmatpush1.msra.mxu0 0.0
      %2752 = vmatprep.subr.mxu0 0.0
      %2753 = vmatpush1.msra.mxu0 0.0
      %2754 = vmatprep.subr.mxu0 0.0
      %2755 = vmatpush1.msra.mxu0 0.0
      %2756 = vmatprep.subr.mxu0 0.0
      %2757 = vmatpush1.msra.mxu0 0.0
      %2758 = vmatprep.subr.mxu0 0.0
      %2759 = vmatpush1.msra.mxu0 0.0
      %2760 = vmatprep.subr.mxu0 0.0
      %2761 = vmatpush1.msra.mxu0 0.0
      %2762 = vmatprep.subr.mxu0 0.0
      %2763 = vmatpush1.msra.mxu0 0.0
      %2764 = vmatprep.subr.mxu0 0.0
      %2765 = vmatpush1.msra.mxu0 0.0
      %2766 = vmatprep.subr.mxu0 0.0
      %2767 = vmatpush1.msra.mxu0 0.0
      %2768 = vmatprep.subr.mxu0 0.0
      %2769 = vmatpush1.msra.mxu0 0.0
      %2770 = vmatprep.subr.mxu0 0.0
      %2771 = vmatpush1.msra.mxu0 0.0
      %2772 = vmatprep.subr.mxu0 0.0
      %2773 = vmatpush1.msra.mxu0 0.0
      %2774 = vmatprep.subr.mxu0 0.0
      %2775 = vmatpush1.msra.mxu0 0.0
      %2776 = vmatprep.subr.mxu0 0.0
      %2777 = vmatpush1.msra.mxu0 0.0
      %2778 = vmatprep.subr.mxu0 0.0
      %2779 = vmatpush1.msra.mxu0 0.0
      %2780 = vmatprep.subr.mxu0 0.0
      %2781 = vmatpush1.msra.mxu0 0.0
      %2782 = vmatprep.subr.mxu0 0.0
      %2783 = vmatpush1.msra.mxu0 0.0
      %2784 = vmatprep.subr.mxu0 0.0
      %2785 = vmatpush1.msra.mxu0 0.0
      %2786 = vmatprep.mubr.f32.mxu0 0.0
      %2787 = vmatmul.mubr.f32.gmra.mrb[0].mxu0 %v2714
      %v2788 = vpop.f32.mrb[0].mxu0
      %v2789 = vadd.f32 %v2712, %v2788
      %v2790 = vpop.f32.mrb[0].mxu0
      %v2791 = vadd.f32 %v2712, %v2790
      %2792 = vdwg.mxu0
      %vm2793 = vcmask 1040384
      %v2794 = vsel %vm2793, %v2789, -inf
      %v2795 = vsel %vm2793, %v2791, -inf
      %v2796 = vmax.f32 %v2794, %v2795
      %2797 = vmax.xlane.f32.xlu0 %v2796
      %v2798 = vpop.xlane.xlu0 %2797
      %v2799 = vsub.f32 %v2789, %v2798
      %v2800 = vsub.f32 %v2791, %v2798
      %v2801 = vmul.f32 %v2799, 1.442695
      %v2802 = vpow.pop %v2801
      %v2803 = vmul.f32 %v2800, 1.442695
      %v2804 = vpow.pop %v2803
      %v2805 = vsel %vm2793, %v2802, 0.0
      %v2806 = vsel %vm2793, %v2804, 0.0
      %v2807 = vadd.f32 %v2805, %v2806
      %2808 = vadd.xlane.f32.xlu0 %v2807
      %v2809 = vpop.xlane.xlu0 %2808
      %v2810 = vlaneseq
      %v2811 = vshrl.u32 %v2810, 7
      %v2812 = vsub.s32 0, %v2811
      %v2813 = vrot.slane %v2802, %v2812
      %v2814 = vlaneseq
      %v2815 = vshrl.u32 %v2814, 7
      %v2816 = vsub.s32 0, %v2815
      %v2817 = vrot.slane %v2804, %v2816
      %v2818 = vmul.f32 %v2698, %v2813
      %v2819 = vmul.f32 %v2700, %v2817
      %v2820 = vsel %vm801, %v2818, 0.0
      %v2821 = vsel %vm801, %v2819, 0.0
      %v2822 = vadd.f32 %v2820, %v2821
      %2823 = vadd.xlane.f32.xlu0 %v2822
      %v2824 = vpop.xlane.xlu0 %2823
      %v2825 = vrcp.pop %v2809
      %v2826 = vlaneseq
      %v2827 = vshrl.u32 %v2826, 7
      %v2828 = vsub.s32 0, %v2827
      %v2829 = vrot.slane %v2825, %v2828
      %v2830 = vmul.f32 %v2824, %v2829
      %v2831 = vld [vmem:[%s17] sm:$0xf]
      %v2832 = vld [vmem:[%s18] sm:$0xf]
      %v2834 = vsel %vm850, %v2831, 0
      %v2837 = vsel %vm801, %v2830, 0
      %2839 = vmatprep.subr.mxu0 0.0
      %2840 = vmatpush1.msra.mxu0 %v2837
      %2841 = vmatprep.subr.mxu0 0.0
      %2842 = vmatpush1.msra.mxu0 0.0
      %2843 = vmatprep.subr.mxu0 0.0
      %2844 = vmatpush1.msra.mxu0 0.0
      %2845 = vmatprep.subr.mxu0 0.0
      %2846 = vmatpush1.msra.mxu0 0.0
      %2847 = vmatprep.subr.mxu0 0.0
      %2848 = vmatpush1.msra.mxu0 0.0
      %2849 = vmatprep.subr.mxu0 0.0
      %2850 = vmatpush1.msra.mxu0 0.0
      %2851 = vmatprep.subr.mxu0 0.0
      %2852 = vmatpush1.msra.mxu0 0.0
      %2853 = vmatprep.subr.mxu0 0.0
      %2854 = vmatpush1.msra.mxu0 0.0
      %2855 = vmatprep.subr.mxu0 0.0
      %2856 = vmatpush1.msra.mxu0 0.0
      %2857 = vmatprep.subr.mxu0 0.0
      %2858 = vmatpush1.msra.mxu0 0.0
      %2859 = vmatprep.subr.mxu0 0.0
      %2860 = vmatpush1.msra.mxu0 0.0
      %2861 = vmatprep.subr.mxu0 0.0
      %2862 = vmatpush1.msra.mxu0 0.0
      %2863 = vmatprep.subr.mxu0 0.0
      %2864 = vmatpush1.msra.mxu0 0.0
      %2865 = vmatprep.subr.mxu0 0.0
      %2866 = vmatpush1.msra.mxu0 0.0
      %2867 = vmatprep.subr.mxu0 0.0
      %2868 = vmatpush1.msra.mxu0 0.0
      %2869 = vmatprep.subr.mxu0 0.0
      %2870 = vmatpush1.msra.mxu0 0.0
      %2871 = vmatprep.subr.mxu0 0.0
      %2872 = vmatpush1.msra.mxu0 0.0
      %2873 = vmatprep.subr.mxu0 0.0
      %2874 = vmatpush1.msra.mxu0 0.0
      %2875 = vmatprep.subr.mxu0 0.0
      %2876 = vmatpush1.msra.mxu0 0.0
      %2877 = vmatprep.subr.mxu0 0.0
      %2878 = vmatpush1.msra.mxu0 0.0
      %2879 = vmatprep.subr.mxu0 0.0
      %2880 = vmatpush1.msra.mxu0 0.0
      %2881 = vmatprep.subr.mxu0 0.0
      %2882 = vmatpush1.msra.mxu0 0.0
      %2883 = vmatprep.subr.mxu0 0.0
      %2884 = vmatpush1.msra.mxu0 0.0
      %2885 = vmatprep.subr.mxu0 0.0
      %2886 = vmatpush1.msra.mxu0 0.0
      %2887 = vmatprep.subr.mxu0 0.0
      %2888 = vmatpush1.msra.mxu0 0.0
      %2889 = vmatprep.subr.mxu0 0.0
      %2890 = vmatpush1.msra.mxu0 0.0
      %2891 = vmatprep.subr.mxu0 0.0
      %2892 = vmatpush1.msra.mxu0 0.0
      %2893 = vmatprep.subr.mxu0 0.0
      %2894 = vmatpush1.msra.mxu0 0.0
      %2895 = vmatprep.subr.mxu0 0.0
      %2896 = vmatpush1.msra.mxu0 0.0
      %2897 = vmatprep.subr.mxu0 0.0
      %2898 = vmatpush1.msra.mxu0 0.0
      %2899 = vmatprep.subr.mxu0 0.0
      %2900 = vmatpush1.msra.mxu0 0.0
      %2901 = vmatprep.subr.mxu0 0.0
      %2902 = vmatpush1.msra.mxu0 0.0
      %2903 = vmatprep.mubr.f32.mxu0 0.0
      %2904 = vmatmul.mubr.f32.gmra.mrb[0].mxu0 %v2834
      %v2905 = vpop.f32.mrb[0].mxu0
      %v2906 = vadd.f32 %v2832, %v2905
      %v2907 = vpop.f32.mrb[0].mxu0
      %2908 = vdwg.mxu0
      %vm2909 = vcmp.ge.f32.partialorder %v2906, 0.0
      %v2910 = vmul.f32 %v2906, 0.01
      %v2911 = vsel %vm2909, %v2906, %v2910
      %v2912 = vld [vmem:[%s19] sm:$0xf]
      %v2913 = vld [vmem:[%s20] sm:$0xf]
      %v2915 = vsel %vm850, %v2912, 0
      %v2918 = vsel %vm801, %v2911, 0
      %2920 = vmatprep.subr.mxu0 0.0
      %2921 = vmatpush1.msra.mxu0 %v2918
      %2922 = vmatprep.subr.mxu0 0.0
      %2923 = vmatpush1.msra.mxu0 0.0
      %2924 = vmatprep.subr.mxu0 0.0
      %2925 = vmatpush1.msra.mxu0 0.0
      %2926 = vmatprep.subr.mxu0 0.0
      %2927 = vmatpush1.msra.mxu0 0.0
      %2928 = vmatprep.subr.mxu0 0.0
      %2929 = vmatpush1.msra.mxu0 0.0
      %2930 = vmatprep.subr.mxu0 0.0
      %2931 = vmatpush1.msra.mxu0 0.0
      %2932 = vmatprep.subr.mxu0 0.0
      %2933 = vmatpush1.msra.mxu0 0.0
      %2934 = vmatprep.subr.mxu0 0.0
      %2935 = vmatpush1.msra.mxu0 0.0
      %2936 = vmatprep.subr.mxu0 0.0
      %2937 = vmatpush1.msra.mxu0 0.0
      %2938 = vmatprep.subr.mxu0 0.0
      %2939 = vmatpush1.msra.mxu0 0.0
      %2940 = vmatprep.subr.mxu0 0.0
      %2941 = vmatpush1.msra.mxu0 0.0
      %2942 = vmatprep.subr.mxu0 0.0
      %2943 = vmatpush1.msra.mxu0 0.0
      %2944 = vmatprep.subr.mxu0 0.0
      %2945 = vmatpush1.msra.mxu0 0.0
      %2946 = vmatprep.subr.mxu0 0.0
      %2947 = vmatpush1.msra.mxu0 0.0
      %2948 = vmatprep.subr.mxu0 0.0
      %2949 = vmatpush1.msra.mxu0 0.0
      %2950 = vmatprep.subr.mxu0 0.0
      %2951 = vmatpush1.msra.mxu0 0.0
      %2952 = vmatprep.subr.mxu0 0.0
      %2953 = vmatpush1.msra.mxu0 0.0
      %2954 = vmatprep.subr.mxu0 0.0
      %2955 = vmatpush1.msra.mxu0 0.0
      %2956 = vmatprep.subr.mxu0 0.0
      %2957 = vmatpush1.msra.mxu0 0.0
      %2958 = vmatprep.subr.mxu0 0.0
      %2959 = vmatpush1.msra.mxu0 0.0
      %2960 = vmatprep.subr.mxu0 0.0
      %2961 = vmatpush1.msra.mxu0 0.0
      %2962 = vmatprep.subr.mxu0 0.0
      %2963 = vmatpush1.msra.mxu0 0.0
      %2964 = vmatprep.subr.mxu0 0.0
      %2965 = vmatpush1.msra.mxu0 0.0
      %2966 = vmatprep.subr.mxu0 0.0
      %2967 = vmatpush1.msra.mxu0 0.0
      %2968 = vmatprep.subr.mxu0 0.0
      %2969 = vmatpush1.msra.mxu0 0.0
      %2970 = vmatprep.subr.mxu0 0.0
      %2971 = vmatpush1.msra.mxu0 0.0
      %2972 = vmatprep.subr.mxu0 0.0
      %2973 = vmatpush1.msra.mxu0 0.0
      %2974 = vmatprep.subr.mxu0 0.0
      %2975 = vmatpush1.msra.mxu0 0.0
      %2976 = vmatprep.subr.mxu0 0.0
      %2977 = vmatpush1.msra.mxu0 0.0
      %2978 = vmatprep.subr.mxu0 0.0
      %2979 = vmatpush1.msra.mxu0 0.0
      %2980 = vmatprep.subr.mxu0 0.0
      %2981 = vmatpush1.msra.mxu0 0.0
      %2982 = vmatprep.subr.mxu0 0.0
      %2983 = vmatpush1.msra.mxu0 0.0
      %2984 = vmatprep.mubr.f32.mxu0 0.0
      %2985 = vmatmul.mubr.f32.gmra.mrb[0].mxu0 %v2915
      %v2986 = vpop.f32.mrb[0].mxu0
      %v2987 = vadd.f32 %v2913, %v2986
      %v2988 = vpop.f32.mrb[0].mxu0
      %2989 = vdwg.mxu0
      %vm2990 = vcmp.ge.f32.partialorder %v2987, 0.0
      %v2991 = vmul.f32 %v2987, 0.01
      %v2992 = vsel %vm2990, %v2987, %v2991
      %2994 = vset.pattern.permute.xlu0 0
      %2995 = vperm.xlu0 %2994, %v2992
      %v2996 = vpop.permute.xlu0 %2995
      %v2998 = vadd.f32 %v2698, %v2996
      %v2999 = vadd.f32 %v2700, %v2996
      %v3002 = vcombine.low %v2998, %v2999
      %3004 = vst [vmem:[%s792] sm:$0xff] %v3002
      %v3005 = vld [vmem:[%s777] sm:$0xff]
      %v3006 = vld [vmem:[%s782] sm:$0xff]
      %3007 = vst.msk [vmem:[#allocation3 + $0x4] sm:$0xff] %vm803, %v3005
      %v3008 = vld [vmem:[#allocation3] sm:$0xff]
      %v3009 = vld [vmem:[#allocation3 + $0x8] sm:$0xf]
      %v3011 = vlaneseq
      %v3012 = vshrl.u32 %v3011, 7
      %v3013 = vsub.s32 0, %v3012
      %v3014 = vrot.slane %v810, %v3013
      %v3015 = vlaneseq
      %v3016 = vshrl.u32 %v3015, 7
      %v3017 = vsub.s32 1, %v3016
      %v3018 = vrot.slane %v810, %v3017
      %v3019 = vcombine.low %v3014, %v3018
      %3020 = vrot.lane.b32.xlu0 %v3019, 118
      %v3021 = vpop.permute.xlu0 %3020
      %v3022 = vrot.slane %v3021, 4
      %vm3023 = vcmask 965632
      %v3024 = vsel %vm3023, %v3022, %v3021
      %v3027 = vmul.f32 %v3008, %v3024
      %v3028 = vmul.f32 %v3009, %v3022
      %v3029 = vld [vmem:[%s10] sm:$0xff]
      %s3030 = scalar_lea.vmem %s10, 8
      %v3031 = vld [vmem:[%s3030] sm:$0xff]
      %v3034 = vcombine.high %v3008, %v3008
      %3035 = vrot.lane.b32.xlu0 %v3008, 9
      %v3036 = vpop.permute.xlu0 %3035
      %3037 = vrot.lane.b32.xlu0 %v3034, 9
      %v3038 = vpop.permute.xlu0 %3037
      %3039 = vrot.lane.b32.xlu0 %v3009, 9
      %v3040 = vpop.permute.xlu0 %3039
      %vm3041 = vcmask 72704
      %v3042 = vsel %vm3041, %v3036, %v3038
      %v3043 = vsel %vm3041, %v3038, %v3040
      %v3045 = vsel %vm850, %v3031, 0
      %v3047 = vsel %vm801, %v3042, 0
      %v3049 = vsel %vm801, %v3043, 0
      %3051 = vmatprep.subr.mxu0 %v3049
      %3052 = vmatpush1.msra.mxu0 %v3047
      %3053 = vmatprep.subr.mxu0 0.0
      %3054 = vmatpush1.msra.mxu0 0.0
      %3055 = vmatprep.subr.mxu0 0.0
      %3056 = vmatpush1.msra.mxu0 0.0
      %3057 = vmatprep.subr.mxu0 0.0
      %3058 = vmatpush1.msra.mxu0 0.0
      %3059 = vmatprep.subr.mxu0 0.0
      %3060 = vmatpush1.msra.mxu0 0.0
      %3061 = vmatprep.subr.mxu0 0.0
      %3062 = vmatpush1.msra.mxu0 0.0
      %3063 = vmatprep.subr.mxu0 0.0
      %3064 = vmatpush1.msra.mxu0 0.0
      %3065 = vmatprep.subr.mxu0 0.0
      %3066 = vmatpush1.msra.mxu0 0.0
      %3067 = vmatprep.subr.mxu0 0.0
      %3068 = vmatpush1.msra.mxu0 0.0
      %3069 = vmatprep.subr.mxu0 0.0
      %3070 = vmatpush1.msra.mxu0 0.0
      %3071 = vmatprep.subr.mxu0 0.0
      %3072 = vmatpush1.msra.mxu0 0.0
      %3073 = vmatprep.subr.mxu0 0.0
      %3074 = vmatpush1.msra.mxu0 0.0
      %3075 = vmatprep.subr.mxu0 0.0
      %3076 = vmatpush1.msra.mxu0 0.0
      %3077 = vmatprep.subr.mxu0 0.0
      %3078 = vmatpush1.msra.mxu0 0.0
      %3079 = vmatprep.subr.mxu0 0.0
      %3080 = vmatpush1.msra.mxu0 0.0
      %3081 = vmatprep.subr.mxu0 0.0
      %3082 = vmatpush1.msra.mxu0 0.0
      %3083 = vmatprep.subr.mxu0 0.0
      %3084 = vmatpush1.msra.mxu0 0.0
      %3085 = vmatprep.subr.mxu0 0.0
      %3086 = vmatpush1.msra.mxu0 0.0
      %3087 = vmatprep.subr.mxu0 0.0
      %3088 = vmatpush1.msra.mxu0 0.0
      %3089 = vmatprep.subr.mxu0 0.0
      %3090 = vmatpush1.msra.mxu0 0.0
      %3091 = vmatprep.subr.mxu0 0.0
      %3092 = vmatpush1.msra.mxu0 0.0
      %3093 = vmatprep.subr.mxu0 0.0
      %3094 = vmatpush1.msra.mxu0 0.0
      %3095 = vmatprep.subr.mxu0 0.0
      %3096 = vmatpush1.msra.mxu0 0.0
      %3097 = vmatprep.subr.mxu0 0.0
      %3098 = vmatpush1.msra.mxu0 0.0
      %3099 = vmatprep.subr.mxu0 0.0
      %3100 = vmatpush1.msra.mxu0 0.0
      %3101 = vmatprep.subr.mxu0 0.0
      %3102 = vmatpush1.msra.mxu0 0.0
      %3103 = vmatprep.subr.mxu0 0.0
      %3104 = vmatpush1.msra.mxu0 0.0
      %3105 = vmatprep.subr.mxu0 0.0
      %3106 = vmatpush1.msra.mxu0 0.0
      %3107 = vmatprep.subr.mxu0 0.0
      %3108 = vmatpush1.msra.mxu0 0.0
      %3109 = vmatprep.subr.mxu0 0.0
      %3110 = vmatpush1.msra.mxu0 0.0
      %3111 = vmatprep.subr.mxu0 0.0
      %3112 = vmatpush1.msra.mxu0 0.0
      %3113 = vmatprep.subr.mxu0 0.0
      %3114 = vmatpush1.msra.mxu0 0.0
      %3115 = vmatprep.mubr.f32.mxu0 0.0
      %3116 = vmatmul.mubr.f32.gmra.mrb[0].mxu0 %v3045
      %v3117 = vpop.f32.mrb[0].mxu0
      %v3118 = vadd.f32 0.0, %v3117
      %v3119 = vpop.f32.mrb[0].mxu0
      %v3120 = vadd.f32 0.0, %v3119
      %3121 = vdwg.mxu0
      %v3124 = vcombine.high %v3027, %v3027
      %3125 = vrot.lane.b32.xlu0 %v3027, 10
      %v3126 = vpop.permute.xlu0 %3125
      %3127 = vrot.lane.b32.xlu0 %v3124, 10
      %v3128 = vpop.permute.xlu0 %3127
      %3129 = vrot.lane.b32.xlu0 %v3028, 10
      %v3130 = vpop.permute.xlu0 %3129
      %vm3131 = vcmask 80896
      %v3132 = vsel %vm3131, %v3126, %v3128
      %v3133 = vsel %vm3131, %v3128, %v3130
      %v3135 = vsel %vm850, %v3029, 0
      %v3137 = vsel %vm801, %v3132, 0
      %v3139 = vsel %vm801, %v3133, 0
      %3141 = vmatprep.subr.mxu0 %v3139
      %3142 = vmatpush1.msra.mxu0 %v3137
      %3143 = vmatprep.subr.mxu0 0.0
      %3144 = vmatpush1.msra.mxu0 0.0
      %3145 = vmatprep.subr.mxu0 0.0
      %3146 = vmatpush1.msra.mxu0 0.0
      %3147 = vmatprep.subr.mxu0 0.0
      %3148 = vmatpush1.msra.mxu0 0.0
      %3149 = vmatprep.subr.mxu0 0.0
      %3150 = vmatpush1.msra.mxu0 0.0
      %3151 = vmatprep.subr.mxu0 0.0
      %3152 = vmatpush1.msra.mxu0 0.0
      %3153 = vmatprep.subr.mxu0 0.0
      %3154 = vmatpush1.msra.mxu0 0.0
      %3155 = vmatprep.subr.mxu0 0.0
      %3156 = vmatpush1.msra.mxu0 0.0
      %3157 = vmatprep.subr.mxu0 0.0
      %3158 = vmatpush1.msra.mxu0 0.0
      %3159 = vmatprep.subr.mxu0 0.0
      %3160 = vmatpush1.msra.mxu0 0.0
      %3161 = vmatprep.subr.mxu0 0.0
      %3162 = vmatpush1.msra.mxu0 0.0
      %3163 = vmatprep.subr.mxu0 0.0
      %3164 = vmatpush1.msra.mxu0 0.0
      %3165 = vmatprep.subr.mxu0 0.0
      %3166 = vmatpush1.msra.mxu0 0.0
      %3167 = vmatprep.subr.mxu0 0.0
      %3168 = vmatpush1.msra.mxu0 0.0
      %3169 = vmatprep.subr.mxu0 0.0
      %3170 = vmatpush1.msra.mxu0 0.0
      %3171 = vmatprep.subr.mxu0 0.0
      %3172 = vmatpush1.msra.mxu0 0.0
      %3173 = vmatprep.subr.mxu0 0.0
      %3174 = vmatpush1.msra.mxu0 0.0
      %3175 = vmatprep.subr.mxu0 0.0
      %3176 = vmatpush1.msra.mxu0 0.0
      %3177 = vmatprep.subr.mxu0 0.0
      %3178 = vmatpush1.msra.mxu0 0.0
      %3179 = vmatprep.subr.mxu0 0.0
      %3180 = vmatpush1.msra.mxu0 0.0
      %3181 = vmatprep.subr.mxu0 0.0
      %3182 = vmatpush1.msra.mxu0 0.0
      %3183 = vmatprep.subr.mxu0 0.0
      %3184 = vmatpush1.msra.mxu0 0.0
      %3185 = vmatprep.subr.mxu0 0.0
      %3186 = vmatpush1.msra.mxu0 0.0
      %3187 = vmatprep.subr.mxu0 0.0
      %3188 = vmatpush1.msra.mxu0 0.0
      %3189 = vmatprep.subr.mxu0 0.0
      %3190 = vmatpush1.msra.mxu0 0.0
      %3191 = vmatprep.subr.mxu0 0.0
      %3192 = vmatpush1.msra.mxu0 0.0
      %3193 = vmatprep.subr.mxu0 0.0
      %3194 = vmatpush1.msra.mxu0 0.0
      %3195 = vmatprep.subr.mxu0 0.0
      %3196 = vmatpush1.msra.mxu0 0.0
      %3197 = vmatprep.subr.mxu0 0.0
      %3198 = vmatpush1.msra.mxu0 0.0
      %3199 = vmatprep.subr.mxu0 0.0
      %3200 = vmatpush1.msra.mxu0 0.0
      %3201 = vmatprep.subr.mxu0 0.0
      %3202 = vmatpush1.msra.mxu0 0.0
      %3203 = vmatprep.subr.mxu0 0.0
      %3204 = vmatpush1.msra.mxu0 0.0
      %3205 = vmatprep.mubr.f32.mxu0 0.0
      %3206 = vmatmul.mubr.f32.gmra.mrb[0].mxu0 %v3135
      %v3207 = vpop.f32.mrb[0].mxu0
      %v3208 = vadd.f32 %v3118, %v3207
      %v3209 = vpop.f32.mrb[0].mxu0
      %v3210 = vadd.f32 %v3120, %v3209
      %3211 = vdwg.mxu0
      %v3212 = vld [vmem:[#allocation3] sm:$0xff]
      %v3213 = vld [vmem:[#allocation3 + $0x8] sm:$0xf]
      %v3215 = vlaneseq
      %v3216 = vshrl.u32 %v3215, 7
      %v3217 = vsub.s32 0, %v3216
      %v3218 = vrot.slane %v812, %v3217
      %v3219 = vlaneseq
      %v3220 = vshrl.u32 %v3219, 7
      %v3221 = vsub.s32 1, %v3220
      %v3222 = vrot.slane %v812, %v3221
      %v3223 = vcombine.low %v3218, %v3222
      %3224 = vrot.lane.b32.xlu0 %v3223, 120
      %v3225 = vpop.permute.xlu0 %3224
      %v3226 = vrot.slane %v3225, 4
      %vm3227 = vcmask 982016
      %v3228 = vsel %vm3227, %v3226, %v3225
      %v3231 = vmul.f32 %v3212, %v3228
      %v3232 = vmul.f32 %v3213, %v3226
      %s3233 = scalar_lea.vmem %s10, 16
      %v3234 = vld [vmem:[%s3233] sm:$0xff]
      %v3237 = vcombine.high %v3231, %v3231
      %3238 = vrot.lane.b32.xlu0 %v3231, 8
      %v3239 = vpop.permute.xlu0 %3238
      %3240 = vrot.lane.b32.xlu0 %v3237, 8
      %v3241 = vpop.permute.xlu0 %3240
      %3242 = vrot.lane.b32.xlu0 %v3232, 8
      %v3243 = vpop.permute.xlu0 %3242
      %vm3244 = vcmask 64512
      %v3245 = vsel %vm3244, %v3239, %v3241
      %v3246 = vsel %vm3244, %v3241, %v3243
      %v3248 = vsel %vm850, %v3234, 0
      %v3250 = vsel %vm801, %v3245, 0
      %v3252 = vsel %vm801, %v3246, 0
      %3254 = vmatprep.subr.mxu0 %v3252
      %3255 = vmatpush1.msra.mxu0 %v3250
      %3256 = vmatprep.subr.mxu0 0.0
      %3257 = vmatpush1.msra.mxu0 0.0
      %3258 = vmatprep.subr.mxu0 0.0
      %3259 = vmatpush1.msra.mxu0 0.0
      %3260 = vmatprep.subr.mxu0 0.0
      %3261 = vmatpush1.msra.mxu0 0.0
      %3262 = vmatprep.subr.mxu0 0.0
      %3263 = vmatpush1.msra.mxu0 0.0
      %3264 = vmatprep.subr.mxu0 0.0
      %3265 = vmatpush1.msra.mxu0 0.0
      %3266 = vmatprep.subr.mxu0 0.0
      %3267 = vmatpush1.msra.mxu0 0.0
      %3268 = vmatprep.subr.mxu0 0.0
      %3269 = vmatpush1.msra.mxu0 0.0
      %3270 = vmatprep.subr.mxu0 0.0
      %3271 = vmatpush1.msra.mxu0 0.0
      %3272 = vmatprep.subr.mxu0 0.0
      %3273 = vmatpush1.msra.mxu0 0.0
      %3274 = vmatprep.subr.mxu0 0.0
      %3275 = vmatpush1.msra.mxu0 0.0
      %3276 = vmatprep.subr.mxu0 0.0
      %3277 = vmatpush1.msra.mxu0 0.0
      %3278 = vmatprep.subr.mxu0 0.0
      %3279 = vmatpush1.msra.mxu0 0.0
      %3280 = vmatprep.subr.mxu0 0.0
      %3281 = vmatpush1.msra.mxu0 0.0
      %3282 = vmatprep.subr.mxu0 0.0
      %3283 = vmatpush1.msra.mxu0 0.0
      %3284 = vmatprep.subr.mxu0 0.0
      %3285 = vmatpush1.msra.mxu0 0.0
      %3286 = vmatprep.subr.mxu0 0.0
      %3287 = vmatpush1.msra.mxu0 0.0
      %3288 = vmatprep.subr.mxu0 0.0
      %3289 = vmatpush1.msra.mxu0 0.0
      %3290 = vmatprep.subr.mxu0 0.0
      %3291 = vmatpush1.msra.mxu0 0.0
      %3292 = vmatprep.subr.mxu0 0.0
      %3293 = vmatpush1.msra.mxu0 0.0
      %3294 = vmatprep.subr.mxu0 0.0
      %3295 = vmatpush1.msra.mxu0 0.0
      %3296 = vmatprep.subr.mxu0 0.0
      %3297 = vmatpush1.msra.mxu0 0.0
      %3298 = vmatprep.subr.mxu0 0.0
      %3299 = vmatpush1.msra.mxu0 0.0
      %3300 = vmatprep.subr.mxu0 0.0
      %3301 = vmatpush1.msra.mxu0 0.0
      %3302 = vmatprep.subr.mxu0 0.0
      %3303 = vmatpush1.msra.mxu0 0.0
      %3304 = vmatprep.subr.mxu0 0.0
      %3305 = vmatpush1.msra.mxu0 0.0
      %3306 = vmatprep.subr.mxu0 0.0
      %3307 = vmatpush1.msra.mxu0 0.0
      %3308 = vmatprep.subr.mxu0 0.0
      %3309 = vmatpush1.msra.mxu0 0.0
      %3310 = vmatprep.subr.mxu0 0.0
      %3311 = vmatpush1.msra.mxu0 0.0
      %3312 = vmatprep.subr.mxu0 0.0
      %3313 = vmatpush1.msra.mxu0 0.0
      %3314 = vmatprep.subr.mxu0 0.0
      %3315 = vmatpush1.msra.mxu0 0.0
      %3316 = vmatprep.subr.mxu0 0.0
      %3317 = vmatpush1.msra.mxu0 0.0
      %3318 = vmatprep.mubr.f32.mxu0 0.0
      %3319 = vmatmul.mubr.f32.gmra.mrb[0].mxu0 %v3248
      %v3320 = vpop.f32.mrb[0].mxu0
      %v3321 = vadd.f32 0.0, %v3320
      %v3322 = vpop.f32.mrb[0].mxu0
      %v3323 = vadd.f32 0.0, %v3322
      %3324 = vdwg.mxu0
      %v3325 = vadd.f32 %v3208, %v3321
      %v3326 = vadd.f32 %v3210, %v3323
      %v3327 = vld [vmem:[#allocation3] sm:$0xff]
      %v3328 = vld [vmem:[#allocation3 + $0x8] sm:$0xf]
      %3329 = vrot.lane.b32.xlu0 %v3019, 127
      %v3330 = vpop.permute.xlu0 %3329
      %v3331 = vrot.slane %v3330, 4
      %v3332 = vsel %vm1139, %v3331, %v3330
      %v3335 = vmul.f32 %v3327, %v3332
      %v3336 = vmul.f32 %v3328, %v3331
      %s3337 = scalar_lea.vmem %s10, 24
      %v3338 = vld [vmem:[%s3337] sm:$0xff]
      %v3341 = vcombine.high %v3335, %v3335
      %3342 = vrot.lane.b32.xlu0 %v3335, 1
      %v3343 = vpop.permute.xlu0 %3342
      %3344 = vrot.lane.b32.xlu0 %v3341, 1
      %v3345 = vpop.permute.xlu0 %3344
      %3346 = vrot.lane.b32.xlu0 %v3336, 1
      %v3347 = vpop.permute.xlu0 %3346
      %v3348 = vsel %vm1156, %v3343, %v3345
      %v3349 = vsel %vm1156, %v3345, %v3347
      %v3351 = vsel %vm850, %v3338, 0
      %v3353 = vsel %vm801, %v3348, 0
      %v3355 = vsel %vm801, %v3349, 0
      %3357 = vmatprep.subr.mxu0 %v3355
      %3358 = vmatpush1.msra.mxu0 %v3353
      %3359 = vmatprep.subr.mxu0 0.0
      %3360 = vmatpush1.msra.mxu0 0.0
      %3361 = vmatprep.subr.mxu0 0.0
      %3362 = vmatpush1.msra.mxu0 0.0
      %3363 = vmatprep.subr.mxu0 0.0
      %3364 = vmatpush1.msra.mxu0 0.0
      %3365 = vmatprep.subr.mxu0 0.0
      %3366 = vmatpush1.msra.mxu0 0.0
      %3367 = vmatprep.subr.mxu0 0.0
      %3368 = vmatpush1.msra.mxu0 0.0
      %3369 = vmatprep.subr.mxu0 0.0
      %3370 = vmatpush1.msra.mxu0 0.0
      %3371 = vmatprep.subr.mxu0 0.0
      %3372 = vmatpush1.msra.mxu0 0.0
      %3373 = vmatprep.subr.mxu0 0.0
      %3374 = vmatpush1.msra.mxu0 0.0
      %3375 = vmatprep.subr.mxu0 0.0
      %3376 = vmatpush1.msra.mxu0 0.0
      %3377 = vmatprep.subr.mxu0 0.0
      %3378 = vmatpush1.msra.mxu0 0.0
      %3379 = vmatprep.subr.mxu0 0.0
      %3380 = vmatpush1.msra.mxu0 0.0
      %3381 = vmatprep.subr.mxu0 0.0
      %3382 = vmatpush1.msra.mxu0 0.0
      %3383 = vmatprep.subr.mxu0 0.0
      %3384 = vmatpush1.msra.mxu0 0.0
      %3385 = vmatprep.subr.mxu0 0.0
      %3386 = vmatpush1.msra.mxu0 0.0
      %3387 = vmatprep.subr.mxu0 0.0
      %3388 = vmatpush1.msra.mxu0 0.0
      %3389 = vmatprep.subr.mxu0 0.0
      %3390 = vmatpush1.msra.mxu0 0.0
      %3391 = vmatprep.subr.mxu0 0.0
      %3392 = vmatpush1.msra.mxu0 0.0
      %3393 = vmatprep.subr.mxu0 0.0
      %3394 = vmatpush1.msra.mxu0 0.0
      %3395 = vmatprep.subr.mxu0 0.0
      %3396 = vmatpush1.msra.mxu0 0.0
      %3397 = vmatprep.subr.mxu0 0.0
      %3398 = vmatpush1.msra.mxu0 0.0
      %3399 = vmatprep.subr.mxu0 0.0
      %3400 = vmatpush1.msra.mxu0 0.0
      %3401 = vmatprep.subr.mxu0 0.0
      %3402 = vmatpush1.msra.mxu0 0.0
      %3403 = vmatprep.subr.mxu0 0.0
      %3404 = vmatpush1.msra.mxu0 0.0
      %3405 = vmatprep.subr.mxu0 0.0
      %3406 = vmatpush1.msra.mxu0 0.0
      %3407 = vmatprep.subr.mxu0 0.0
      %3408 = vmatpush1.msra.mxu0 0.0
      %3409 = vmatprep.subr.mxu0 0.0
      %3410 = vmatpush1.msra.mxu0 0.0
      %3411 = vmatprep.subr.mxu0 0.0
      %3412 = vmatpush1.msra.mxu0 0.0
      %3413 = vmatprep.subr.mxu0 0.0
      %3414 = vmatpush1.msra.mxu0 0.0
      %3415 = vmatprep.subr.mxu0 0.0
      %3416 = vmatpush1.msra.mxu0 0.0
      %3417 = vmatprep.subr.mxu0 0.0
      %3418 = vmatpush1.msra.mxu0 0.0
      %3419 = vmatprep.subr.mxu0 0.0
      %3420 = vmatpush1.msra.mxu0 0.0
      %3421 = vmatprep.mubr.f32.mxu0 0.0
      %3422 = vmatmul.mubr.f32.gmra.mrb[0].mxu0 %v3351
      %v3423 = vpop.f32.mrb[0].mxu0
      %v3424 = vadd.f32 0.0, %v3423
      %v3425 = vpop.f32.mrb[0].mxu0
      %v3426 = vadd.f32 0.0, %v3425
      %3427 = vdwg.mxu0
      %v3428 = vadd.f32 %v3325, %v3424
      %v3429 = vadd.f32 %v3326, %v3426
      %v3430 = vld [vmem:[#allocation3 + $0x4] sm:$0xff]
      %s3431 = scalar_lea.vmem %s10, 32
      %v3432 = vld [vmem:[%s3431] sm:$0xff]
      %v3434 = vcombine.high %v3430, %v3430
      %v3436 = vsel %vm850, %v3432, 0
      %v3438 = vsel %vm801, %v3430, 0
      %v3440 = vsel %vm801, %v3434, 0
      %3442 = vmatprep.subr.mxu0 %v3440
      %3443 = vmatpush1.msra.mxu0 %v3438
      %3444 = vmatprep.subr.mxu0 0.0
      %3445 = vmatpush1.msra.mxu0 0.0
      %3446 = vmatprep.subr.mxu0 0.0
      %3447 = vmatpush1.msra.mxu0 0.0
      %3448 = vmatprep.subr.mxu0 0.0
      %3449 = vmatpush1.msra.mxu0 0.0
      %3450 = vmatprep.subr.mxu0 0.0
      %3451 = vmatpush1.msra.mxu0 0.0
      %3452 = vmatprep.subr.mxu0 0.0
      %3453 = vmatpush1.msra.mxu0 0.0
      %3454 = vmatprep.subr.mxu0 0.0
      %3455 = vmatpush1.msra.mxu0 0.0
      %3456 = vmatprep.subr.mxu0 0.0
      %3457 = vmatpush1.msra.mxu0 0.0
      %3458 = vmatprep.subr.mxu0 0.0
      %3459 = vmatpush1.msra.mxu0 0.0
      %3460 = vmatprep.subr.mxu0 0.0
      %3461 = vmatpush1.msra.mxu0 0.0
      %3462 = vmatprep.subr.mxu0 0.0
      %3463 = vmatpush1.msra.mxu0 0.0
      %3464 = vmatprep.subr.mxu0 0.0
      %3465 = vmatpush1.msra.mxu0 0.0
      %3466 = vmatprep.subr.mxu0 0.0
      %3467 = vmatpush1.msra.mxu0 0.0
      %3468 = vmatprep.subr.mxu0 0.0
      %3469 = vmatpush1.msra.mxu0 0.0
      %3470 = vmatprep.subr.mxu0 0.0
      %3471 = vmatpush1.msra.mxu0 0.0
      %3472 = vmatprep.subr.mxu0 0.0
      %3473 = vmatpush1.msra.mxu0 0.0
      %3474 = vmatprep.subr.mxu0 0.0
      %3475 = vmatpush1.msra.mxu0 0.0
      %3476 = vmatprep.subr.mxu0 0.0
      %3477 = vmatpush1.msra.mxu0 0.0
      %3478 = vmatprep.subr.mxu0 0.0
      %3479 = vmatpush1.msra.mxu0 0.0
      %3480 = vmatprep.subr.mxu0 0.0
      %3481 = vmatpush1.msra.mxu0 0.0
      %3482 = vmatprep.subr.mxu0 0.0
      %3483 = vmatpush1.msra.mxu0 0.0
      %3484 = vmatprep.subr.mxu0 0.0
      %3485 = vmatpush1.msra.mxu0 0.0
      %3486 = vmatprep.subr.mxu0 0.0
      %3487 = vmatpush1.msra.mxu0 0.0
      %3488 = vmatprep.subr.mxu0 0.0
      %3489 = vmatpush1.msra.mxu0 0.0
      %3490 = vmatprep.subr.mxu0 0.0
      %3491 = vmatpush1.msra.mxu0 0.0
      %3492 = vmatprep.subr.mxu0 0.0
      %3493 = vmatpush1.msra.mxu0 0.0
      %3494 = vmatprep.subr.mxu0 0.0
      %3495 = vmatpush1.msra.mxu0 0.0
      %3496 = vmatprep.subr.mxu0 0.0
      %3497 = vmatpush1.msra.mxu0 0.0
      %3498 = vmatprep.subr.mxu0 0.0
      %3499 = vmatpush1.msra.mxu0 0.0
      %3500 = vmatprep.subr.mxu0 0.0
      %3501 = vmatpush1.msra.mxu0 0.0
      %3502 = vmatprep.subr.mxu0 0.0
      %3503 = vmatpush1.msra.mxu0 0.0
      %3504 = vmatprep.subr.mxu0 0.0
      %3505 = vmatpush1.msra.mxu0 0.0
      %3506 = vmatprep.mubr.f32.mxu0 0.0
      %3507 = vmatmul.mubr.f32.gmra.mrb[0].mxu0 %v3436
      %v3508 = vpop.f32.mrb[0].mxu0
      %v3509 = vadd.f32 0.0, %v3508
      %v3510 = vpop.f32.mrb[0].mxu0
      %v3511 = vadd.f32 0.0, %v3510
      %3512 = vdwg.mxu0
      %v3513 = vadd.f32 %v3428, %v3509
      %v3514 = vadd.f32 %v3429, %v3511
      %v3515 = vld [vmem:[#allocation3 + $0x4] sm:$0xff]
      %3516 = vrot.lane.b32.xlu0 %v3223, 1
      %v3517 = vpop.permute.xlu0 %3516
      %v3518 = vrot.slane %v3517, 4
      %v3519 = vsel %vm1156, %v3518, %v3517
      %v3521 = vmul.f32 %v3515, %v3519
      %s3522 = scalar_lea.vmem %s10, 40
      %v3523 = vld [vmem:[%s3522] sm:$0xff]
      %v3525 = vcombine.high %v3521, %v3521
      %3526 = vrot.lane.b32.xlu0 %v3521, 127
      %v3527 = vpop.permute.xlu0 %3526
      %3528 = vrot.lane.b32.xlu0 %v3525, 127
      %v3529 = vpop.permute.xlu0 %3528
      %v3530 = vsel %vm1139, %v3527, %v3529
      %v3532 = vsel %vm850, %v3523, 0
      %v3534 = vsel %vm801, %v3530, 0
      %v3536 = vsel %vm801, %v3529, 0
      %3538 = vmatprep.subr.mxu0 %v3536
      %3539 = vmatpush1.msra.mxu0 %v3534
      %3540 = vmatprep.subr.mxu0 0.0
      %3541 = vmatpush1.msra.mxu0 0.0
      %3542 = vmatprep.subr.mxu0 0.0
      %3543 = vmatpush1.msra.mxu0 0.0
      %3544 = vmatprep.subr.mxu0 0.0
      %3545 = vmatpush1.msra.mxu0 0.0
      %3546 = vmatprep.subr.mxu0 0.0
      %3547 = vmatpush1.msra.mxu0 0.0
      %3548 = vmatprep.subr.mxu0 0.0
      %3549 = vmatpush1.msra.mxu0 0.0
      %3550 = vmatprep.subr.mxu0 0.0
      %3551 = vmatpush1.msra.mxu0 0.0
      %3552 = vmatprep.subr.mxu0 0.0
      %3553 = vmatpush1.msra.mxu0 0.0
      %3554 = vmatprep.subr.mxu0 0.0
      %3555 = vmatpush1.msra.mxu0 0.0
      %3556 = vmatprep.subr.mxu0 0.0
      %3557 = vmatpush1.msra.mxu0 0.0
      %3558 = vmatprep.subr.mxu0 0.0
      %3559 = vmatpush1.msra.mxu0 0.0
      %3560 = vmatprep.subr.mxu0 0.0
      %3561 = vmatpush1.msra.mxu0 0.0
      %3562 = vmatprep.subr.mxu0 0.0
      %3563 = vmatpush1.msra.mxu0 0.0
      %3564 = vmatprep.subr.mxu0 0.0
      %3565 = vmatpush1.msra.mxu0 0.0
      %3566 = vmatprep.subr.mxu0 0.0
      %3567 = vmatpush1.msra.mxu0 0.0
      %3568 = vmatprep.subr.mxu0 0.0
      %3569 = vmatpush1.msra.mxu0 0.0
      %3570 = vmatprep.subr.mxu0 0.0
      %3571 = vmatpush1.msra.mxu0 0.0
      %3572 = vmatprep.subr.mxu0 0.0
      %3573 = vmatpush1.msra.mxu0 0.0
      %3574 = vmatprep.subr.mxu0 0.0
      %3575 = vmatpush1.msra.mxu0 0.0
      %3576 = vmatprep.subr.mxu0 0.0
      %3577 = vmatpush1.msra.mxu0 0.0
      %3578 = vmatprep.subr.mxu0 0.0
      %3579 = vmatpush1.msra.mxu0 0.0
      %3580 = vmatprep.subr.mxu0 0.0
      %3581 = vmatpush1.msra.mxu0 0.0
      %3582 = vmatprep.subr.mxu0 0.0
      %3583 = vmatpush1.msra.mxu0 0.0
      %3584 = vmatprep.subr.mxu0 0.0
      %3585 = vmatpush1.msra.mxu0 0.0
      %3586 = vmatprep.subr.mxu0 0.0
      %3587 = vmatpush1.msra.mxu0 0.0
      %3588 = vmatprep.subr.mxu0 0.0
      %3589 = vmatpush1.msra.mxu0 0.0
      %3590 = vmatprep.subr.mxu0 0.0
      %3591 = vmatpush1.msra.mxu0 0.0
      %3592 = vmatprep.subr.mxu0 0.0
      %3593 = vmatpush1.msra.mxu0 0.0
      %3594 = vmatprep.subr.mxu0 0.0
      %3595 = vmatpush1.msra.mxu0 0.0
      %3596 = vmatprep.subr.mxu0 0.0
      %3597 = vmatpush1.msra.mxu0 0.0
      %3598 = vmatprep.subr.mxu0 0.0
      %3599 = vmatpush1.msra.mxu0 0.0
      %3600 = vmatprep.subr.mxu0 0.0
      %3601 = vmatpush1.msra.mxu0 0.0
      %3602 = vmatprep.mubr.f32.mxu0 0.0
      %3603 = vmatmul.mubr.f32.gmra.mrb[0].mxu0 %v3532
      %v3604 = vpop.f32.mrb[0].mxu0
      %v3605 = vadd.f32 0.0, %v3604
      %v3606 = vpop.f32.mrb[0].mxu0
      %v3607 = vadd.f32 0.0, %v3606
      %3608 = vdwg.mxu0
      %v3609 = vadd.f32 %v3513, %v3605
      %v3610 = vadd.f32 %v3514, %v3607
      %v3611 = vld [vmem:[#allocation3 + $0x4] sm:$0xff]
      %3612 = vrot.lane.b32.xlu0 %v3019, 8
      %v3613 = vpop.permute.xlu0 %3612
      %v3614 = vrot.slane %v3613, 4
      %v3615 = vsel %vm3244, %v3614, %v3613
      %v3617 = vmul.f32 %v3611, %v3615
      %s3618 = scalar_lea.vmem %s10, 48
      %v3619 = vld [vmem:[%s3618] sm:$0xff]
      %v3621 = vcombine.high %v3617, %v3617
      %3622 = vrot.lane.b32.xlu0 %v3617, 120
      %v3623 = vpop.permute.xlu0 %3622
      %3624 = vrot.lane.b32.xlu0 %v3621, 120
      %v3625 = vpop.permute.xlu0 %3624
      %v3626 = vsel %vm3227, %v3623, %v3625
      %v3628 = vsel %vm850, %v3619, 0
      %v3630 = vsel %vm801, %v3626, 0
      %v3632 = vsel %vm801, %v3625, 0
      %3634 = vmatprep.subr.mxu0 %v3632
      %3635 = vmatpush1.msra.mxu0 %v3630
      %3636 = vmatprep.subr.mxu0 0.0
      %3637 = vmatpush1.msra.mxu0 0.0
      %3638 = vmatprep.subr.mxu0 0.0
      %3639 = vmatpush1.msra.mxu0 0.0
      %3640 = vmatprep.subr.mxu0 0.0
      %3641 = vmatpush1.msra.mxu0 0.0
      %3642 = vmatprep.subr.mxu0 0.0
      %3643 = vmatpush1.msra.mxu0 0.0
      %3644 = vmatprep.subr.mxu0 0.0
      %3645 = vmatpush1.msra.mxu0 0.0
      %3646 = vmatprep.subr.mxu0 0.0
      %3647 = vmatpush1.msra.mxu0 0.0
      %3648 = vmatprep.subr.mxu0 0.0
      %3649 = vmatpush1.msra.mxu0 0.0
      %3650 = vmatprep.subr.mxu0 0.0
      %3651 = vmatpush1.msra.mxu0 0.0
      %3652 = vmatprep.subr.mxu0 0.0
      %3653 = vmatpush1.msra.mxu0 0.0
      %3654 = vmatprep.subr.mxu0 0.0
      %3655 = vmatpush1.msra.mxu0 0.0
      %3656 = vmatprep.subr.mxu0 0.0
      %3657 = vmatpush1.msra.mxu0 0.0
      %3658 = vmatprep.subr.mxu0 0.0
      %3659 = vmatpush1.msra.mxu0 0.0
      %3660 = vmatprep.subr.mxu0 0.0
      %3661 = vmatpush1.msra.mxu0 0.0
      %3662 = vmatprep.subr.mxu0 0.0
      %3663 = vmatpush1.msra.mxu0 0.0
      %3664 = vmatprep.subr.mxu0 0.0
      %3665 = vmatpush1.msra.mxu0 0.0
      %3666 = vmatprep.subr.mxu0 0.0
      %3667 = vmatpush1.msra.mxu0 0.0
      %3668 = vmatprep.subr.mxu0 0.0
      %3669 = vmatpush1.msra.mxu0 0.0
      %3670 = vmatprep.subr.mxu0 0.0
      %3671 = vmatpush1.msra.mxu0 0.0
      %3672 = vmatprep.subr.mxu0 0.0
      %3673 = vmatpush1.msra.mxu0 0.0
      %3674 = vmatprep.subr.mxu0 0.0
      %3675 = vmatpush1.msra.mxu0 0.0
      %3676 = vmatprep.subr.mxu0 0.0
      %3677 = vmatpush1.msra.mxu0 0.0
      %3678 = vmatprep.subr.mxu0 0.0
      %3679 = vmatpush1.msra.mxu0 0.0
      %3680 = vmatprep.subr.mxu0 0.0
      %3681 = vmatpush1.msra.mxu0 0.0
      %3682 = vmatprep.subr.mxu0 0.0
      %3683 = vmatpush1.msra.mxu0 0.0
      %3684 = vmatprep.subr.mxu0 0.0
      %3685 = vmatpush1.msra.mxu0 0.0
      %3686 = vmatprep.subr.mxu0 0.0
      %3687 = vmatpush1.msra.mxu0 0.0
      %3688 = vmatprep.subr.mxu0 0.0
      %3689 = vmatpush1.msra.mxu0 0.0
      %3690 = vmatprep.subr.mxu0 0.0
      %3691 = vmatpush1.msra.mxu0 0.0
      %3692 = vmatprep.subr.mxu0 0.0
      %3693 = vmatpush1.msra.mxu0 0.0
      %3694 = vmatprep.subr.mxu0 0.0
      %3695 = vmatpush1.msra.mxu0 0.0
      %3696 = vmatprep.subr.mxu0 0.0
      %3697 = vmatpush1.msra.mxu0 0.0
      %3698 = vmatprep.mubr.f32.mxu0 0.0
      %3699 = vmatmul.mubr.f32.gmra.mrb[0].mxu0 %v3628
      %v3700 = vpop.f32.mrb[0].mxu0
      %v3701 = vadd.f32 0.0, %v3700
      %v3702 = vpop.f32.mrb[0].mxu0
      %v3703 = vadd.f32 0.0, %v3702
      %3704 = vdwg.mxu0
      %v3705 = vadd.f32 %v3609, %v3701
      %v3706 = vadd.f32 %v3610, %v3703
      %v3707 = vld [vmem:[#allocation3 + $0x4] sm:$0xff]
      %s3708 = scalar_lea.vmem %s10, 56
      %v3709 = vld [vmem:[%s3708] sm:$0xff]
      %v3711 = vcombine.high %v3707, %v3707
      %3712 = vrot.lane.b32.xlu0 %v3707, 119
      %v3713 = vpop.permute.xlu0 %3712
      %3714 = vrot.lane.b32.xlu0 %v3711, 119
      %v3715 = vpop.permute.xlu0 %3714
      %vm3716 = vcmask 973824
      %v3717 = vsel %vm3716, %v3713, %v3715
      %v3719 = vsel %vm850, %v3709, 0
      %v3721 = vsel %vm801, %v3717, 0
      %v3723 = vsel %vm801, %v3715, 0
      %3725 = vmatprep.subr.mxu0 %v3723
      %3726 = vmatpush1.msra.mxu0 %v3721
      %3727 = vmatprep.subr.mxu0 0.0
      %3728 = vmatpush1.msra.mxu0 0.0
      %3729 = vmatprep.subr.mxu0 0.0
      %3730 = vmatpush1.msra.mxu0 0.0
      %3731 = vmatprep.subr.mxu0 0.0
      %3732 = vmatpush1.msra.mxu0 0.0
      %3733 = vmatprep.subr.mxu0 0.0
      %3734 = vmatpush1.msra.mxu0 0.0
      %3735 = vmatprep.subr.mxu0 0.0
      %3736 = vmatpush1.msra.mxu0 0.0
      %3737 = vmatprep.subr.mxu0 0.0
      %3738 = vmatpush1.msra.mxu0 0.0
      %3739 = vmatprep.subr.mxu0 0.0
      %3740 = vmatpush1.msra.mxu0 0.0
      %3741 = vmatprep.subr.mxu0 0.0
      %3742 = vmatpush1.msra.mxu0 0.0
      %3743 = vmatprep.subr.mxu0 0.0
      %3744 = vmatpush1.msra.mxu0 0.0
      %3745 = vmatprep.subr.mxu0 0.0
      %3746 = vmatpush1.msra.mxu0 0.0
      %3747 = vmatprep.subr.mxu0 0.0
      %3748 = vmatpush1.msra.mxu0 0.0
      %3749 = vmatprep.subr.mxu0 0.0
      %3750 = vmatpush1.msra.mxu0 0.0
      %3751 = vmatprep.subr.mxu0 0.0
      %3752 = vmatpush1.msra.mxu0 0.0
      %3753 = vmatprep.subr.mxu0 0.0
      %3754 = vmatpush1.msra.mxu0 0.0
      %3755 = vmatprep.subr.mxu0 0.0
      %3756 = vmatpush1.msra.mxu0 0.0
      %3757 = vmatprep.subr.mxu0 0.0
      %3758 = vmatpush1.msra.mxu0 0.0
      %3759 = vmatprep.subr.mxu0 0.0
      %3760 = vmatpush1.msra.mxu0 0.0
      %3761 = vmatprep.subr.mxu0 0.0
      %3762 = vmatpush1.msra.mxu0 0.0
      %3763 = vmatprep.subr.mxu0 0.0
      %3764 = vmatpush1.msra.mxu0 0.0
      %3765 = vmatprep.subr.mxu0 0.0
      %3766 = vmatpush1.msra.mxu0 0.0
      %3767 = vmatprep.subr.mxu0 0.0
      %3768 = vmatpush1.msra.mxu0 0.0
      %3769 = vmatprep.subr.mxu0 0.0
      %3770 = vmatpush1.msra.mxu0 0.0
      %3771 = vmatprep.subr.mxu0 0.0
      %3772 = vmatpush1.msra.mxu0 0.0
      %3773 = vmatprep.subr.mxu0 0.0
      %3774 = vmatpush1.msra.mxu0 0.0
      %3775 = vmatprep.subr.mxu0 0.0
      %3776 = vmatpush1.msra.mxu0 0.0
      %3777 = vmatprep.subr.mxu0 0.0
      %3778 = vmatpush1.msra.mxu0 0.0
      %3779 = vmatprep.subr.mxu0 0.0
      %3780 = vmatpush1.msra.mxu0 0.0
      %3781 = vmatprep.subr.mxu0 0.0
      %3782 = vmatpush1.msra.mxu0 0.0
      %3783 = vmatprep.subr.mxu0 0.0
      %3784 = vmatpush1.msra.mxu0 0.0
      %3785 = vmatprep.subr.mxu0 0.0
      %3786 = vmatpush1.msra.mxu0 0.0
      %3787 = vmatprep.subr.mxu0 0.0
      %3788 = vmatpush1.msra.mxu0 0.0
      %3789 = vmatprep.mubr.f32.mxu0 0.0
      %3790 = vmatmul.mubr.f32.gmra.mrb[0].mxu0 %v3719
      %v3791 = vpop.f32.mrb[0].mxu0
      %v3792 = vadd.f32 0.0, %v3791
      %v3793 = vpop.f32.mrb[0].mxu0
      %v3794 = vadd.f32 0.0, %v3793
      %3795 = vdwg.mxu0
      %v3796 = vadd.f32 %v3705, %v3792
      %v3797 = vadd.f32 %v3706, %v3794
      %v3798 = vld [vmem:[#allocation3 + $0x4] sm:$0xff]
      %3799 = vrot.lane.b32.xlu0 %v3223, 10
      %v3800 = vpop.permute.xlu0 %3799
      %v3801 = vrot.slane %v3800, 4
      %v3802 = vsel %vm3131, %v3801, %v3800
      %v3804 = vmul.f32 %v3798, %v3802
      %s3805 = scalar_lea.vmem %s10, 64
      %v3806 = vld [vmem:[%s3805] sm:$0xff]
      %v3808 = vcombine.high %v3804, %v3804
      %3809 = vrot.lane.b32.xlu0 %v3804, 118
      %v3810 = vpop.permute.xlu0 %3809
      %3811 = vrot.lane.b32.xlu0 %v3808, 118
      %v3812 = vpop.permute.xlu0 %3811
      %v3813 = vsel %vm3023, %v3810, %v3812
      %v3815 = vsel %vm850, %v3806, 0
      %v3817 = vsel %vm801, %v3813, 0
      %v3819 = vsel %vm801, %v3812, 0
      %3821 = vmatprep.subr.mxu0 %v3819
      %3822 = vmatpush1.msra.mxu0 %v3817
      %3823 = vmatprep.subr.mxu0 0.0
      %3824 = vmatpush1.msra.mxu0 0.0
      %3825 = vmatprep.subr.mxu0 0.0
      %3826 = vmatpush1.msra.mxu0 0.0
      %3827 = vmatprep.subr.mxu0 0.0
      %3828 = vmatpush1.msra.mxu0 0.0
      %3829 = vmatprep.subr.mxu0 0.0
      %3830 = vmatpush1.msra.mxu0 0.0
      %3831 = vmatprep.subr.mxu0 0.0
      %3832 = vmatpush1.msra.mxu0 0.0
      %3833 = vmatprep.subr.mxu0 0.0
      %3834 = vmatpush1.msra.mxu0 0.0
      %3835 = vmatprep.subr.mxu0 0.0
      %3836 = vmatpush1.msra.mxu0 0.0
      %3837 = vmatprep.subr.mxu0 0.0
      %3838 = vmatpush1.msra.mxu0 0.0
      %3839 = vmatprep.subr.mxu0 0.0
      %3840 = vmatpush1.msra.mxu0 0.0
      %3841 = vmatprep.subr.mxu0 0.0
      %3842 = vmatpush1.msra.mxu0 0.0
      %3843 = vmatprep.subr.mxu0 0.0
      %3844 = vmatpush1.msra.mxu0 0.0
      %3845 = vmatprep.subr.mxu0 0.0
      %3846 = vmatpush1.msra.mxu0 0.0
      %3847 = vmatprep.subr.mxu0 0.0
      %3848 = vmatpush1.msra.mxu0 0.0
      %3849 = vmatprep.subr.mxu0 0.0
      %3850 = vmatpush1.msra.mxu0 0.0
      %3851 = vmatprep.subr.mxu0 0.0
      %3852 = vmatpush1.msra.mxu0 0.0
      %3853 = vmatprep.subr.mxu0 0.0
      %3854 = vmatpush1.msra.mxu0 0.0
      %3855 = vmatprep.subr.mxu0 0.0
      %3856 = vmatpush1.msra.mxu0 0.0
      %3857 = vmatprep.subr.mxu0 0.0
      %3858 = vmatpush1.msra.mxu0 0.0
      %3859 = vmatprep.subr.mxu0 0.0
      %3860 = vmatpush1.msra.mxu0 0.0
      %3861 = vmatprep.subr.mxu0 0.0
      %3862 = vmatpush1.msra.mxu0 0.0
      %3863 = vmatprep.subr.mxu0 0.0
      %3864 = vmatpush1.msra.mxu0 0.0
      %3865 = vmatprep.subr.mxu0 0.0
      %3866 = vmatpush1.msra.mxu0 0.0
      %3867 = vmatprep.subr.mxu0 0.0
      %3868 = vmatpush1.msra.mxu0 0.0
      %3869 = vmatprep.subr.mxu0 0.0
      %3870 = vmatpush1.msra.mxu0 0.0
      %3871 = vmatprep.subr.mxu0 0.0
      %3872 = vmatpush1.msra.mxu0 0.0
      %3873 = vmatprep.subr.mxu0 0.0
      %3874 = vmatpush1.msra.mxu0 0.0
      %3875 = vmatprep.subr.mxu0 0.0
      %3876 = vmatpush1.msra.mxu0 0.0
      %3877 = vmatprep.subr.mxu0 0.0
      %3878 = vmatpush1.msra.mxu0 0.0
      %3879 = vmatprep.subr.mxu0 0.0
      %3880 = vmatpush1.msra.mxu0 0.0
      %3881 = vmatprep.subr.mxu0 0.0
      %3882 = vmatpush1.msra.mxu0 0.0
      %3883 = vmatprep.subr.mxu0 0.0
      %3884 = vmatpush1.msra.mxu0 0.0
      %3885 = vmatprep.mubr.f32.mxu0 0.0
      %3886 = vmatmul.mubr.f32.gmra.mrb[0].mxu0 %v3815
      %v3887 = vpop.f32.mrb[0].mxu0
      %v3888 = vadd.f32 0.0, %v3887
      %v3889 = vpop.f32.mrb[0].mxu0
      %v3890 = vadd.f32 0.0, %v3889
      %3891 = vdwg.mxu0
      %v3892 = vadd.f32 %v3796, %v3888
      %v3893 = vadd.f32 %v3797, %v3890
      %3894 = vst.msk [vmem:[#allocation3 + $0x4] sm:$0xff] %vm803, %v3006
      %v3895 = vld [vmem:[#allocation3] sm:$0xff]
      %v3896 = vld [vmem:[#allocation3 + $0x8] sm:$0xf]
      %v3897 = vmul.f32 %v3895, %v3024
      %v3898 = vmul.f32 %v3896, %v3022
      %v3899 = vld [vmem:[%s11] sm:$0xff]
      %s3900 = scalar_lea.vmem %s11, 8
      %v3901 = vld [vmem:[%s3900] sm:$0xff]
      %v3904 = vcombine.high %v3895, %v3895
      %3905 = vrot.lane.b32.xlu0 %v3895, 9
      %v3906 = vpop.permute.xlu0 %3905
      %3907 = vrot.lane.b32.xlu0 %v3904, 9
      %v3908 = vpop.permute.xlu0 %3907
      %3909 = vrot.lane.b32.xlu0 %v3896, 9
      %v3910 = vpop.permute.xlu0 %3909
      %v3911 = vsel %vm3041, %v3906, %v3908
      %v3912 = vsel %vm3041, %v3908, %v3910
      %v3914 = vsel %vm850, %v3901, 0
      %v3916 = vsel %vm801, %v3911, 0
      %v3918 = vsel %vm801, %v3912, 0
      %3920 = vmatprep.subr.mxu0 %v3918
      %3921 = vmatpush1.msra.mxu0 %v3916
      %3922 = vmatprep.subr.mxu0 0.0
      %3923 = vmatpush1.msra.mxu0 0.0
      %3924 = vmatprep.subr.mxu0 0.0
      %3925 = vmatpush1.msra.mxu0 0.0
      %3926 = vmatprep.subr.mxu0 0.0
      %3927 = vmatpush1.msra.mxu0 0.0
      %3928 = vmatprep.subr.mxu0 0.0
      %3929 = vmatpush1.msra.mxu0 0.0
      %3930 = vmatprep.subr.mxu0 0.0
      %3931 = vmatpush1.msra.mxu0 0.0
      %3932 = vmatprep.subr.mxu0 0.0
      %3933 = vmatpush1.msra.mxu0 0.0
      %3934 = vmatprep.subr.mxu0 0.0
      %3935 = vmatpush1.msra.mxu0 0.0
      %3936 = vmatprep.subr.mxu0 0.0
      %3937 = vmatpush1.msra.mxu0 0.0
      %3938 = vmatprep.subr.mxu0 0.0
      %3939 = vmatpush1.msra.mxu0 0.0
      %3940 = vmatprep.subr.mxu0 0.0
      %3941 = vmatpush1.msra.mxu0 0.0
      %3942 = vmatprep.subr.mxu0 0.0
      %3943 = vmatpush1.msra.mxu0 0.0
      %3944 = vmatprep.subr.mxu0 0.0
      %3945 = vmatpush1.msra.mxu0 0.0
      %3946 = vmatprep.subr.mxu0 0.0
      %3947 = vmatpush1.msra.mxu0 0.0
      %3948 = vmatprep.subr.mxu0 0.0
      %3949 = vmatpush1.msra.mxu0 0.0
      %3950 = vmatprep.subr.mxu0 0.0
      %3951 = vmatpush1.msra.mxu0 0.0
      %3952 = vmatprep.subr.mxu0 0.0
      %3953 = vmatpush1.msra.mxu0 0.0
      %3954 = vmatprep.subr.mxu0 0.0
      %3955 = vmatpush1.msra.mxu0 0.0
      %3956 = vmatprep.subr.mxu0 0.0
      %3957 = vmatpush1.msra.mxu0 0.0
      %3958 = vmatprep.subr.mxu0 0.0
      %3959 = vmatpush1.msra.mxu0 0.0
      %3960 = vmatprep.subr.mxu0 0.0
      %3961 = vmatpush1.msra.mxu0 0.0
      %3962 = vmatprep.subr.mxu0 0.0
      %3963 = vmatpush1.msra.mxu0 0.0
      %3964 = vmatprep.subr.mxu0 0.0
      %3965 = vmatpush1.msra.mxu0 0.0
      %3966 = vmatprep.subr.mxu0 0.0
      %3967 = vmatpush1.msra.mxu0 0.0
      %3968 = vmatprep.subr.mxu0 0.0
      %3969 = vmatpush1.msra.mxu0 0.0
      %3970 = vmatprep.subr.mxu0 0.0
      %3971 = vmatpush1.msra.mxu0 0.0
      %3972 = vmatprep.subr.mxu0 0.0
      %3973 = vmatpush1.msra.mxu0 0.0
      %3974 = vmatprep.subr.mxu0 0.0
      %3975 = vmatpush1.msra.mxu0 0.0
      %3976 = vmatprep.subr.mxu0 0.0
      %3977 = vmatpush1.msra.mxu0 0.0
      %3978 = vmatprep.subr.mxu0 0.0
      %3979 = vmatpush1.msra.mxu0 0.0
      %3980 = vmatprep.subr.mxu0 0.0
      %3981 = vmatpush1.msra.mxu0 0.0
      %3982 = vmatprep.subr.mxu0 0.0
      %3983 = vmatpush1.msra.mxu0 0.0
      %3984 = vmatprep.mubr.f32.mxu0 0.0
      %3985 = vmatmul.mubr.f32.gmra.mrb[0].mxu0 %v3914
      %v3986 = vpop.f32.mrb[0].mxu0
      %v3987 = vadd.f32 0.0, %v3986
      %v3988 = vpop.f32.mrb[0].mxu0
      %v3989 = vadd.f32 0.0, %v3988
      %3990 = vdwg.mxu0
      %v3993 = vcombine.high %v3897, %v3897
      %3994 = vrot.lane.b32.xlu0 %v3897, 10
      %v3995 = vpop.permute.xlu0 %3994
      %3996 = vrot.lane.b32.xlu0 %v3993, 10
      %v3997 = vpop.permute.xlu0 %3996
      %3998 = vrot.lane.b32.xlu0 %v3898, 10
      %v3999 = vpop.permute.xlu0 %3998
      %v4000 = vsel %vm3131, %v3995, %v3997
      %v4001 = vsel %vm3131, %v3997, %v3999
      %v4003 = vsel %vm850, %v3899, 0
      %v4005 = vsel %vm801, %v4000, 0
      %v4007 = vsel %vm801, %v4001, 0
      %4009 = vmatprep.subr.mxu0 %v4007
      %4010 = vmatpush1.msra.mxu0 %v4005
      %4011 = vmatprep.subr.mxu0 0.0
      %4012 = vmatpush1.msra.mxu0 0.0
      %4013 = vmatprep.subr.mxu0 0.0
      %4014 = vmatpush1.msra.mxu0 0.0
      %4015 = vmatprep.subr.mxu0 0.0
      %4016 = vmatpush1.msra.mxu0 0.0
      %4017 = vmatprep.subr.mxu0 0.0
      %4018 = vmatpush1.msra.mxu0 0.0
      %4019 = vmatprep.subr.mxu0 0.0
      %4020 = vmatpush1.msra.mxu0 0.0
      %4021 = vmatprep.subr.mxu0 0.0
      %4022 = vmatpush1.msra.mxu0 0.0
      %4023 = vmatprep.subr.mxu0 0.0
      %4024 = vmatpush1.msra.mxu0 0.0
      %4025 = vmatprep.subr.mxu0 0.0
      %4026 = vmatpush1.msra.mxu0 0.0
      %4027 = vmatprep.subr.mxu0 0.0
      %4028 = vmatpush1.msra.mxu0 0.0
      %4029 = vmatprep.subr.mxu0 0.0
      %4030 = vmatpush1.msra.mxu0 0.0
      %4031 = vmatprep.subr.mxu0 0.0
      %4032 = vmatpush1.msra.mxu0 0.0
      %4033 = vmatprep.subr.mxu0 0.0
      %4034 = vmatpush1.msra.mxu0 0.0
      %4035 = vmatprep.subr.mxu0 0.0
      %4036 = vmatpush1.msra.mxu0 0.0
      %4037 = vmatprep.subr.mxu0 0.0
      %4038 = vmatpush1.msra.mxu0 0.0
      %4039 = vmatprep.subr.mxu0 0.0
      %4040 = vmatpush1.msra.mxu0 0.0
      %4041 = vmatprep.subr.mxu0 0.0
      %4042 = vmatpush1.msra.mxu0 0.0
      %4043 = vmatprep.subr.mxu0 0.0
      %4044 = vmatpush1.msra.mxu0 0.0
      %4045 = vmatprep.subr.mxu0 0.0
      %4046 = vmatpush1.msra.mxu0 0.0
      %4047 = vmatprep.subr.mxu0 0.0
      %4048 = vmatpush1.msra.mxu0 0.0
      %4049 = vmatprep.subr.mxu0 0.0
      %4050 = vmatpush1.msra.mxu0 0.0
      %4051 = vmatprep.subr.mxu0 0.0
      %4052 = vmatpush1.msra.mxu0 0.0
      %4053 = vmatprep.subr.mxu0 0.0
      %4054 = vmatpush1.msra.mxu0 0.0
      %4055 = vmatprep.subr.mxu0 0.0
      %4056 = vmatpush1.msra.mxu0 0.0
      %4057 = vmatprep.subr.mxu0 0.0
      %4058 = vmatpush1.msra.mxu0 0.0
      %4059 = vmatprep.subr.mxu0 0.0
      %4060 = vmatpush1.msra.mxu0 0.0
      %4061 = vmatprep.subr.mxu0 0.0
      %4062 = vmatpush1.msra.mxu0 0.0
      %4063 = vmatprep.subr.mxu0 0.0
      %4064 = vmatpush1.msra.mxu0 0.0
      %4065 = vmatprep.subr.mxu0 0.0
      %4066 = vmatpush1.msra.mxu0 0.0
      %4067 = vmatprep.subr.mxu0 0.0
      %4068 = vmatpush1.msra.mxu0 0.0
      %4069 = vmatprep.subr.mxu0 0.0
      %4070 = vmatpush1.msra.mxu0 0.0
      %4071 = vmatprep.subr.mxu0 0.0
      %4072 = vmatpush1.msra.mxu0 0.0
      %4073 = vmatprep.mubr.f32.mxu0 0.0
      %4074 = vmatmul.mubr.f32.gmra.mrb[0].mxu0 %v4003
      %v4075 = vpop.f32.mrb[0].mxu0
      %v4076 = vadd.f32 %v3987, %v4075
      %v4077 = vpop.f32.mrb[0].mxu0
      %v4078 = vadd.f32 %v3989, %v4077
      %4079 = vdwg.mxu0
      %v4080 = vld [vmem:[#allocation3] sm:$0xff]
      %v4081 = vld [vmem:[#allocation3 + $0x8] sm:$0xf]
      %v4082 = vmul.f32 %v4080, %v3228
      %v4083 = vmul.f32 %v4081, %v3226
      %s4084 = scalar_lea.vmem %s11, 16
      %v4085 = vld [vmem:[%s4084] sm:$0xff]
      %v4088 = vcombine.high %v4082, %v4082
      %4089 = vrot.lane.b32.xlu0 %v4082, 8
      %v4090 = vpop.permute.xlu0 %4089
      %4091 = vrot.lane.b32.xlu0 %v4088, 8
      %v4092 = vpop.permute.xlu0 %4091
      %4093 = vrot.lane.b32.xlu0 %v4083, 8
      %v4094 = vpop.permute.xlu0 %4093
      %v4095 = vsel %vm3244, %v4090, %v4092
      %v4096 = vsel %vm3244, %v4092, %v4094
      %v4098 = vsel %vm850, %v4085, 0
      %v4100 = vsel %vm801, %v4095, 0
      %v4102 = vsel %vm801, %v4096, 0
      %4104 = vmatprep.subr.mxu0 %v4102
      %4105 = vmatpush1.msra.mxu0 %v4100
      %4106 = vmatprep.subr.mxu0 0.0
      %4107 = vmatpush1.msra.mxu0 0.0
      %4108 = vmatprep.subr.mxu0 0.0
      %4109 = vmatpush1.msra.mxu0 0.0
      %4110 = vmatprep.subr.mxu0 0.0
      %4111 = vmatpush1.msra.mxu0 0.0
      %4112 = vmatprep.subr.mxu0 0.0
      %4113 = vmatpush1.msra.mxu0 0.0
      %4114 = vmatprep.subr.mxu0 0.0
      %4115 = vmatpush1.msra.mxu0 0.0
      %4116 = vmatprep.subr.mxu0 0.0
      %4117 = vmatpush1.msra.mxu0 0.0
      %4118 = vmatprep.subr.mxu0 0.0
      %4119 = vmatpush1.msra.mxu0 0.0
      %4120 = vmatprep.subr.mxu0 0.0
      %4121 = vmatpush1.msra.mxu0 0.0
      %4122 = vmatprep.subr.mxu0 0.0
      %4123 = vmatpush1.msra.mxu0 0.0
      %4124 = vmatprep.subr.mxu0 0.0
      %4125 = vmatpush1.msra.mxu0 0.0
      %4126 = vmatprep.subr.mxu0 0.0
      %4127 = vmatpush1.msra.mxu0 0.0
      %4128 = vmatprep.subr.mxu0 0.0
      %4129 = vmatpush1.msra.mxu0 0.0
      %4130 = vmatprep.subr.mxu0 0.0
      %4131 = vmatpush1.msra.mxu0 0.0
      %4132 = vmatprep.subr.mxu0 0.0
      %4133 = vmatpush1.msra.mxu0 0.0
      %4134 = vmatprep.subr.mxu0 0.0
      %4135 = vmatpush1.msra.mxu0 0.0
      %4136 = vmatprep.subr.mxu0 0.0
      %4137 = vmatpush1.msra.mxu0 0.0
      %4138 = vmatprep.subr.mxu0 0.0
      %4139 = vmatpush1.msra.mxu0 0.0
      %4140 = vmatprep.subr.mxu0 0.0
      %4141 = vmatpush1.msra.mxu0 0.0
      %4142 = vmatprep.subr.mxu0 0.0
      %4143 = vmatpush1.msra.mxu0 0.0
      %4144 = vmatprep.subr.mxu0 0.0
      %4145 = vmatpush1.msra.mxu0 0.0
      %4146 = vmatprep.subr.mxu0 0.0
      %4147 = vmatpush1.msra.mxu0 0.0
      %4148 = vmatprep.subr.mxu0 0.0
      %4149 = vmatpush1.msra.mxu0 0.0
      %4150 = vmatprep.subr.mxu0 0.0
      %4151 = vmatpush1.msra.mxu0 0.0
      %4152 = vmatprep.subr.mxu0 0.0
      %4153 = vmatpush1.msra.mxu0 0.0
      %4154 = vmatprep.subr.mxu0 0.0
      %4155 = vmatpush1.msra.mxu0 0.0
      %4156 = vmatprep.subr.mxu0 0.0
      %4157 = vmatpush1.msra.mxu0 0.0
      %4158 = vmatprep.subr.mxu0 0.0
      %4159 = vmatpush1.msra.mxu0 0.0
      %4160 = vmatprep.subr.mxu0 0.0
      %4161 = vmatpush1.msra.mxu0 0.0
      %4162 = vmatprep.subr.mxu0 0.0
      %4163 = vmatpush1.msra.mxu0 0.0
      %4164 = vmatprep.subr.mxu0 0.0
      %4165 = vmatpush1.msra.mxu0 0.0
      %4166 = vmatprep.subr.mxu0 0.0
      %4167 = vmatpush1.msra.mxu0 0.0
      %4168 = vmatprep.mubr.f32.mxu0 0.0
      %4169 = vmatmul.mubr.f32.gmra.mrb[0].mxu0 %v4098
      %v4170 = vpop.f32.mrb[0].mxu0
      %v4171 = vadd.f32 0.0, %v4170
      %v4172 = vpop.f32.mrb[0].mxu0
      %v4173 = vadd.f32 0.0, %v4172
      %4174 = vdwg.mxu0
      %v4175 = vadd.f32 %v4076, %v4171
      %v4176 = vadd.f32 %v4078, %v4173
      %v4177 = vld [vmem:[#allocation3] sm:$0xff]
      %v4178 = vld [vmem:[#allocation3 + $0x8] sm:$0xf]
      %v4179 = vmul.f32 %v4177, %v3332
      %v4180 = vmul.f32 %v4178, %v3331
      %s4181 = scalar_lea.vmem %s11, 24
      %v4182 = vld [vmem:[%s4181] sm:$0xff]
      %v4185 = vcombine.high %v4179, %v4179
      %4186 = vrot.lane.b32.xlu0 %v4179, 1
      %v4187 = vpop.permute.xlu0 %4186
      %4188 = vrot.lane.b32.xlu0 %v4185, 1
      %v4189 = vpop.permute.xlu0 %4188
      %4190 = vrot.lane.b32.xlu0 %v4180, 1
      %v4191 = vpop.permute.xlu0 %4190
      %v4192 = vsel %vm1156, %v4187, %v4189
      %v4193 = vsel %vm1156, %v4189, %v4191
      %v4195 = vsel %vm850, %v4182, 0
      %v4197 = vsel %vm801, %v4192, 0
      %v4199 = vsel %vm801, %v4193, 0
      %4201 = vmatprep.subr.mxu0 %v4199
      %4202 = vmatpush1.msra.mxu0 %v4197
      %4203 = vmatprep.subr.mxu0 0.0
      %4204 = vmatpush1.msra.mxu0 0.0
      %4205 = vmatprep.subr.mxu0 0.0
      %4206 = vmatpush1.msra.mxu0 0.0
      %4207 = vmatprep.subr.mxu0 0.0
      %4208 = vmatpush1.msra.mxu0 0.0
      %4209 = vmatprep.subr.mxu0 0.0
      %4210 = vmatpush1.msra.mxu0 0.0
      %4211 = vmatprep.subr.mxu0 0.0
      %4212 = vmatpush1.msra.mxu0 0.0
      %4213 = vmatprep.subr.mxu0 0.0
      %4214 = vmatpush1.msra.mxu0 0.0
      %4215 = vmatprep.subr.mxu0 0.0
      %4216 = vmatpush1.msra.mxu0 0.0
      %4217 = vmatprep.subr.mxu0 0.0
      %4218 = vmatpush1.msra.mxu0 0.0
      %4219 = vmatprep.subr.mxu0 0.0
      %4220 = vmatpush1.msra.mxu0 0.0
      %4221 = vmatprep.subr.mxu0 0.0
      %4222 = vmatpush1.msra.mxu0 0.0
      %4223 = vmatprep.subr.mxu0 0.0
      %4224 = vmatpush1.msra.mxu0 0.0
      %4225 = vmatprep.subr.mxu0 0.0
      %4226 = vmatpush1.msra.mxu0 0.0
      %4227 = vmatprep.subr.mxu0 0.0
      %4228 = vmatpush1.msra.mxu0 0.0
      %4229 = vmatprep.subr.mxu0 0.0
      %4230 = vmatpush1.msra.mxu0 0.0
      %4231 = vmatprep.subr.mxu0 0.0
      %4232 = vmatpush1.msra.mxu0 0.0
      %4233 = vmatprep.subr.mxu0 0.0
      %4234 = vmatpush1.msra.mxu0 0.0
      %4235 = vmatprep.subr.mxu0 0.0
      %4236 = vmatpush1.msra.mxu0 0.0
      %4237 = vmatprep.subr.mxu0 0.0
      %4238 = vmatpush1.msra.mxu0 0.0
      %4239 = vmatprep.subr.mxu0 0.0
      %4240 = vmatpush1.msra.mxu0 0.0
      %4241 = vmatprep.subr.mxu0 0.0
      %4242 = vmatpush1.msra.mxu0 0.0
      %4243 = vmatprep.subr.mxu0 0.0
      %4244 = vmatpush1.msra.mxu0 0.0
      %4245 = vmatprep.subr.mxu0 0.0
      %4246 = vmatpush1.msra.mxu0 0.0
      %4247 = vmatprep.subr.mxu0 0.0
      %4248 = vmatpush1.msra.mxu0 0.0
      %4249 = vmatprep.subr.mxu0 0.0
      %4250 = vmatpush1.msra.mxu0 0.0
      %4251 = vmatprep.subr.mxu0 0.0
      %4252 = vmatpush1.msra.mxu0 0.0
      %4253 = vmatprep.subr.mxu0 0.0
      %4254 = vmatpush1.msra.mxu0 0.0
      %4255 = vmatprep.subr.mxu0 0.0
      %4256 = vmatpush1.msra.mxu0 0.0
      %4257 = vmatprep.subr.mxu0 0.0
      %4258 = vmatpush1.msra.mxu0 0.0
      %4259 = vmatprep.subr.mxu0 0.0
      %4260 = vmatpush1.msra.mxu0 0.0
      %4261 = vmatprep.subr.mxu0 0.0
      %4262 = vmatpush1.msra.mxu0 0.0
      %4263 = vmatprep.subr.mxu0 0.0
      %4264 = vmatpush1.msra.mxu0 0.0
      %4265 = vmatprep.mubr.f32.mxu0 0.0
      %4266 = vmatmul.mubr.f32.gmra.mrb[0].mxu0 %v4195
      %v4267 = vpop.f32.mrb[0].mxu0
      %v4268 = vadd.f32 0.0, %v4267
      %v4269 = vpop.f32.mrb[0].mxu0
      %v4270 = vadd.f32 0.0, %v4269
      %4271 = vdwg.mxu0
      %v4272 = vadd.f32 %v4175, %v4268
      %v4273 = vadd.f32 %v4176, %v4270
      %v4274 = vld [vmem:[#allocation3 + $0x4] sm:$0xff]
      %s4275 = scalar_lea.vmem %s11, 32
      %v4276 = vld [vmem:[%s4275] sm:$0xff]
      %v4278 = vcombine.high %v4274, %v4274
      %v4280 = vsel %vm850, %v4276, 0
      %v4282 = vsel %vm801, %v4274, 0
      %v4284 = vsel %vm801, %v4278, 0
      %4286 = vmatprep.subr.mxu0 %v4284
      %4287 = vmatpush1.msra.mxu0 %v4282
      %4288 = vmatprep.subr.mxu0 0.0
      %4289 = vmatpush1.msra.mxu0 0.0
      %4290 = vmatprep.subr.mxu0 0.0
      %4291 = vmatpush1.msra.mxu0 0.0
      %4292 = vmatprep.subr.mxu0 0.0
      %4293 = vmatpush1.msra.mxu0 0.0
      %4294 = vmatprep.subr.mxu0 0.0
      %4295 = vmatpush1.msra.mxu0 0.0
      %4296 = vmatprep.subr.mxu0 0.0
      %4297 = vmatpush1.msra.mxu0 0.0
      %4298 = vmatprep.subr.mxu0 0.0
      %4299 = vmatpush1.msra.mxu0 0.0
      %4300 = vmatprep.subr.mxu0 0.0
      %4301 = vmatpush1.msra.mxu0 0.0
      %4302 = vmatprep.subr.mxu0 0.0
      %4303 = vmatpush1.msra.mxu0 0.0
      %4304 = vmatprep.subr.mxu0 0.0
      %4305 = vmatpush1.msra.mxu0 0.0
      %4306 = vmatprep.subr.mxu0 0.0
      %4307 = vmatpush1.msra.mxu0 0.0
      %4308 = vmatprep.subr.mxu0 0.0
      %4309 = vmatpush1.msra.mxu0 0.0
      %4310 = vmatprep.subr.mxu0 0.0
      %4311 = vmatpush1.msra.mxu0 0.0
      %4312 = vmatprep.subr.mxu0 0.0
      %4313 = vmatpush1.msra.mxu0 0.0
      %4314 = vmatprep.subr.mxu0 0.0
      %4315 = vmatpush1.msra.mxu0 0.0
      %4316 = vmatprep.subr.mxu0 0.0
      %4317 = vmatpush1.msra.mxu0 0.0
      %4318 = vmatprep.subr.mxu0 0.0
      %4319 = vmatpush1.msra.mxu0 0.0
      %4320 = vmatprep.subr.mxu0 0.0
      %4321 = vmatpush1.msra.mxu0 0.0
      %4322 = vmatprep.subr.mxu0 0.0
      %4323 = vmatpush1.msra.mxu0 0.0
      %4324 = vmatprep.subr.mxu0 0.0
      %4325 = vmatpush1.msra.mxu0 0.0
      %4326 = vmatprep.subr.mxu0 0.0
      %4327 = vmatpush1.msra.mxu0 0.0
      %4328 = vmatprep.subr.mxu0 0.0
      %4329 = vmatpush1.msra.mxu0 0.0
      %4330 = vmatprep.subr.mxu0 0.0
      %4331 = vmatpush1.msra.mxu0 0.0
      %4332 = vmatprep.subr.mxu0 0.0
      %4333 = vmatpush1.msra.mxu0 0.0
      %4334 = vmatprep.subr.mxu0 0.0
      %4335 = vmatpush1.msra.mxu0 0.0
      %4336 = vmatprep.subr.mxu0 0.0
      %4337 = vmatpush1.msra.mxu0 0.0
      %4338 = vmatprep.subr.mxu0 0.0
      %4339 = vmatpush1.msra.mxu0 0.0
      %4340 = vmatprep.subr.mxu0 0.0
      %4341 = vmatpush1.msra.mxu0 0.0
      %4342 = vmatprep.subr.mxu0 0.0
      %4343 = vmatpush1.msra.mxu0 0.0
      %4344 = vmatprep.subr.mxu0 0.0
      %4345 = vmatpush1.msra.mxu0 0.0
      %4346 = vmatprep.subr.mxu0 0.0
      %4347 = vmatpush1.msra.mxu0 0.0
      %4348 = vmatprep.subr.mxu0 0.0
      %4349 = vmatpush1.msra.mxu0 0.0
      %4350 = vmatprep.mubr.f32.mxu0 0.0
      %4351 = vmatmul.mubr.f32.gmra.mrb[0].mxu0 %v4280
      %v4352 = vpop.f32.mrb[0].mxu0
      %v4353 = vadd.f32 0.0, %v4352
      %v4354 = vpop.f32.mrb[0].mxu0
      %v4355 = vadd.f32 0.0, %v4354
      %4356 = vdwg.mxu0
      %v4357 = vadd.f32 %v4272, %v4353
      %v4358 = vadd.f32 %v4273, %v4355
      %v4359 = vld [vmem:[#allocation3 + $0x4] sm:$0xff]
      %v4360 = vmul.f32 %v4359, %v3519
      %s4361 = scalar_lea.vmem %s11, 40
      %v4362 = vld [vmem:[%s4361] sm:$0xff]
      %v4364 = vcombine.high %v4360, %v4360
      %4365 = vrot.lane.b32.xlu0 %v4360, 127
      %v4366 = vpop.permute.xlu0 %4365
      %4367 = vrot.lane.b32.xlu0 %v4364, 127
      %v4368 = vpop.permute.xlu0 %4367
      %v4369 = vsel %vm1139, %v4366, %v4368
      %v4371 = vsel %vm850, %v4362, 0
      %v4373 = vsel %vm801, %v4369, 0
      %v4375 = vsel %vm801, %v4368, 0
      %4377 = vmatprep.subr.mxu0 %v4375
      %4378 = vmatpush1.msra.mxu0 %v4373
      %4379 = vmatprep.subr.mxu0 0.0
      %4380 = vmatpush1.msra.mxu0 0.0
      %4381 = vmatprep.subr.mxu0 0.0
      %4382 = vmatpush1.msra.mxu0 0.0
      %4383 = vmatprep.subr.mxu0 0.0
      %4384 = vmatpush1.msra.mxu0 0.0
      %4385 = vmatprep.subr.mxu0 0.0
      %4386 = vmatpush1.msra.mxu0 0.0
      %4387 = vmatprep.subr.mxu0 0.0
      %4388 = vmatpush1.msra.mxu0 0.0
      %4389 = vmatprep.subr.mxu0 0.0
      %4390 = vmatpush1.msra.mxu0 0.0
      %4391 = vmatprep.subr.mxu0 0.0
      %4392 = vmatpush1.msra.mxu0 0.0
      %4393 = vmatprep.subr.mxu0 0.0
      %4394 = vmatpush1.msra.mxu0 0.0
      %4395 = vmatprep.subr.mxu0 0.0
      %4396 = vmatpush1.msra.mxu0 0.0
      %4397 = vmatprep.subr.mxu0 0.0
      %4398 = vmatpush1.msra.mxu0 0.0
      %4399 = vmatprep.subr.mxu0 0.0
      %4400 = vmatpush1.msra.mxu0 0.0
      %4401 = vmatprep.subr.mxu0 0.0
      %4402 = vmatpush1.msra.mxu0 0.0
      %4403 = vmatprep.subr.mxu0 0.0
      %4404 = vmatpush1.msra.mxu0 0.0
      %4405 = vmatprep.subr.mxu0 0.0
      %4406 = vmatpush1.msra.mxu0 0.0
      %4407 = vmatprep.subr.mxu0 0.0
      %4408 = vmatpush1.msra.mxu0 0.0
      %4409 = vmatprep.subr.mxu0 0.0
      %4410 = vmatpush1.msra.mxu0 0.0
      %4411 = vmatprep.subr.mxu0 0.0
      %4412 = vmatpush1.msra.mxu0 0.0
      %4413 = vmatprep.subr.mxu0 0.0
      %4414 = vmatpush1.msra.mxu0 0.0
      %4415 = vmatprep.subr.mxu0 0.0
      %4416 = vmatpush1.msra.mxu0 0.0
      %4417 = vmatprep.subr.mxu0 0.0
      %4418 = vmatpush1.msra.mxu0 0.0
      %4419 = vmatprep.subr.mxu0 0.0
      %4420 = vmatpush1.msra.mxu0 0.0
      %4421 = vmatprep.subr.mxu0 0.0
      %4422 = vmatpush1.msra.mxu0 0.0
      %4423 = vmatprep.subr.mxu0 0.0
      %4424 = vmatpush1.msra.mxu0 0.0
      %4425 = vmatprep.subr.mxu0 0.0
      %4426 = vmatpush1.msra.mxu0 0.0
      %4427 = vmatprep.subr.mxu0 0.0
      %4428 = vmatpush1.msra.mxu0 0.0
      %4429 = vmatprep.subr.mxu0 0.0
      %4430 = vmatpush1.msra.mxu0 0.0
      %4431 = vmatprep.subr.mxu0 0.0
      %4432 = vmatpush1.msra.mxu0 0.0
      %4433 = vmatprep.subr.mxu0 0.0
      %4434 = vmatpush1.msra.mxu0 0.0
      %4435 = vmatprep.subr.mxu0 0.0
      %4436 = vmatpush1.msra.mxu0 0.0
      %4437 = vmatprep.subr.mxu0 0.0
      %4438 = vmatpush1.msra.mxu0 0.0
      %4439 = vmatprep.subr.mxu0 0.0
      %4440 = vmatpush1.msra.mxu0 0.0
      %4441 = vmatprep.mubr.f32.mxu0 0.0
      %4442 = vmatmul.mubr.f32.gmra.mrb[0].mxu0 %v4371
      %v4443 = vpop.f32.mrb[0].mxu0
      %v4444 = vadd.f32 0.0, %v4443
      %v4445 = vpop.f32.mrb[0].mxu0
      %v4446 = vadd.f32 0.0, %v4445
      %4447 = vdwg.mxu0
      %v4448 = vadd.f32 %v4357, %v4444
      %v4449 = vadd.f32 %v4358, %v4446
      %v4450 = vld [vmem:[#allocation3 + $0x4] sm:$0xff]
      %v4451 = vmul.f32 %v4450, %v3615
      %s4452 = scalar_lea.vmem %s11, 48
      %v4453 = vld [vmem:[%s4452] sm:$0xff]
      %v4455 = vcombine.high %v4451, %v4451
      %4456 = vrot.lane.b32.xlu0 %v4451, 120
      %v4457 = vpop.permute.xlu0 %4456
      %4458 = vrot.lane.b32.xlu0 %v4455, 120
      %v4459 = vpop.permute.xlu0 %4458
      %v4460 = vsel %vm3227, %v4457, %v4459
      %v4462 = vsel %vm850, %v4453, 0
      %v4464 = vsel %vm801, %v4460, 0
      %v4466 = vsel %vm801, %v4459, 0
      %4468 = vmatprep.subr.mxu0 %v4466
      %4469 = vmatpush1.msra.mxu0 %v4464
      %4470 = vmatprep.subr.mxu0 0.0
      %4471 = vmatpush1.msra.mxu0 0.0
      %4472 = vmatprep.subr.mxu0 0.0
      %4473 = vmatpush1.msra.mxu0 0.0
      %4474 = vmatprep.subr.mxu0 0.0
      %4475 = vmatpush1.msra.mxu0 0.0
      %4476 = vmatprep.subr.mxu0 0.0
      %4477 = vmatpush1.msra.mxu0 0.0
      %4478 = vmatprep.subr.mxu0 0.0
      %4479 = vmatpush1.msra.mxu0 0.0
      %4480 = vmatprep.subr.mxu0 0.0
      %4481 = vmatpush1.msra.mxu0 0.0
      %4482 = vmatprep.subr.mxu0 0.0
      %4483 = vmatpush1.msra.mxu0 0.0
      %4484 = vmatprep.subr.mxu0 0.0
      %4485 = vmatpush1.msra.mxu0 0.0
      %4486 = vmatprep.subr.mxu0 0.0
      %4487 = vmatpush1.msra.mxu0 0.0
      %4488 = vmatprep.subr.mxu0 0.0
      %4489 = vmatpush1.msra.mxu0 0.0
      %4490 = vmatprep.subr.mxu0 0.0
      %4491 = vmatpush1.msra.mxu0 0.0
      %4492 = vmatprep.subr.mxu0 0.0
      %4493 = vmatpush1.msra.mxu0 0.0
      %4494 = vmatprep.subr.mxu0 0.0
      %4495 = vmatpush1.msra.mxu0 0.0
      %4496 = vmatprep.subr.mxu0 0.0
      %4497 = vmatpush1.msra.mxu0 0.0
      %4498 = vmatprep.subr.mxu0 0.0
      %4499 = vmatpush1.msra.mxu0 0.0
      %4500 = vmatprep.subr.mxu0 0.0
      %4501 = vmatpush1.msra.mxu0 0.0
      %4502 = vmatprep.subr.mxu0 0.0
      %4503 = vmatpush1.msra.mxu0 0.0
      %4504 = vmatprep.subr.mxu0 0.0
      %4505 = vmatpush1.msra.mxu0 0.0
      %4506 = vmatprep.subr.mxu0 0.0
      %4507 = vmatpush1.msra.mxu0 0.0
      %4508 = vmatprep.subr.mxu0 0.0
      %4509 = vmatpush1.msra.mxu0 0.0
      %4510 = vmatprep.subr.mxu0 0.0
      %4511 = vmatpush1.msra.mxu0 0.0
      %4512 = vmatprep.subr.mxu0 0.0
      %4513 = vmatpush1.msra.mxu0 0.0
      %4514 = vmatprep.subr.mxu0 0.0
      %4515 = vmatpush1.msra.mxu0 0.0
      %4516 = vmatprep.subr.mxu0 0.0
      %4517 = vmatpush1.msra.mxu0 0.0
      %4518 = vmatprep.subr.mxu0 0.0
      %4519 = vmatpush1.msra.mxu0 0.0
      %4520 = vmatprep.subr.mxu0 0.0
      %4521 = vmatpush1.msra.mxu0 0.0
      %4522 = vmatprep.subr.mxu0 0.0
      %4523 = vmatpush1.msra.mxu0 0.0
      %4524 = vmatprep.subr.mxu0 0.0
      %4525 = vmatpush1.msra.mxu0 0.0
      %4526 = vmatprep.subr.mxu0 0.0
      %4527 = vmatpush1.msra.mxu0 0.0
      %4528 = vmatprep.subr.mxu0 0.0
      %4529 = vmatpush1.msra.mxu0 0.0
      %4530 = vmatprep.subr.mxu0 0.0
      %4531 = vmatpush1.msra.mxu0 0.0
      %4532 = vmatprep.mubr.f32.mxu0 0.0
      %4533 = vmatmul.mubr.f32.gmra.mrb[0].mxu0 %v4462
      %v4534 = vpop.f32.mrb[0].mxu0
      %v4535 = vadd.f32 0.0, %v4534
      %v4536 = vpop.f32.mrb[0].mxu0
      %v4537 = vadd.f32 0.0, %v4536
      %4538 = vdwg.mxu0
      %v4539 = vadd.f32 %v4448, %v4535
      %v4540 = vadd.f32 %v4449, %v4537
      %v4541 = vld [vmem:[#allocation3 + $0x4] sm:$0xff]
      %s4542 = scalar_lea.vmem %s11, 56
      %v4543 = vld [vmem:[%s4542] sm:$0xff]
      %v4545 = vcombine.high %v4541, %v4541
      %4546 = vrot.lane.b32.xlu0 %v4541, 119
      %v4547 = vpop.permute.xlu0 %4546
      %4548 = vrot.lane.b32.xlu0 %v4545, 119
      %v4549 = vpop.permute.xlu0 %4548
      %v4550 = vsel %vm3716, %v4547, %v4549
      %v4552 = vsel %vm850, %v4543, 0
      %v4554 = vsel %vm801, %v4550, 0
      %v4556 = vsel %vm801, %v4549, 0
      %4558 = vmatprep.subr.mxu0 %v4556
      %4559 = vmatpush1.msra.mxu0 %v4554
      %4560 = vmatprep.subr.mxu0 0.0
      %4561 = vmatpush1.msra.mxu0 0.0
      %4562 = vmatprep.subr.mxu0 0.0
      %4563 = vmatpush1.msra.mxu0 0.0
      %4564 = vmatprep.subr.mxu0 0.0
      %4565 = vmatpush1.msra.mxu0 0.0
      %4566 = vmatprep.subr.mxu0 0.0
      %4567 = vmatpush1.msra.mxu0 0.0
      %4568 = vmatprep.subr.mxu0 0.0
      %4569 = vmatpush1.msra.mxu0 0.0
      %4570 = vmatprep.subr.mxu0 0.0
      %4571 = vmatpush1.msra.mxu0 0.0
      %4572 = vmatprep.subr.mxu0 0.0
      %4573 = vmatpush1.msra.mxu0 0.0
      %4574 = vmatprep.subr.mxu0 0.0
      %4575 = vmatpush1.msra.mxu0 0.0
      %4576 = vmatprep.subr.mxu0 0.0
      %4577 = vmatpush1.msra.mxu0 0.0
      %4578 = vmatprep.subr.mxu0 0.0
      %4579 = vmatpush1.msra.mxu0 0.0
      %4580 = vmatprep.subr.mxu0 0.0
      %4581 = vmatpush1.msra.mxu0 0.0
      %4582 = vmatprep.subr.mxu0 0.0
      %4583 = vmatpush1.msra.mxu0 0.0
      %4584 = vmatprep.subr.mxu0 0.0
      %4585 = vmatpush1.msra.mxu0 0.0
      %4586 = vmatprep.subr.mxu0 0.0
      %4587 = vmatpush1.msra.mxu0 0.0
      %4588 = vmatprep.subr.mxu0 0.0
      %4589 = vmatpush1.msra.mxu0 0.0
      %4590 = vmatprep.subr.mxu0 0.0
      %4591 = vmatpush1.msra.mxu0 0.0
      %4592 = vmatprep.subr.mxu0 0.0
      %4593 = vmatpush1.msra.mxu0 0.0
      %4594 = vmatprep.subr.mxu0 0.0
      %4595 = vmatpush1.msra.mxu0 0.0
      %4596 = vmatprep.subr.mxu0 0.0
      %4597 = vmatpush1.msra.mxu0 0.0
      %4598 = vmatprep.subr.mxu0 0.0
      %4599 = vmatpush1.msra.mxu0 0.0
      %4600 = vmatprep.subr.mxu0 0.0
      %4601 = vmatpush1.msra.mxu0 0.0
      %4602 = vmatprep.subr.mxu0 0.0
      %4603 = vmatpush1.msra.mxu0 0.0
      %4604 = vmatprep.subr.mxu0 0.0
      %4605 = vmatpush1.msra.mxu0 0.0
      %4606 = vmatprep.subr.mxu0 0.0
      %4607 = vmatpush1.msra.mxu0 0.0
      %4608 = vmatprep.subr.mxu0 0.0
      %4609 = vmatpush1.msra.mxu0 0.0
      %4610 = vmatprep.subr.mxu0 0.0
      %4611 = vmatpush1.msra.mxu0 0.0
      %4612 = vmatprep.subr.mxu0 0.0
      %4613 = vmatpush1.msra.mxu0 0.0
      %4614 = vmatprep.subr.mxu0 0.0
      %4615 = vmatpush1.msra.mxu0 0.0
      %4616 = vmatprep.subr.mxu0 0.0
      %4617 = vmatpush1.msra.mxu0 0.0
      %4618 = vmatprep.subr.mxu0 0.0
      %4619 = vmatpush1.msra.mxu0 0.0
      %4620 = vmatprep.subr.mxu0 0.0
      %4621 = vmatpush1.msra.mxu0 0.0
      %4622 = vmatprep.mubr.f32.mxu0 0.0
      %4623 = vmatmul.mubr.f32.gmra.mrb[0].mxu0 %v4552
      %v4624 = vpop.f32.mrb[0].mxu0
      %v4625 = vadd.f32 0.0, %v4624
      %v4626 = vpop.f32.mrb[0].mxu0
      %v4627 = vadd.f32 0.0, %v4626
      %4628 = vdwg.mxu0
      %v4629 = vadd.f32 %v4539, %v4625
      %v4630 = vadd.f32 %v4540, %v4627
      %v4631 = vld [vmem:[#allocation3 + $0x4] sm:$0xff]
      %v4632 = vmul.f32 %v4631, %v3802
      %s4633 = scalar_lea.vmem %s11, 64
      %v4634 = vld [vmem:[%s4633] sm:$0xff]
      %v4636 = vcombine.high %v4632, %v4632
      %4637 = vrot.lane.b32.xlu0 %v4632, 118
      %v4638 = vpop.permute.xlu0 %4637
      %4639 = vrot.lane.b32.xlu0 %v4636, 118
      %v4640 = vpop.permute.xlu0 %4639
      %v4641 = vsel %vm3023, %v4638, %v4640
      %v4643 = vsel %vm850, %v4634, 0
      %v4645 = vsel %vm801, %v4641, 0
      %v4647 = vsel %vm801, %v4640, 0
      %4649 = vmatprep.subr.mxu0 %v4647
      %4650 = vmatpush1.msra.mxu0 %v4645
      %4651 = vmatprep.subr.mxu0 0.0
      %4652 = vmatpush1.msra.mxu0 0.0
      %4653 = vmatprep.subr.mxu0 0.0
      %4654 = vmatpush1.msra.mxu0 0.0
      %4655 = vmatprep.subr.mxu0 0.0
      %4656 = vmatpush1.msra.mxu0 0.0
      %4657 = vmatprep.subr.mxu0 0.0
      %4658 = vmatpush1.msra.mxu0 0.0
      %4659 = vmatprep.subr.mxu0 0.0
      %4660 = vmatpush1.msra.mxu0 0.0
      %4661 = vmatprep.subr.mxu0 0.0
      %4662 = vmatpush1.msra.mxu0 0.0
      %4663 = vmatprep.subr.mxu0 0.0
      %4664 = vmatpush1.msra.mxu0 0.0
      %4665 = vmatprep.subr.mxu0 0.0
      %4666 = vmatpush1.msra.mxu0 0.0
      %4667 = vmatprep.subr.mxu0 0.0
      %4668 = vmatpush1.msra.mxu0 0.0
      %4669 = vmatprep.subr.mxu0 0.0
      %4670 = vmatpush1.msra.mxu0 0.0
      %4671 = vmatprep.subr.mxu0 0.0
      %4672 = vmatpush1.msra.mxu0 0.0
      %4673 = vmatprep.subr.mxu0 0.0
      %4674 = vmatpush1.msra.mxu0 0.0
      %4675 = vmatprep.subr.mxu0 0.0
      %4676 = vmatpush1.msra.mxu0 0.0
      %4677 = vmatprep.subr.mxu0 0.0
      %4678 = vmatpush1.msra.mxu0 0.0
      %4679 = vmatprep.subr.mxu0 0.0
      %4680 = vmatpush1.msra.mxu0 0.0
      %4681 = vmatprep.subr.mxu0 0.0
      %4682 = vmatpush1.msra.mxu0 0.0
      %4683 = vmatprep.subr.mxu0 0.0
      %4684 = vmatpush1.msra.mxu0 0.0
      %4685 = vmatprep.subr.mxu0 0.0
      %4686 = vmatpush1.msra.mxu0 0.0
      %4687 = vmatprep.subr.mxu0 0.0
      %4688 = vmatpush1.msra.mxu0 0.0
      %4689 = vmatprep.subr.mxu0 0.0
      %4690 = vmatpush1.msra.mxu0 0.0
      %4691 = vmatprep.subr.mxu0 0.0
      %4692 = vmatpush1.msra.mxu0 0.0
      %4693 = vmatprep.subr.mxu0 0.0
      %4694 = vmatpush1.msra.mxu0 0.0
      %4695 = vmatprep.subr.mxu0 0.0
      %4696 = vmatpush1.msra.mxu0 0.0
      %4697 = vmatprep.subr.mxu0 0.0
      %4698 = vmatpush1.msra.mxu0 0.0
      %4699 = vmatprep.subr.mxu0 0.0
      %4700 = vmatpush1.msra.mxu0 0.0
      %4701 = vmatprep.subr.mxu0 0.0
      %4702 = vmatpush1.msra.mxu0 0.0
      %4703 = vmatprep.subr.mxu0 0.0
      %4704 = vmatpush1.msra.mxu0 0.0
      %4705 = vmatprep.subr.mxu0 0.0
      %4706 = vmatpush1.msra.mxu0 0.0
      %4707 = vmatprep.subr.mxu0 0.0
      %4708 = vmatpush1.msra.mxu0 0.0
      %4709 = vmatprep.subr.mxu0 0.0
      %4710 = vmatpush1.msra.mxu0 0.0
      %4711 = vmatprep.subr.mxu0 0.0
      %4712 = vmatpush1.msra.mxu0 0.0
      %4713 = vmatprep.mubr.f32.mxu0 0.0
      %4714 = vmatmul.mubr.f32.gmra.mrb[0].mxu0 %v4643
      %v4715 = vpop.f32.mrb[0].mxu0
      %v4716 = vadd.f32 0.0, %v4715
      %v4717 = vpop.f32.mrb[0].mxu0
      %v4718 = vadd.f32 0.0, %v4717
      %4719 = vdwg.mxu0
      %v4720 = vadd.f32 %v4629, %v4716
      %v4721 = vadd.f32 %v4630, %v4718
      %v4722 = vadd.f32 %v3892, %v4720
      %v4723 = vadd.f32 %v3893, %v4721
      %v4724 = vld [vmem:[%s12] sm:$0xff]
      %4726 = vset.pattern.permute.xlu0 0
      %4727 = vperm.xlu0 %4726, %v4724
      %v4728 = vpop.permute.xlu0 %4727
      %v4730 = vadd.f32 %v4722, %v4728
      %v4731 = vadd.f32 %v4723, %v4728
      %vm4732 = vcmp.ge.f32.partialorder %v4730, 0.0
      %vm4733 = vcmp.ge.f32.partialorder %v4731, 0.0
      %v4734 = vmul.f32 %v4730, 0.01
      %v4735 = vmul.f32 %v4731, 0.01
      %v4736 = vsel %vm4732, %v4730, %v4734
      %v4737 = vsel %vm4733, %v4731, %v4735
      %4738 = vst [vmem:[%s797] sm:$0xff] %v4736
      %4739 = vst.msk [vmem:[%s797 + $0x8] sm:$0xff] %vm847, %v4737
      %p4740 = scmp.lt.s32.totalorder %s37, 1
      %s4741 = scalar_select %p4740, %s37, 1
      %s4742 = smul.addr %s4741, 2
      %s4743 = smul.addr %s4742, 4
      %s4744 = scalar_lea.vmem %s21, %s4743
      %p4745 = scmp.lt.s32.totalorder %s37, 1
      %s4746 = scalar_select %p4745, %s37, 1
      %s4747 = smul.addr %s4746, 2
      %s4748 = smul.addr %s4747, 4
      %s4749 = scalar_lea.vmem %s22, %s4748
      %p4750 = scmp.lt.s32.totalorder %s37, 1
      %s4751 = scalar_select %p4750, %s37, 1
      %s4752 = smul.addr %s4751, 2
      %s4753 = smul.addr %s4752, 8
      %s4754 = scalar_lea.vmem %s23, %s4753
      // Predicated region
      $region105: #{fourier_convolution_block.1} parent=103 // pred_check
        %p4755 = pneg %p516
      $region106: #{fourier_convolution_block.1} parent=103 // pred_check_branch
        %4757 = sbr.rel (%p4755) target = $region108
      $region107: #{fourier_convolution_block.1} parent=103 // pred_region
        _
      $region108: #{fourier_convolution_block.1} parent=103 // pred_fallthru
        _
      // Predicated region
      $region109: #{fourier_convolution_block.1} parent=103 // pred_check
        %p4758 = pneg %p542
      $region110: #{fourier_convolution_block.1} parent=103 // pred_check_branch
        %4760 = sbr.rel (%p4758) target = $region112
      $region111: #{fourier_convolution_block.1} parent=103 // pred_region
        _
      $region112: #{fourier_convolution_block.1} parent=103 // pred_fallthru
        _
      // Predicated region
      $region113: #{fourier_convolution_block.1} parent=103 // pred_check
        %p4761 = pneg %p568
      $region114: #{fourier_convolution_block.1} parent=103 // pred_check_branch
        %4763 = sbr.rel (%p4761) target = $region116
      $region115: #{fourier_convolution_block.1} parent=103 // pred_region
        _
      $region116: #{fourier_convolution_block.1} parent=103 // pred_fallthru
        _
    $region104: #{fourier_convolution_block.1} parent=5 // pred_fallthru
      _
    %p4764 = scmp.le.s32.totalorder 2, %s32
    // Predicated region
    $region117: #{fourier_convolution_block.1} parent=5 // pred_check
      %p4765 = pneg %p4764
    $region118: #{fourier_convolution_block.1} parent=5 // pred_check_branch
      %4767 = sbr.rel (%p4765) target = $region120
    $region119: #{fourier_convolution_block.1} parent=5 // pred_region
      %s4768 = ssub.s32 %s32, 2
      // Predicated region
      $region121: #{fourier_convolution_block.1} parent=119 // pred_check
        %p4769 = pneg %p522
      $region122: #{fourier_convolution_block.1} parent=119 // pred_check_branch
        %4771 = sbr.rel (%p4769) target = $region124
      $region123: #{fourier_convolution_block.1} parent=119 // pred_region
        %p4772 = scmp.lt.s32.totalorder %s38, 1
        %s4773 = scalar_select %p4772, %s38, 1
        %s4774 = smul.addr %s4773, 2
        %s4775 = smul.addr %s4774, 4
        %s4776 = scalar_lea.vmem %s21, %s4775
      $region124: #{fourier_convolution_block.1} parent=119 // pred_fallthru
        _
      // Predicated region
      $region125: #{fourier_convolution_block.1} parent=119 // pred_check
        %p4777 = pneg %p548
      $region126: #{fourier_convolution_block.1} parent=119 // pred_check_branch
        %4779 = sbr.rel (%p4777) target = $region128
      $region127: #{fourier_convolution_block.1} parent=119 // pred_region
        %p4780 = scmp.lt.s32.totalorder %s38, 1
        %s4781 = scalar_select %p4780, %s38, 1
        %s4782 = smul.addr %s4781, 2
        %s4783 = smul.addr %s4782, 4
        %s4784 = scalar_lea.vmem %s22, %s4783
      $region128: #{fourier_convolution_block.1} parent=119 // pred_fallthru
        _
      // Predicated region
      $region129: #{fourier_convolution_block.1} parent=119 // pred_check
        %p4785 = pneg %p574
      $region130: #{fourier_convolution_block.1} parent=119 // pred_check_branch
        %4787 = sbr.rel (%p4785) target = $region132
      $region131: #{fourier_convolution_block.1} parent=119 // pred_region
        %p4788 = scmp.lt.s32.totalorder %s38, 1
        %s4789 = scalar_select %p4788, %s38, 1
        %s4790 = smul.addr %s4789, 2
        %s4791 = smul.addr %s4790, 8
        %s4792 = scalar_lea.vmem %s23, %s4791
      $region132: #{fourier_convolution_block.1} parent=119 // pred_fallthru
        _
    $region120: #{fourier_convolution_block.1} parent=5 // pred_fallthru
      _
  $region6: #{fourier_convolution_block.1} parent=0 // loop_footer
    %s36 = sadd.s32 1, %s32
  $region7: #{fourier_convolution_block.1} parent=0 // loop_footer_branch
    %31 = sbr.rel target = $region3
  $region8: #{fourier_convolution_block.1} parent=0 // loop_exit
    _

</llo_original>
